<compile_context>
chip_gen: v7x
topology: tpu7x:2x2x1
jax: 0.10.0
libtpu: 0.0.40
codegen_flags: <defaults>
</compile_context>

<pallas_src>
import jax
import jax.numpy as jnp
from jax import lax
from jax.experimental import pallas as pl
from jax.experimental.pallas import tpu as pltpu

_INV_SQRT2 = 0.7071067811865476


def _round_up(n, m):
    return ((n + m - 1) // m) * m


def _tpu_generation():
    """Best-effort TPU generation detection ('v5', 'v6', 'v7', 'unknown')."""
    try:
        kind = jax.devices()[0].device_kind.lower()
    except Exception:
        return "unknown"
    if "v4" in kind or "v5" in kind:
        return "v5"
    if "v6" in kind:
        return "v6"
    if "v7" in kind or "7x" in kind:
        return "v7"
    return "unknown"


def _vmem_capacity_bytes(gen):
    try:
        cap = getattr(pltpu.get_tpu_info(), "vmem_capacity_bytes", None)
        if cap:
            return int(cap)
    except Exception:
        pass
    return (64 << 20) if gen == "v7" else (128 << 20)


def _make_kernel(ctx_on_mxu, gelu_exact, n_ctx_real):
    """Kernel factory; flags are Python-static (resolved at trace time)."""

    def kernel(x_ref, ctx_ref,
               g_ref, bln_ref,          # LayerNorm gamma/beta        (1, Din)
               w1u_ref, w1v_ref,        # channel_proj1 halves        (Din, H) x2
               b1u_ref, b1v_ref,        # channel_proj1 bias halves   (1, H) x2
               wc1_ref, bc1_ref,        # sgu.ln[0] Linear(5->H//2)   (Cpad, H//2), (1, H//2)
               wc2_ref, bc2_ref,        # sgu.ln[2] Linear(H//2->H)   (H//2, H), (1, H)
               w2_ref, b2_ref,          # channel_proj2               (H, Din), (1, Din)
               o_ref):
        x = x_ref[...]                  # (tm, Din) f32 — also the residual
        ctx = ctx_ref[...]              # (tm, Cpad) f32 (zero-padded columns)

        # LayerNorm(Din), eps=1e-5, biased variance (PyTorch semantics), f32.
        # Padded all-zero rows hit var=0 -> rsqrt(eps): benign, rows are sliced
        # off in the wrapper (do NOT remove the eps).
        mean = jnp.mean(x, axis=-1, keepdims=True)
        xc = x - mean
        var = jnp.mean(xc * xc, axis=-1, keepdims=True)
        xn = xc * lax.rsqrt(var + 1e-5) * g_ref[...] + bln_ref[...]

        # channel_proj1: Linear(Din -> 2H), pre-split into the torch.chunk
        # halves -> two lane-aligned MXU dots (bf16 operands, f32 accumulation).
        w1u = w1u_ref[...]
        w1v = w1v_ref[...]
        xn_m = xn.astype(w1u.dtype)
        u = jnp.dot(xn_m, w1u, preferred_element_type=jnp.float32) + b1u_ref[...]
        v = jnp.dot(xn_m, w1v, preferred_element_type=jnp.float32) + b1v_ref[...]

        # GatingUnit trunk: Hardswish(u) = u * clip(u + 3, 0, 6) / 6 (f32 VPU).
        u = u * jnp.clip(u + 3.0, 0.0, 6.0) * (1.0 / 6.0)

        # Gate context MLP: Linear(5 -> H//2).
        wc1 = wc1_ref[...]
        if ctx_on_mxu:
            # K=8 (zero-padded) dot on the MXU: negligible MXU cost, frees the
            # VALU slot that binds first on v6e/v7x at these feature dims.
            c = jnp.dot(ctx.astype(wc1.dtype), wc1,
                        preferred_element_type=jnp.float32) + bc1_ref[...]
        else:
            # v5e: keep the unrolled broadcast-FMAs on the VPU (MXU binds first).
            c = bc1_ref[...] + ctx[:, 0:1] * wc1[0:1, :]
            for k in range(1, n_ctx_real):       # static unroll, tiny trip count
                c = c + ctx[:, k:k + 1] * wc1[k:k + 1, :]

        if gelu_exact:
            # nn.GELU() default: exact-erf GELU.
            c = 0.5 * c * (1.0 + lax.erf(c * _INV_SQRT2))
        else:
            # tanh-approx GELU (EUP tanh, separate issue slot) — deviates
            # slightly from nn.GELU()'s exact-erf numerics.
            c = jax.nn.gelu(c, approximate=True)

        wc2 = wc2_ref[...]
        c = jnp.dot(c.astype(wc2.dtype), wc2,
                    preferred_element_type=jnp.float32) + bc2_ref[...]

        v = jax.nn.sigmoid(v + c)
        gated = u * v                    # (tm, H) f32

        # channel_proj2 + residual (dropout_rate=0.0 -> identity).
        w2 = w2_ref[...]
        out = jnp.dot(gated.astype(w2.dtype), w2,
                      preferred_element_type=jnp.float32) + b2_ref[...]
        o_ref[...] = (out + x).astype(o_ref.dtype)

    return kernel


def gmlp_block(x, ctx, params, *, tm=None, use_bf16=True, ctx_on_mxu=None,
               gelu_exact=True, out_dtype=jnp.float32, vmem_limit_bytes=None):
    B, S, Din = x.shape
    C = ctx.shape[-1]
    N = B * S
    H = params["w2"].shape[0]
    Hh = params["wc1"].shape[1]

    gen = _tpu_generation()
    vmem_cap = _vmem_capacity_bytes(gen)
    cap = int(vmem_cap * 0.8)            # headroom for compiler scratch / semaphores

    if ctx_on_mxu is None:
        ctx_on_mxu = gen != "v5"         # v5e: MXU binds first -> keep ctx on the VPU
    if tm is None:
        tm = 256 if gen == "v7" else 512

    # --- weight preparation (all [in, out]; bf16 operands for the MXU dots) ---
    wdt = jnp.bfloat16 if use_bf16 else jnp.float32
    Cpad = max(8, _round_up(C, 8))       # contiguous DMA rows / full sublane tiles

    w1u = params["w1"][:, :H].astype(wdt)        # torch.chunk halves of channel_proj1
    w1v = params["w1"][:, H:].astype(wdt)
    b1u = params["b1"][:, :H]
    b1v = params["b1"][:, H:]
    wc1 = jnp.pad(params["wc1"], ((0, Cpad - C), (0, 0)))
    if ctx_on_mxu:
        wc1 = wc1.astype(wdt)
    wc2 = params["wc2"].astype(wdt)
    w2 = params["w2"].astype(wdt)
    ln_g, ln_b = params["ln_g"], params["ln_b"]
    bc1, bc2, b2 = params["bc1"], params["bc2"], params["b2"]

    weights = (ln_g, ln_b, w1u, w1v, b1u, b1v, wc1, bc1, wc2, bc2, w2, b2)
    nbytes = lambda a: int(a.size) * a.dtype.itemsize
    weight_bytes = sum(nbytes(a) for a in weights)   # single-buffered (Buffered(1))
    if weight_bytes > cap - (8 << 20):
        raise ValueError(
            "resident weights exceed the VMEM budget; an H-tiled fallback "
            "(grid axis over H with a VMEM accumulator) is required for this size")

    out_itemsize = jnp.dtype(out_dtype).itemsize

    def vmem_estimate(tm_):
        io = 2 * tm_ * (4 * Din + 4 * Cpad + out_itemsize * Din)   # double-buffered x/ctx/out tiles
        inter = 4 * tm_ * (2 * Din + 3 * H + 2 * Hh)               # rough live f32 intermediates
        return weight_bytes + io + inter

    # --- row tile selection ---
    # bf16 packs two rows per sublane -> keep tiles 16-row aligned so MXU LHS
    # tiles are fully occupied (matters most on v5e).
    align = 16 if use_bf16 else 8
    tm = max(align, min(int(tm), _round_up(N, align)))
    tm = _round_up(tm, align)
    # Guarantee >= 2 grid steps when the token count allows it, so the
    # "parallel" token axis can be sharded across v7x's two TensorCores.
    while tm > align and _round_up(N, tm) // tm < 2:
        tm = max(align, _round_up(tm // 2, align))
    # Shrink tm until the VMEM footprint estimate fits under the cap.
    while tm > align and vmem_estimate(tm) > cap:
        tm = max(align, _round_up(tm // 2, align))
    n_pad = _round_up(N, tm)

    if vmem_limit_bytes is None:
        vmem_limit_bytes = min(cap, max(vmem_estimate(tm) + (8 << 20), 32 << 20))

    # --- token-matrix preparation (pad rows to the tile multiple, ctx to Cpad) ---
    xf = x.reshape(N, Din)
    cf = ctx.reshape(N, C)
    if n_pad != N or Cpad != C:
        xf = jnp.pad(xf, ((0, n_pad - N), (0, 0)))
        cf = jnp.pad(cf, ((0, n_pad - N), (0, Cpad - C)))

    row = lambda i: (i, 0)               # streamed per-token-tile blocks
    full = lambda i: (0, 0)              # constant blocks, resident every step
    resident = dict(pipeline_mode=pl.Buffered(1))   # single-buffer constant blocks

    in_specs = [
        pl.BlockSpec((tm, Din), row),                 # x
        pl.BlockSpec((tm, Cpad), row),                # ctx (padded)
        pl.BlockSpec((1, Din), full, **resident),     # ln gamma
        pl.BlockSpec((1, Din), full, **resident),     # ln beta
        pl.BlockSpec((Din, H), full, **resident),     # W1 (u half)
        pl.BlockSpec((Din, H), full, **resident),     # W1 (v half)
        pl.BlockSpec((1, H), full, **resident),       # b1 (u half)
        pl.BlockSpec((1, H), full, **resident),       # b1 (v half)
        pl.BlockSpec((Cpad, Hh), full, **resident),   # Wc1 (padded rows)
        pl.BlockSpec((1, Hh), full, **resident),      # bc1
        pl.BlockSpec((Hh, H), full, **resident),      # Wc2
        pl.BlockSpec((1, H), full, **resident),       # bc2
        pl.BlockSpec((H, Din), full, **resident),     # W2
        pl.BlockSpec((1, Din), full, **resident),     # b2
    ]

    flops = 2 * n_pad * (Din * 2 * H + Cpad * Hh + Hh * H + H * Din)
    cost = pl.CostEstimate(
        flops=flops,
        transcendentals=n_pad * (Hh + H + 1),     # gelu + sigmoid + rsqrt
        bytes_accessed=(n_pad * Din * 4 + n_pad * Cpad * 4
                        + n_pad * Din * out_itemsize + weight_bytes),
    )

    kernel = _make_kernel(ctx_on_mxu, gelu_exact, C)

    out = pl.pallas_call(
        kernel,
        out_shape=jax.ShapeDtypeStruct((n_pad, Din), out_dtype),
        grid_spec=pltpu.PrefetchScalarGridSpec(
            num_scalar_prefetch=0,
            grid=(n_pad // tm,),
            in_specs=in_specs,
            out_specs=pl.BlockSpec((tm, Din), row),
        ),
        compiler_params=pltpu.CompilerParams(
            # "parallel" lets the token-tile axis shard across TensorCores on
            # multi-TC chips (v7x). If plain PARALLEL is found not to split
            # across TCs there, switch to pltpu.CORE_PARALLEL.
            dimension_semantics=("parallel",),
            vmem_limit_bytes=int(vmem_limit_bytes),
        ),
        cost_estimate=cost,
    )(xf, cf, ln_g, ln_b, w1u, w1v, b1u, b1v, wc1, bc1, wc2, bc2, w2, b2)
    return out[:N].reshape(B, S, Din).astype(out_dtype)


def gmlp_block_ref(x, ctx, params, *, use_bf16=False, ctx_on_mxu=False):
    """Pure-JAX reference mirroring the PyTorch forward. With use_bf16=True it
    applies the same bf16 matmul-operand casts (f32 accumulation) as the kernel."""
    wdt = jnp.bfloat16 if use_bf16 else jnp.float32
    H = params["w2"].shape[0]

    mean = jnp.mean(x, axis=-1, keepdims=True)
    xc = x - mean
    var = jnp.mean(xc * xc, axis=-1, keepdims=True)
    xn = xc * lax.rsqrt(var + 1e-5) * params["ln_g"][0] + params["ln_b"][0]

    h = jnp.dot(xn.astype(wdt), params["w1"].astype(wdt),
                preferred_element_type=jnp.float32) + params["b1"][0]
    u, v = h[..., :H], h[..., H:]
    u = u * jnp.clip(u + 3.0, 0.0, 6.0) * (1.0 / 6.0)

    if ctx_on_mxu and use_bf16:
        c = jnp.dot(ctx.astype(wdt), params["wc1"].astype(wdt),
                    preferred_element_type=jnp.float32) + params["bc1"][0]
    else:
        c = ctx @ params["wc1"] + params["bc1"][0]
    c = 0.5 * c * (1.0 + lax.erf(c * _INV_SQRT2))
    c = jnp.dot(c.astype(wdt), params["wc2"].astype(wdt),
                preferred_element_type=jnp.float32) + params["bc2"][0]

    v = jax.nn.sigmoid(v + c)
    out = jnp.dot((u * v).astype(wdt), params["w2"].astype(wdt),
                  preferred_element_type=jnp.float32) + params["b2"][0]
    return out + x


def init_params(key, input_dim, hidden_dim):
    ks = jax.random.split(key, 8)
    s = 0.1
    return {
        # LayerNorm: PyTorch default init (ones / zeros), stored as (1, D) rows.
        "ln_g": jnp.ones((1, input_dim), jnp.float32),
        "ln_b": jnp.zeros((1, input_dim), jnp.float32),
        "w1": s * jax.random.normal(ks[0], (input_dim, 2 * hidden_dim), jnp.float32),
        "b1": s * jax.random.normal(ks[1], (1, 2 * hidden_dim), jnp.float32),
        "wc1": s * jax.random.normal(ks[2], (5, hidden_dim // 2), jnp.float32),
        "bc1": s * jax.random.normal(ks[3], (1, hidden_dim // 2), jnp.float32),
        "wc2": s * jax.random.normal(ks[4], (hidden_dim // 2, hidden_dim), jnp.float32),
        "bc2": s * jax.random.normal(ks[5], (1, hidden_dim), jnp.float32),
        "w2": s * jax.random.normal(ks[6], (hidden_dim, input_dim), jnp.float32),
        "b2": s * jax.random.normal(ks[7], (1, input_dim), jnp.float32),
    }


if __name__ == "__main__":
    # Small demo shapes; feature dims are multiples of 256 so the v6e/v7x
    # 256-wide MXU tiles are fully used, and B*S=128 tokens give a multi-step
    # grid (exercises the parallel token axis).
    B, S, INPUT_DIM, HIDDEN_DIM = 2, 64, 256, 512

    key = jax.random.PRNGKey(0)
    kx, kc, kp = jax.random.split(key, 3)
    x = jax.random.normal(kx, (B, S, INPUT_DIM), jnp.float32)
    ctx = jax.random.normal(kc, (B, S, 5), jnp.float32)
    params = init_params(kp, INPUT_DIM, HIDDEN_DIM)

    y = gmlp_block(x, ctx, params)
    jax.block_until_ready(y)
    assert y.shape == (B, S, INPUT_DIM)

    # Tight check against a reference using the same bf16 matmul-operand casts
    # (and the same ctx-projection path as the kernel on this chip generation).
    on_mxu = _tpu_generation() != "v5"
    y_ref_matched = gmlp_block_ref(x, ctx, params, use_bf16=True, ctx_on_mxu=on_mxu)
    err_m = float(jnp.max(jnp.abs(y - y_ref_matched)))
    assert jnp.allclose(y, y_ref_matched, atol=5e-3, rtol=5e-3), \
        f"matched-ref max abs err {err_m}"

    # Sanity check against the full-f32 PyTorch-equivalent forward
    # (only bf16 matmul-operand noise expected).
    y_ref = gmlp_block_ref(x, ctx, params, use_bf16=False)
    err = float(jnp.max(jnp.abs(y - y_ref)))
    assert jnp.allclose(y, y_ref, atol=1e-1, rtol=1e-1), f"f32-ref max abs err {err}"

    print("KERNEL_OK")
</pallas_src>

<mosaic_0001>
module attributes {stable_mosaic.version = 11 : i64} {
  func.func @kernel(%arg0: i32, %arg1: memref<64x256xf32, #tpu.memory_space<vmem>>, %arg2: memref<64x8xf32, #tpu.memory_space<vmem>>, %arg3: memref<1x256xf32, #tpu.memory_space<vmem>>, %arg4: memref<1x256xf32, #tpu.memory_space<vmem>>, %arg5: memref<256x512xbf16, #tpu.memory_space<vmem>>, %arg6: memref<256x512xbf16, #tpu.memory_space<vmem>>, %arg7: memref<1x512xf32, #tpu.memory_space<vmem>>, %arg8: memref<1x512xf32, #tpu.memory_space<vmem>>, %arg9: memref<8x256xbf16, #tpu.memory_space<vmem>>, %arg10: memref<1x256xf32, #tpu.memory_space<vmem>>, %arg11: memref<256x512xbf16, #tpu.memory_space<vmem>>, %arg12: memref<1x512xf32, #tpu.memory_space<vmem>>, %arg13: memref<512x256xbf16, #tpu.memory_space<vmem>>, %arg14: memref<1x256xf32, #tpu.memory_space<vmem>>, %arg15: memref<64x256xf32, #tpu.memory_space<vmem>>) attributes {dimension_semantics = [#tpu.dimension_semantics<parallel>], iteration_bounds = array<i64: 2>, scalar_prefetch = 0 : i64, scratch_operands = 0 : i64, tpu.core_type = #tpu.core_type<tc>, window_params = [{transform_indices = @transform_0, window_bounds = array<i64: 64, 256>}, {transform_indices = @transform_1, window_bounds = array<i64: 64, 8>}, {pipeline_mode = #tpu.pipeline_mode<synchronous>, transform_indices = @transform_2, window_bounds = array<i64: 1, 256>}, {pipeline_mode = #tpu.pipeline_mode<synchronous>, transform_indices = @transform_3, window_bounds = array<i64: 1, 256>}, {pipeline_mode = #tpu.pipeline_mode<synchronous>, transform_indices = @transform_4, window_bounds = array<i64: 256, 512>}, {pipeline_mode = #tpu.pipeline_mode<synchronous>, transform_indices = @transform_5, window_bounds = array<i64: 256, 512>}, {pipeline_mode = #tpu.pipeline_mode<synchronous>, transform_indices = @transform_6, window_bounds = array<i64: 1, 512>}, {pipeline_mode = #tpu.pipeline_mode<synchronous>, transform_indices = @transform_7, window_bounds = array<i64: 1, 512>}, {pipeline_mode = #tpu.pipeline_mode<synchronous>, transform_indices = @transform_8, window_bounds = array<i64: 8, 256>}, {pipeline_mode = #tpu.pipeline_mode<synchronous>, transform_indices = @transform_9, window_bounds = array<i64: 1, 256>}, {pipeline_mode = #tpu.pipeline_mode<synchronous>, transform_indices = @transform_10, window_bounds = array<i64: 256, 512>}, {pipeline_mode = #tpu.pipeline_mode<synchronous>, transform_indices = @transform_11, window_bounds = array<i64: 1, 512>}, {pipeline_mode = #tpu.pipeline_mode<synchronous>, transform_indices = @transform_12, window_bounds = array<i64: 512, 256>}, {pipeline_mode = #tpu.pipeline_mode<synchronous>, transform_indices = @transform_13, window_bounds = array<i64: 1, 256>}, {transform_indices = @transform_14, window_bounds = array<i64: 64, 256>}]} {
    %c0 = arith.constant 0 : index
    %c0_0 = arith.constant 0 : index
    %0 = vector.load %arg1[%c0, %c0_0] : memref<64x256xf32, #tpu.memory_space<vmem>>, vector<64x256xf32>
    %c0_1 = arith.constant 0 : index
    %c0_2 = arith.constant 0 : index
    %1 = vector.load %arg2[%c0_1, %c0_2] : memref<64x8xf32, #tpu.memory_space<vmem>>, vector<64x8xf32>
    %cst = arith.constant dense<0.000000e+00> : vector<64xf32>
    %2 = vector.multi_reduction <add>, %0, %cst [1] : vector<64x256xf32> to vector<64xf32>
    %3 = vector.shape_cast %2 : vector<64xf32> to vector<64x1xf32>
    %cst_3 = arith.constant 2.560000e+02 : f32
    %4 = vector.broadcast %cst_3 : f32 to vector<64x1xf32>
    %5 = arith.divf %3, %4 : vector<64x1xf32>
    %6 = vector.broadcast %5 : vector<64x1xf32> to vector<64x256xf32>
    %7 = arith.subf %0, %6 : vector<64x256xf32>
    %8 = arith.mulf %7, %7 : vector<64x256xf32>
    %cst_4 = arith.constant dense<0.000000e+00> : vector<64xf32>
    %9 = vector.multi_reduction <add>, %8, %cst_4 [1] : vector<64x256xf32> to vector<64xf32>
    %10 = vector.shape_cast %9 : vector<64xf32> to vector<64x1xf32>
    %cst_5 = arith.constant 2.560000e+02 : f32
    %11 = vector.broadcast %cst_5 : f32 to vector<64x1xf32>
    %12 = arith.divf %10, %11 : vector<64x1xf32>
    %cst_6 = arith.constant 9.99999974E-6 : f32
    %13 = vector.broadcast %cst_6 : f32 to vector<64x1xf32>
    %14 = arith.addf %12, %13 : vector<64x1xf32>
    %15 = math.rsqrt %14 : vector<64x1xf32>
    %16 = vector.broadcast %15 : vector<64x1xf32> to vector<64x256xf32>
    %17 = arith.mulf %7, %16 : vector<64x256xf32>
    %c0_7 = arith.constant 0 : index
    %c0_8 = arith.constant 0 : index
    %18 = vector.load %arg3[%c0_7, %c0_8] : memref<1x256xf32, #tpu.memory_space<vmem>>, vector<1x256xf32>
    %19 = vector.broadcast %18 : vector<1x256xf32> to vector<64x256xf32>
    %20 = arith.mulf %17, %19 : vector<64x256xf32>
    %c0_9 = arith.constant 0 : index
    %c0_10 = arith.constant 0 : index
    %21 = vector.load %arg4[%c0_9, %c0_10] : memref<1x256xf32, #tpu.memory_space<vmem>>, vector<1x256xf32>
    %22 = vector.broadcast %21 : vector<1x256xf32> to vector<64x256xf32>
    %23 = arith.addf %20, %22 : vector<64x256xf32>
    %c0_11 = arith.constant 0 : index
    %c0_12 = arith.constant 0 : index
    %24 = vector.load %arg5[%c0_11, %c0_12] : memref<256x512xbf16, #tpu.memory_space<vmem>>, vector<256x512xbf16>
    %c0_13 = arith.constant 0 : index
    %c0_14 = arith.constant 0 : index
    %25 = vector.load %arg6[%c0_13, %c0_14] : memref<256x512xbf16, #tpu.memory_space<vmem>>, vector<256x512xbf16>
    %26 = arith.truncf %23 : vector<64x256xf32> to vector<64x256xbf16>
    %cst_15 = arith.constant dense<0.000000e+00> : vector<64x512xf32>
    %27 = tpu.matmul %26, %24, %cst_15 {dimension_numbers = #tpu.dot_dimension_numbers<[1], [0], [0], [1], [0, 0, 1, 1], [], []>} : vector<64x256xbf16>, vector<256x512xbf16>, vector<64x512xf32> -> vector<64x512xf32>
    %c0_16 = arith.constant 0 : index
    %c0_17 = arith.constant 0 : index
    %28 = vector.load %arg7[%c0_16, %c0_17] : memref<1x512xf32, #tpu.memory_space<vmem>>, vector<1x512xf32>
    %29 = vector.broadcast %28 : vector<1x512xf32> to vector<64x512xf32>
    %30 = arith.addf %27, %29 : vector<64x512xf32>
    %cst_18 = arith.constant dense<0.000000e+00> : vector<64x512xf32>
    %31 = tpu.matmul %26, %25, %cst_18 {dimension_numbers = #tpu.dot_dimension_numbers<[1], [0], [0], [1], [0, 0, 1, 1], [], []>} : vector<64x256xbf16>, vector<256x512xbf16>, vector<64x512xf32> -> vector<64x512xf32>
    %c0_19 = arith.constant 0 : index
    %c0_20 = arith.constant 0 : index
    %32 = vector.load %arg8[%c0_19, %c0_20] : memref<1x512xf32, #tpu.memory_space<vmem>>, vector<1x512xf32>
    %33 = vector.broadcast %32 : vector<1x512xf32> to vector<64x512xf32>
    %34 = arith.addf %31, %33 : vector<64x512xf32>
    %cst_21 = arith.constant 3.000000e+00 : f32
    %35 = vector.broadcast %cst_21 : f32 to vector<64x512xf32>
    %36 = arith.addf %30, %35 : vector<64x512xf32>
    %cst_22 = arith.constant 0.000000e+00 : f32
    %cst_23 = arith.constant 6.000000e+00 : f32
    %37 = vector.broadcast %cst_22 : f32 to vector<64x512xf32>
    %38 = arith.maximumf %37, %36 : vector<64x512xf32>
    %39 = vector.broadcast %cst_23 : f32 to vector<64x512xf32>
    %40 = arith.minimumf %39, %38 : vector<64x512xf32>
    %41 = arith.mulf %30, %40 : vector<64x512xf32>
    %cst_24 = arith.constant 0.166666672 : f32
    %42 = vector.broadcast %cst_24 : f32 to vector<64x512xf32>
    %43 = arith.mulf %41, %42 : vector<64x512xf32>
    %c0_25 = arith.constant 0 : index
    %c0_26 = arith.constant 0 : index
    %44 = vector.load %arg9[%c0_25, %c0_26] : memref<8x256xbf16, #tpu.memory_space<vmem>>, vector<8x256xbf16>
    %45 = arith.truncf %1 : vector<64x8xf32> to vector<64x8xbf16>
    %cst_27 = arith.constant dense<0.000000e+00> : vector<64x256xf32>
    %46 = tpu.matmul %45, %44, %cst_27 {dimension_numbers = #tpu.dot_dimension_numbers<[1], [0], [0], [1], [0, 0, 1, 1], [], []>} : vector<64x8xbf16>, vector<8x256xbf16>, vector<64x256xf32> -> vector<64x256xf32>
    %c0_28 = arith.constant 0 : index
    %c0_29 = arith.constant 0 : index
    %47 = vector.load %arg10[%c0_28, %c0_29] : memref<1x256xf32, #tpu.memory_space<vmem>>, vector<1x256xf32>
    %48 = vector.broadcast %47 : vector<1x256xf32> to vector<64x256xf32>
    %49 = arith.addf %46, %48 : vector<64x256xf32>
    %cst_30 = arith.constant 5.000000e-01 : f32
    %50 = vector.broadcast %cst_30 : f32 to vector<64x256xf32>
    %51 = arith.mulf %50, %49 : vector<64x256xf32>
    %cst_31 = arith.constant 0.707106769 : f32
    %52 = vector.broadcast %cst_31 : f32 to vector<64x256xf32>
    %53 = arith.mulf %49, %52 : vector<64x256xf32>
    %54 = math.erf %53 : vector<64x256xf32>
    %cst_32 = arith.constant 1.000000e+00 : f32
    %55 = vector.broadcast %cst_32 : f32 to vector<64x256xf32>
    %56 = arith.addf %55, %54 : vector<64x256xf32>
    %57 = arith.mulf %51, %56 : vector<64x256xf32>
    %c0_33 = arith.constant 0 : index
    %c0_34 = arith.constant 0 : index
    %58 = vector.load %arg11[%c0_33, %c0_34] : memref<256x512xbf16, #tpu.memory_space<vmem>>, vector<256x512xbf16>
    %59 = arith.truncf %57 : vector<64x256xf32> to vector<64x256xbf16>
    %cst_35 = arith.constant dense<0.000000e+00> : vector<64x512xf32>
    %60 = tpu.matmul %59, %58, %cst_35 {dimension_numbers = #tpu.dot_dimension_numbers<[1], [0], [0], [1], [0, 0, 1, 1], [], []>} : vector<64x256xbf16>, vector<256x512xbf16>, vector<64x512xf32> -> vector<64x512xf32>
    %c0_36 = arith.constant 0 : index
    %c0_37 = arith.constant 0 : index
    %61 = vector.load %arg12[%c0_36, %c0_37] : memref<1x512xf32, #tpu.memory_space<vmem>>, vector<1x512xf32>
    %62 = vector.broadcast %61 : vector<1x512xf32> to vector<64x512xf32>
    %63 = arith.addf %60, %62 : vector<64x512xf32>
    %64 = arith.addf %34, %63 : vector<64x512xf32>
    %65 = arith.negf %64 : vector<64x512xf32>
    %66 = math.exp %65 : vector<64x512xf32>
    %cst_38 = arith.constant 1.000000e+00 : f32
    %67 = vector.broadcast %cst_38 : f32 to vector<64x512xf32>
    %68 = arith.addf %67, %66 : vector<64x512xf32>
    %69 = arith.divf %67, %68 : vector<64x512xf32>
    %70 = arith.mulf %43, %69 : vector<64x512xf32>
    %c0_39 = arith.constant 0 : index
    %c0_40 = arith.constant 0 : index
    %71 = vector.load %arg13[%c0_39, %c0_40] : memref<512x256xbf16, #tpu.memory_space<vmem>>, vector<512x256xbf16>
    %72 = arith.truncf %70 : vector<64x512xf32> to vector<64x512xbf16>
    %cst_41 = arith.constant dense<0.000000e+00> : vector<64x256xf32>
    %73 = tpu.matmul %72, %71, %cst_41 {dimension_numbers = #tpu.dot_dimension_numbers<[1], [0], [0], [1], [0, 0, 1, 1], [], []>} : vector<64x512xbf16>, vector<512x256xbf16>, vector<64x256xf32> -> vector<64x256xf32>
    %c0_42 = arith.constant 0 : index
    %c0_43 = arith.constant 0 : index
    %74 = vector.load %arg14[%c0_42, %c0_43] : memref<1x256xf32, #tpu.memory_space<vmem>>, vector<1x256xf32>
    %75 = vector.broadcast %74 : vector<1x256xf32> to vector<64x256xf32>
    %76 = arith.addf %73, %75 : vector<64x256xf32>
    %77 = arith.addf %76, %0 : vector<64x256xf32>
    %c0_44 = arith.constant 0 : index
    %c0_45 = arith.constant 0 : index
    %78 = vector.load %arg15[%c0_44, %c0_45] : memref<64x256xf32, #tpu.memory_space<vmem>>, vector<64x256xf32>
    tpu.vector_store %arg15[%c0_44, %c0_45], %77 {strides = array<i32>} : memref<64x256xf32, #tpu.memory_space<vmem>>, vector<64x256xf32>,
    return
  }
  func.func @transform_0(%arg0: i32) -> (i32, i32) {
    %c0_i32 = arith.constant 0 : i32
    %c0_i32_0 = arith.constant 0 : i32
    return %arg0, %c0_i32 : i32, i32
  }
  func.func @transform_1(%arg0: i32) -> (i32, i32) {
    %c0_i32 = arith.constant 0 : i32
    %c0_i32_0 = arith.constant 0 : i32
    return %arg0, %c0_i32 : i32, i32
  }
  func.func @transform_2(%arg0: i32) -> (i32, i32) {
    %c0_i32 = arith.constant 0 : i32
    %c0_i32_0 = arith.constant 0 : i32
    %c0_i32_1 = arith.constant 0 : i32
    return %c0_i32, %c0_i32_0 : i32, i32
  }
  func.func @transform_3(%arg0: i32) -> (i32, i32) {
    %c0_i32 = arith.constant 0 : i32
    %c0_i32_0 = arith.constant 0 : i32
    %c0_i32_1 = arith.constant 0 : i32
    return %c0_i32, %c0_i32_0 : i32, i32
  }
  func.func @transform_4(%arg0: i32) -> (i32, i32) {
    %c0_i32 = arith.constant 0 : i32
    %c0_i32_0 = arith.constant 0 : i32
    %c0_i32_1 = arith.constant 0 : i32
    return %c0_i32, %c0_i32_0 : i32, i32
  }
  func.func @transform_5(%arg0: i32) -> (i32, i32) {
    %c0_i32 = arith.constant 0 : i32
    %c0_i32_0 = arith.constant 0 : i32
    %c0_i32_1 = arith.constant 0 : i32
    return %c0_i32, %c0_i32_0 : i32, i32
  }
  func.func @transform_6(%arg0: i32) -> (i32, i32) {
    %c0_i32 = arith.constant 0 : i32
    %c0_i32_0 = arith.constant 0 : i32
    %c0_i32_1 = arith.constant 0 : i32
    return %c0_i32, %c0_i32_0 : i32, i32
  }
  func.func @transform_7(%arg0: i32) -> (i32, i32) {
    %c0_i32 = arith.constant 0 : i32
    %c0_i32_0 = arith.constant 0 : i32
    %c0_i32_1 = arith.constant 0 : i32
    return %c0_i32, %c0_i32_0 : i32, i32
  }
  func.func @transform_8(%arg0: i32) -> (i32, i32) {
    %c0_i32 = arith.constant 0 : i32
    %c0_i32_0 = arith.constant 0 : i32
    %c0_i32_1 = arith.constant 0 : i32
    return %c0_i32, %c0_i32_0 : i32, i32
  }
  func.func @transform_9(%arg0: i32) -> (i32, i32) {
    %c0_i32 = arith.constant 0 : i32
    %c0_i32_0 = arith.constant 0 : i32
    %c0_i32_1 = arith.constant 0 : i32
    return %c0_i32, %c0_i32_0 : i32, i32
  }
  func.func @transform_10(%arg0: i32) -> (i32, i32) {
    %c0_i32 = arith.constant 0 : i32
    %c0_i32_0 = arith.constant 0 : i32
    %c0_i32_1 = arith.constant 0 : i32
    return %c0_i32, %c0_i32_0 : i32, i32
  }
  func.func @transform_11(%arg0: i32) -> (i32, i32) {
    %c0_i32 = arith.constant 0 : i32
    %c0_i32_0 = arith.constant 0 : i32
    %c0_i32_1 = arith.constant 0 : i32
    return %c0_i32, %c0_i32_0 : i32, i32
  }
  func.func @transform_12(%arg0: i32) -> (i32, i32) {
    %c0_i32 = arith.constant 0 : i32
    %c0_i32_0 = arith.constant 0 : i32
    %c0_i32_1 = arith.constant 0 : i32
    return %c0_i32, %c0_i32_0 : i32, i32
  }
  func.func @transform_13(%arg0: i32) -> (i32, i32) {
    %c0_i32 = arith.constant 0 : i32
    %c0_i32_0 = arith.constant 0 : i32
    %c0_i32_1 = arith.constant 0 : i32
    return %c0_i32, %c0_i32_0 : i32, i32
  }
  func.func @transform_14(%arg0: i32) -> (i32, i32) {
    %c0_i32 = arith.constant 0 : i32
    %c0_i32_0 = arith.constant 0 : i32
    return %arg0, %c0_i32 : i32, i32
  }
}

</mosaic_0001>

<llo_original>
// kernel: tpu_custom_call.1
$region0: #{tpu_custom_call.1}
  #allocation0 [shape = 'u32[]', space=smem, size = 0x4, offset = 0x4, fixed_abs, tag = 'smem constant byte address 0x4 - core index']
  #allocation1 [shape = 'u32[144,128]{1,0:T(1,128)}', space=vmem, size = 0x12000, scoped, tag = 'internal scratch']
  %s0 = inlined_call_operand.hbm [shape: f32[128,256], index: 0, kind: input, shape index: {}]
  %s1 = inlined_call_operand.vmem [shape: f32[128,8], index: 1, kind: input, shape index: {}]
  %s2 = inlined_call_operand.vmem [shape: f32[1,256], index: 2, kind: input, shape index: {}]
  %s3 = inlined_call_operand.vmem [shape: f32[1,256], index: 3, kind: input, shape index: {}]
  %s4 = inlined_call_operand.hbm [shape: bf16[256,512], index: 4, kind: input, shape index: {}]
  %s5 = inlined_call_operand.hbm [shape: bf16[256,512], index: 5, kind: input, shape index: {}]
  %s6 = inlined_call_operand.vmem [shape: f32[1,512], index: 6, kind: input, shape index: {}]
  %s7 = inlined_call_operand.vmem [shape: f32[1,512], index: 7, kind: input, shape index: {}]
  %s8 = inlined_call_operand.vmem [shape: bf16[8,256], index: 8, kind: input, shape index: {}]
  %s9 = inlined_call_operand.vmem [shape: f32[1,256], index: 9, kind: input, shape index: {}]
  %s10 = inlined_call_operand.hbm [shape: bf16[256,512], index: 10, kind: input, shape index: {}]
  %s11 = inlined_call_operand.vmem [shape: f32[1,512], index: 11, kind: input, shape index: {}]
  %s12 = inlined_call_operand.hbm [shape: bf16[512,256], index: 12, kind: input, shape index: {}]
  %s13 = inlined_call_operand.vmem [shape: f32[1,256], index: 13, kind: input, shape index: {}]
  %s14 = inlined_call_operand.hbm [shape: f32[128,256], index: 14, kind: output, shape index: {}]
  %s15 = sld [smem:[#allocation0]]
  $region109: #{tpu_custom_call.1} parent=0
    _
  %s17 = ssub.s32 1, %s15
  %s18 = scalar_select 0, %s17, %s15
  $region1: #{tpu_custom_call.1} parent=0
    #allocation2 [shape = 'u8[131072]{0}', space=vmem, size = 0x20000, scoped, tag = 'input window, operand 0']
    #allocation3 [shape = 's32[2]{0}', space=sflag, size = 0x8, scoped, tag = 'scoped memory for tpu_custom_call.1']
    #allocation4 [shape = 's32[2]{0}', space=sflag, size = 0x8, scoped, tag = 'scoped memory for tpu_custom_call.1']
    #allocation5 [shape = 'u8[262144]{0}', space=vmem, size = 0x40000, scoped, tag = 'input window, operand 4, single buffered']
    #allocation6 [shape = 's32[1]{0}', space=sflag, size = 0x4, scoped, tag = 'scoped memory for tpu_custom_call.1']
    #allocation7 [shape = 'u8[262144]{0}', space=vmem, size = 0x40000, scoped, tag = 'input window, operand 5, single buffered']
    #allocation8 [shape = 'u8[262144]{0}', space=vmem, size = 0x40000, scoped, tag = 'input window, operand 10, single buffered']
    #allocation9 [shape = 's32[1]{0}', space=sflag, size = 0x4, scoped, tag = 'scoped memory for tpu_custom_call.1']
    #allocation10 [shape = 'u8[262144]{0}', space=vmem, size = 0x40000, scoped, tag = 'input window, operand 12, single buffered']
    #allocation11 [shape = 'u8[131072]{0}', space=vmem, size = 0x20000, scoped, tag = 'output window, operand 0']
    %19 = vsyncpa [#allocation3], 0
    %s20 = scalar_lea.sflag [#allocation3], 1
    %21 = vsyncpa %s20, 0
    %22 = vsyncpa [#allocation6], 0
    %23 = vsyncpa [#allocation9], 0
    %24 = vsyncpa [#allocation4], 0
    %s25 = scalar_lea.sflag [#allocation4], 1
    %26 = vsyncpa %s25, 0
    loop: start=0, step=1, limit=4
    $region2: #{tpu_custom_call.1} parent=1 // loop_pre_header
      _
    $region3: #{tpu_custom_call.1} parent=1 // loop_header
      %s28 = sphi 0, %s32
      %p29 = scmp.ge.s32.totalorder %s28, 4
      %s38 = sphi 0, %s40
      %s41 = sphi 0, %s38
      %s42 = sphi 0, %s41
      %s58 = sphi 0, %s42
      %s64 = sphi 0, %s66
      %s67 = sphi 0, %s64
      %s68 = sphi 0, %s67
      %s84 = sphi 0, %s68
      %s88 = sphi 0, %s88
      %s90 = sphi 0, %s88
      %s91 = sphi 0, %s90
      %s105 = sphi 0, %s91
      %s109 = sphi 0, %s109
      %s111 = sphi 0, %s109
      %s112 = sphi 0, %s111
      %s126 = sphi 0, %s112
      %s130 = sphi 0, %s130
      %s132 = sphi 0, %s130
      %s133 = sphi 0, %s132
      %s147 = sphi 0, %s133
      %s151 = sphi 0, %s151
      %s153 = sphi 0, %s151
      %s154 = sphi 0, %s153
      %s168 = sphi 0, %s154
      %s172 = sphi 0, %s172
      %s174 = sphi 0, %s172
      %s175 = sphi 0, %s174
      %s189 = sphi 0, %s175
      %s193 = sphi 0, %s193
      %s195 = sphi 0, %s193
      %s196 = sphi 0, %s195
      %s210 = sphi 0, %s196
      %s214 = sphi 0, %s214
      %s216 = sphi 0, %s214
      %s217 = sphi 0, %s216
      %s231 = sphi 0, %s217
      %s235 = sphi 0, %s235
      %s237 = sphi 0, %s235
      %s238 = sphi 0, %s237
      %s252 = sphi 0, %s238
      %s256 = sphi 0, %s256
      %s258 = sphi 0, %s256
      %s259 = sphi 0, %s258
      %s273 = sphi 0, %s259
      %s277 = sphi 0, %s277
      %s279 = sphi 0, %s277
      %s280 = sphi 0, %s279
      %s294 = sphi 0, %s280
      %s298 = sphi 0, %s298
      %s300 = sphi 0, %s298
      %s301 = sphi 0, %s300
      %s315 = sphi 0, %s301
      %s319 = sphi 0, %s319
      %s321 = sphi 0, %s319
      %s322 = sphi 0, %s321
      %s336 = sphi 0, %s322
      %s342 = sphi 0, %s344
      %s345 = sphi 0, %s342
      %s346 = sphi 0, %s345
      %s362 = sphi 0, %s346
    $region4: #{tpu_custom_call.1} parent=1 // loop_header_branch
      %31 = sbr.rel (%p29) target = $region8
    $region5: #{tpu_custom_call.1} parent=1 // loop_body
      %s33 = ssub.s32 %s28, 1
      %s34 = ssub.s32 %s28, 2
      %s35 = sadd.s32 %s28, 1
      %s36 = ssub.s32 %s28, %s35
      %p37 = scmp.eq.s32.totalorder %s36, 0
      %s39 = sadd.s32 %s38, 1
      %s40 = scalar_select %p37, %s38, %s39
      %p43 = pneg %p37
      %p44 = scmp.eq.s32.totalorder %s28, 1
      %p45 = por %p43, %p44
      %p46 = scmp.ne.s32.totalorder %s38, %s41
      %p47 = scmp.eq.s32.totalorder %s28, 0
      %p48 = por %p46, %p47
      %p49 = scmp.ne.s32.totalorder %s38, %s41
      %p50 = scmp.eq.s32.totalorder %s33, 1
      %p51 = por %p49, %p50
      %p52 = scmp.ne.s32.totalorder %s41, %s42
      %p53 = scmp.eq.s32.totalorder %s33, 0
      %p54 = por %p52, %p53
      %p55 = scmp.ne.s32.totalorder %s41, %s42
      %p56 = scmp.eq.s32.totalorder %s34, 1
      %p57 = por %p55, %p56
      %p59 = scmp.ne.s32.totalorder %s42, %s58
      %p60 = scmp.eq.s32.totalorder %s34, 0
      %p61 = por %p59, %p60
      %s62 = ssub.s32 %s28, %s35
      %p63 = scmp.eq.s32.totalorder %s62, 0
      %s65 = sadd.s32 %s64, 1
      %s66 = scalar_select %p63, %s64, %s65
      %p69 = pneg %p63
      %p70 = scmp.eq.s32.totalorder %s28, 1
      %p71 = por %p69, %p70
      %p72 = scmp.ne.s32.totalorder %s64, %s67
      %p73 = scmp.eq.s32.totalorder %s28, 0
      %p74 = por %p72, %p73
      %p75 = scmp.ne.s32.totalorder %s64, %s67
      %p76 = scmp.eq.s32.totalorder %s33, 1
      %p77 = por %p75, %p76
      %p78 = scmp.ne.s32.totalorder %s67, %s68
      %p79 = scmp.eq.s32.totalorder %s33, 0
      %p80 = por %p78, %p79
      %p81 = scmp.ne.s32.totalorder %s67, %s68
      %p82 = scmp.eq.s32.totalorder %s34, 1
      %p83 = por %p81, %p82
      %p85 = scmp.ne.s32.totalorder %s68, %s84
      %p86 = scmp.eq.s32.totalorder %s34, 0
      %p87 = por %p85, %p86
      %s89 = sadd.s32 %s88, 1
      %p92 = scmp.eq.s32.totalorder %s28, 1
      %p93 = scmp.ne.s32.totalorder %s88, %s90
      %p94 = scmp.eq.s32.totalorder %s28, 0
      %p95 = por %p93, %p94
      %p96 = scmp.ne.s32.totalorder %s88, %s90
      %p97 = scmp.eq.s32.totalorder %s33, 1
      %p98 = por %p96, %p97
      %p99 = scmp.ne.s32.totalorder %s90, %s91
      %p100 = scmp.eq.s32.totalorder %s33, 0
      %p101 = por %p99, %p100
      %p102 = scmp.ne.s32.totalorder %s90, %s91
      %p103 = scmp.eq.s32.totalorder %s34, 1
      %p104 = por %p102, %p103
      %p106 = scmp.ne.s32.totalorder %s91, %s105
      %p107 = scmp.eq.s32.totalorder %s34, 0
      %p108 = por %p106, %p107
      %s110 = sadd.s32 %s109, 1
      %p113 = scmp.eq.s32.totalorder %s28, 1
      %p114 = scmp.ne.s32.totalorder %s109, %s111
      %p115 = scmp.eq.s32.totalorder %s28, 0
      %p116 = por %p114, %p115
      %p117 = scmp.ne.s32.totalorder %s109, %s111
      %p118 = scmp.eq.s32.totalorder %s33, 1
      %p119 = por %p117, %p118
      %p120 = scmp.ne.s32.totalorder %s111, %s112
      %p121 = scmp.eq.s32.totalorder %s33, 0
      %p122 = por %p120, %p121
      %p123 = scmp.ne.s32.totalorder %s111, %s112
      %p124 = scmp.eq.s32.totalorder %s34, 1
      %p125 = por %p123, %p124
      %p127 = scmp.ne.s32.totalorder %s112, %s126
      %p128 = scmp.eq.s32.totalorder %s34, 0
      %p129 = por %p127, %p128
      %s131 = sadd.s32 %s130, 1
      %p134 = scmp.eq.s32.totalorder %s28, 1
      %p135 = scmp.ne.s32.totalorder %s130, %s132
      %p136 = scmp.eq.s32.totalorder %s28, 0
      %p137 = por %p135, %p136
      %p138 = scmp.ne.s32.totalorder %s130, %s132
      %p139 = scmp.eq.s32.totalorder %s33, 1
      %p140 = por %p138, %p139
      %p141 = scmp.ne.s32.totalorder %s132, %s133
      %p142 = scmp.eq.s32.totalorder %s33, 0
      %p143 = por %p141, %p142
      %p144 = scmp.ne.s32.totalorder %s132, %s133
      %p145 = scmp.eq.s32.totalorder %s34, 1
      %p146 = por %p144, %p145
      %p148 = scmp.ne.s32.totalorder %s133, %s147
      %p149 = scmp.eq.s32.totalorder %s34, 0
      %p150 = por %p148, %p149
      %s152 = sadd.s32 %s151, 1
      %p155 = scmp.eq.s32.totalorder %s28, 1
      %p156 = scmp.ne.s32.totalorder %s151, %s153
      %p157 = scmp.eq.s32.totalorder %s28, 0
      %p158 = por %p156, %p157
      %p159 = scmp.ne.s32.totalorder %s151, %s153
      %p160 = scmp.eq.s32.totalorder %s33, 1
      %p161 = por %p159, %p160
      %p162 = scmp.ne.s32.totalorder %s153, %s154
      %p163 = scmp.eq.s32.totalorder %s33, 0
      %p164 = por %p162, %p163
      %p165 = scmp.ne.s32.totalorder %s153, %s154
      %p166 = scmp.eq.s32.totalorder %s34, 1
      %p167 = por %p165, %p166
      %p169 = scmp.ne.s32.totalorder %s154, %s168
      %p170 = scmp.eq.s32.totalorder %s34, 0
      %p171 = por %p169, %p170
      %s173 = sadd.s32 %s172, 1
      %p176 = scmp.eq.s32.totalorder %s28, 1
      %p177 = scmp.ne.s32.totalorder %s172, %s174
      %p178 = scmp.eq.s32.totalorder %s28, 0
      %p179 = por %p177, %p178
      %p180 = scmp.ne.s32.totalorder %s172, %s174
      %p181 = scmp.eq.s32.totalorder %s33, 1
      %p182 = por %p180, %p181
      %p183 = scmp.ne.s32.totalorder %s174, %s175
      %p184 = scmp.eq.s32.totalorder %s33, 0
      %p185 = por %p183, %p184
      %p186 = scmp.ne.s32.totalorder %s174, %s175
      %p187 = scmp.eq.s32.totalorder %s34, 1
      %p188 = por %p186, %p187
      %p190 = scmp.ne.s32.totalorder %s175, %s189
      %p191 = scmp.eq.s32.totalorder %s34, 0
      %p192 = por %p190, %p191
      %s194 = sadd.s32 %s193, 1
      %p197 = scmp.eq.s32.totalorder %s28, 1
      %p198 = scmp.ne.s32.totalorder %s193, %s195
      %p199 = scmp.eq.s32.totalorder %s28, 0
      %p200 = por %p198, %p199
      %p201 = scmp.ne.s32.totalorder %s193, %s195
      %p202 = scmp.eq.s32.totalorder %s33, 1
      %p203 = por %p201, %p202
      %p204 = scmp.ne.s32.totalorder %s195, %s196
      %p205 = scmp.eq.s32.totalorder %s33, 0
      %p206 = por %p204, %p205
      %p207 = scmp.ne.s32.totalorder %s195, %s196
      %p208 = scmp.eq.s32.totalorder %s34, 1
      %p209 = por %p207, %p208
      %p211 = scmp.ne.s32.totalorder %s196, %s210
      %p212 = scmp.eq.s32.totalorder %s34, 0
      %p213 = por %p211, %p212
      %s215 = sadd.s32 %s214, 1
      %p218 = scmp.eq.s32.totalorder %s28, 1
      %p219 = scmp.ne.s32.totalorder %s214, %s216
      %p220 = scmp.eq.s32.totalorder %s28, 0
      %p221 = por %p219, %p220
      %p222 = scmp.ne.s32.totalorder %s214, %s216
      %p223 = scmp.eq.s32.totalorder %s33, 1
      %p224 = por %p222, %p223
      %p225 = scmp.ne.s32.totalorder %s216, %s217
      %p226 = scmp.eq.s32.totalorder %s33, 0
      %p227 = por %p225, %p226
      %p228 = scmp.ne.s32.totalorder %s216, %s217
      %p229 = scmp.eq.s32.totalorder %s34, 1
      %p230 = por %p228, %p229
      %p232 = scmp.ne.s32.totalorder %s217, %s231
      %p233 = scmp.eq.s32.totalorder %s34, 0
      %p234 = por %p232, %p233
      %s236 = sadd.s32 %s235, 1
      %p239 = scmp.eq.s32.totalorder %s28, 1
      %p240 = scmp.ne.s32.totalorder %s235, %s237
      %p241 = scmp.eq.s32.totalorder %s28, 0
      %p242 = por %p240, %p241
      %p243 = scmp.ne.s32.totalorder %s235, %s237
      %p244 = scmp.eq.s32.totalorder %s33, 1
      %p245 = por %p243, %p244
      %p246 = scmp.ne.s32.totalorder %s237, %s238
      %p247 = scmp.eq.s32.totalorder %s33, 0
      %p248 = por %p246, %p247
      %p249 = scmp.ne.s32.totalorder %s237, %s238
      %p250 = scmp.eq.s32.totalorder %s34, 1
      %p251 = por %p249, %p250
      %p253 = scmp.ne.s32.totalorder %s238, %s252
      %p254 = scmp.eq.s32.totalorder %s34, 0
      %p255 = por %p253, %p254
      %s257 = sadd.s32 %s256, 1
      %p260 = scmp.eq.s32.totalorder %s28, 1
      %p261 = scmp.ne.s32.totalorder %s256, %s258
      %p262 = scmp.eq.s32.totalorder %s28, 0
      %p263 = por %p261, %p262
      %p264 = scmp.ne.s32.totalorder %s256, %s258
      %p265 = scmp.eq.s32.totalorder %s33, 1
      %p266 = por %p264, %p265
      %p267 = scmp.ne.s32.totalorder %s258, %s259
      %p268 = scmp.eq.s32.totalorder %s33, 0
      %p269 = por %p267, %p268
      %p270 = scmp.ne.s32.totalorder %s258, %s259
      %p271 = scmp.eq.s32.totalorder %s34, 1
      %p272 = por %p270, %p271
      %p274 = scmp.ne.s32.totalorder %s259, %s273
      %p275 = scmp.eq.s32.totalorder %s34, 0
      %p276 = por %p274, %p275
      %s278 = sadd.s32 %s277, 1
      %p281 = scmp.eq.s32.totalorder %s28, 1
      %p282 = scmp.ne.s32.totalorder %s277, %s279
      %p283 = scmp.eq.s32.totalorder %s28, 0
      %p284 = por %p282, %p283
      %p285 = scmp.ne.s32.totalorder %s277, %s279
      %p286 = scmp.eq.s32.totalorder %s33, 1
      %p287 = por %p285, %p286
      %p288 = scmp.ne.s32.totalorder %s279, %s280
      %p289 = scmp.eq.s32.totalorder %s33, 0
      %p290 = por %p288, %p289
      %p291 = scmp.ne.s32.totalorder %s279, %s280
      %p292 = scmp.eq.s32.totalorder %s34, 1
      %p293 = por %p291, %p292
      %p295 = scmp.ne.s32.totalorder %s280, %s294
      %p296 = scmp.eq.s32.totalorder %s34, 0
      %p297 = por %p295, %p296
      %s299 = sadd.s32 %s298, 1
      %p302 = scmp.eq.s32.totalorder %s28, 1
      %p303 = scmp.ne.s32.totalorder %s298, %s300
      %p304 = scmp.eq.s32.totalorder %s28, 0
      %p305 = por %p303, %p304
      %p306 = scmp.ne.s32.totalorder %s298, %s300
      %p307 = scmp.eq.s32.totalorder %s33, 1
      %p308 = por %p306, %p307
      %p309 = scmp.ne.s32.totalorder %s300, %s301
      %p310 = scmp.eq.s32.totalorder %s33, 0
      %p311 = por %p309, %p310
      %p312 = scmp.ne.s32.totalorder %s300, %s301
      %p313 = scmp.eq.s32.totalorder %s34, 1
      %p314 = por %p312, %p313
      %p316 = scmp.ne.s32.totalorder %s301, %s315
      %p317 = scmp.eq.s32.totalorder %s34, 0
      %p318 = por %p316, %p317
      %s320 = sadd.s32 %s319, 1
      %p323 = scmp.eq.s32.totalorder %s28, 1
      %p324 = scmp.ne.s32.totalorder %s319, %s321
      %p325 = scmp.eq.s32.totalorder %s28, 0
      %p326 = por %p324, %p325
      %p327 = scmp.ne.s32.totalorder %s319, %s321
      %p328 = scmp.eq.s32.totalorder %s33, 1
      %p329 = por %p327, %p328
      %p330 = scmp.ne.s32.totalorder %s321, %s322
      %p331 = scmp.eq.s32.totalorder %s33, 0
      %p332 = por %p330, %p331
      %p333 = scmp.ne.s32.totalorder %s321, %s322
      %p334 = scmp.eq.s32.totalorder %s34, 1
      %p335 = por %p333, %p334
      %p337 = scmp.ne.s32.totalorder %s322, %s336
      %p338 = scmp.eq.s32.totalorder %s34, 0
      %p339 = por %p337, %p338
      %s340 = ssub.s32 %s28, %s35
      %p341 = scmp.eq.s32.totalorder %s340, 0
      %s343 = sadd.s32 %s342, 1
      %s344 = scalar_select %p341, %s342, %s343
      %p347 = pneg %p341
      %p348 = scmp.eq.s32.totalorder %s28, 1
      %p349 = por %p347, %p348
      %p350 = scmp.ne.s32.totalorder %s342, %s345
      %p351 = scmp.eq.s32.totalorder %s28, 0
      %p352 = por %p350, %p351
      %p353 = scmp.ne.s32.totalorder %s342, %s345
      %p354 = scmp.eq.s32.totalorder %s33, 1
      %p355 = por %p353, %p354
      %p356 = scmp.ne.s32.totalorder %s345, %s346
      %p357 = scmp.eq.s32.totalorder %s33, 0
      %p358 = por %p356, %p357
      %p359 = scmp.ne.s32.totalorder %s345, %s346
      %p360 = scmp.eq.s32.totalorder %s34, 1
      %p361 = por %p359, %p360
      %p363 = scmp.ne.s32.totalorder %s346, %s362
      %p364 = scmp.eq.s32.totalorder %s34, 0
      %p365 = por %p363, %p364
      %p366 = scmp.le.s32.totalorder 1, %s28
      %p367 = scmp.lt.s32.totalorder %s28, 3
      %p368 = pnand %p366, %p367
      %p369 = pneg %p368
      // Predicated region
      $region9: #{tpu_custom_call.1} parent=5 // pred_check
        _
      $region10: #{tpu_custom_call.1} parent=5 // pred_check_branch
        %371 = sbr.rel (%p368) target = $region12
      $region11: #{tpu_custom_call.1} parent=5 // pred_region
        %s372 = ssub.s32 %s28, 1
        // Predicated region
        $region13: #{tpu_custom_call.1} parent=11 // pred_check
          %p373 = pneg %p101
        $region14: #{tpu_custom_call.1} parent=11 // pred_check_branch
          %375 = sbr.rel (%p373) target = $region16
        $region15: #{tpu_custom_call.1} parent=11 // pred_region
          _
        $region16: #{tpu_custom_call.1} parent=11 // pred_fallthru
          _
        // Predicated region
        $region17: #{tpu_custom_call.1} parent=11 // pred_check
          %p376 = pneg %p122
        $region18: #{tpu_custom_call.1} parent=11 // pred_check_branch
          %378 = sbr.rel (%p376) target = $region20
        $region19: #{tpu_custom_call.1} parent=11 // pred_region
          _
        $region20: #{tpu_custom_call.1} parent=11 // pred_fallthru
          _
        // Predicated region
        $region21: #{tpu_custom_call.1} parent=11 // pred_check
          %p379 = pneg %p143
        $region22: #{tpu_custom_call.1} parent=11 // pred_check_branch
          %381 = sbr.rel (%p379) target = $region24
        $region23: #{tpu_custom_call.1} parent=11 // pred_region
          %s383 = ssub.s32 8192, 8192
          %384 = vsyncadd [#allocation6], %s383
          %s385 = sshll.u32 [#allocation5], 4
          %s386 = int_to_ptr.vmem [resolvable:$true] %s385
          %391 = dma.hbm_to_vmem [thread:$0]  %s4, 8192, %s386, [#allocation6], 256, 256, 16
        $region24: #{tpu_custom_call.1} parent=11 // pred_fallthru
          _
        // Predicated region
        $region25: #{tpu_custom_call.1} parent=11 // pred_check
          %p392 = pneg %p164
        $region26: #{tpu_custom_call.1} parent=11 // pred_check_branch
          %394 = sbr.rel (%p392) target = $region28
        $region27: #{tpu_custom_call.1} parent=11 // pred_region
          %s396 = ssub.s32 8192, 8192
          %397 = vsyncadd [#allocation6], %s396
          %s398 = sshll.u32 [#allocation7], 4
          %s399 = int_to_ptr.vmem [resolvable:$true] %s398
          %404 = dma.hbm_to_vmem [thread:$0]  %s5, 8192, %s399, [#allocation6], 256, 256, 16
        $region28: #{tpu_custom_call.1} parent=11 // pred_fallthru
          _
        // Predicated region
        $region29: #{tpu_custom_call.1} parent=11 // pred_check
          %p405 = pneg %p185
        $region30: #{tpu_custom_call.1} parent=11 // pred_check_branch
          %407 = sbr.rel (%p405) target = $region32
        $region31: #{tpu_custom_call.1} parent=11 // pred_region
          _
        $region32: #{tpu_custom_call.1} parent=11 // pred_fallthru
          _
        // Predicated region
        $region33: #{tpu_custom_call.1} parent=11 // pred_check
          %p408 = pneg %p206
        $region34: #{tpu_custom_call.1} parent=11 // pred_check_branch
          %410 = sbr.rel (%p408) target = $region36
        $region35: #{tpu_custom_call.1} parent=11 // pred_region
          _
        $region36: #{tpu_custom_call.1} parent=11 // pred_fallthru
          _
        // Predicated region
        $region37: #{tpu_custom_call.1} parent=11 // pred_check
          %p411 = pneg %p227
        $region38: #{tpu_custom_call.1} parent=11 // pred_check_branch
          %413 = sbr.rel (%p411) target = $region40
        $region39: #{tpu_custom_call.1} parent=11 // pred_region
          _
        $region40: #{tpu_custom_call.1} parent=11 // pred_fallthru
          _
        // Predicated region
        $region41: #{tpu_custom_call.1} parent=11 // pred_check
          %p414 = pneg %p248
        $region42: #{tpu_custom_call.1} parent=11 // pred_check_branch
          %416 = sbr.rel (%p414) target = $region44
        $region43: #{tpu_custom_call.1} parent=11 // pred_region
          _
        $region44: #{tpu_custom_call.1} parent=11 // pred_fallthru
          _
        // Predicated region
        $region45: #{tpu_custom_call.1} parent=11 // pred_check
          %p417 = pneg %p269
        $region46: #{tpu_custom_call.1} parent=11 // pred_check_branch
          %419 = sbr.rel (%p417) target = $region48
        $region47: #{tpu_custom_call.1} parent=11 // pred_region
          %s421 = ssub.s32 8192, 8192
          %422 = vsyncadd [#allocation9], %s421
          %s423 = sshll.u32 [#allocation8], 4
          %s424 = int_to_ptr.vmem [resolvable:$true] %s423
          %429 = dma.hbm_to_vmem [thread:$0]  %s10, 8192, %s424, [#allocation9], 256, 256, 16
        $region48: #{tpu_custom_call.1} parent=11 // pred_fallthru
          _
        // Predicated region
        $region49: #{tpu_custom_call.1} parent=11 // pred_check
          %p430 = pneg %p290
        $region50: #{tpu_custom_call.1} parent=11 // pred_check_branch
          %432 = sbr.rel (%p430) target = $region52
        $region51: #{tpu_custom_call.1} parent=11 // pred_region
          _
        $region52: #{tpu_custom_call.1} parent=11 // pred_fallthru
          _
        // Predicated region
        $region53: #{tpu_custom_call.1} parent=11 // pred_check
          %p433 = pneg %p311
        $region54: #{tpu_custom_call.1} parent=11 // pred_check_branch
          %435 = sbr.rel (%p433) target = $region56
        $region55: #{tpu_custom_call.1} parent=11 // pred_region
          %s437 = ssub.s32 8192, 8192
          %438 = vsyncadd [#allocation9], %s437
          %s439 = sshll.u32 [#allocation10], 4
          %s440 = int_to_ptr.vmem [resolvable:$true] %s439
          %445 = dma.hbm_to_vmem [thread:$0]  %s12, 8192, %s440, [#allocation9], 128, 128, 8
        $region56: #{tpu_custom_call.1} parent=11 // pred_fallthru
          _
        // Predicated region
        $region57: #{tpu_custom_call.1} parent=11 // pred_check
          %p446 = pneg %p332
        $region58: #{tpu_custom_call.1} parent=11 // pred_check_branch
          %448 = sbr.rel (%p446) target = $region60
        $region59: #{tpu_custom_call.1} parent=11 // pred_region
          _
        $region60: #{tpu_custom_call.1} parent=11 // pred_fallthru
          _
      $region12: #{tpu_custom_call.1} parent=5 // pred_fallthru
        _
      %p449 = scmp.lt.s32.totalorder %s28, 2
      // Predicated region
      $region61: #{tpu_custom_call.1} parent=5 // pred_check
        %p450 = pneg %p449
      $region62: #{tpu_custom_call.1} parent=5 // pred_check_branch
        %452 = sbr.rel (%p450) target = $region64
      $region63: #{tpu_custom_call.1} parent=5 // pred_region
        // Predicated region
        $region65: #{tpu_custom_call.1} parent=63 // pred_check
          %p453 = pneg %p48
        $region66: #{tpu_custom_call.1} parent=63 // pred_check_branch
          %455 = sbr.rel (%p453) target = $region68
        $region67: #{tpu_custom_call.1} parent=63 // pred_region
          %s456 = sand.u32 %s38, 1
          %s457 = scalar_lea.sflag [#allocation3], %s456
          %s458 = sand.u32 %s38, 1
          %s459 = smul.addr %s458, 128
          %s460 = scalar_lea.vmem [#allocation2], %s459
          %s461 = smul.u32 8, %s28
          %s463 = ssub.s32 2048, 2048
          %464 = vsyncadd %s457, %s463
          %s465 = smul.addr %s461, 2
          %s466 = smul.addr %s465, 128
          %s467 = scalar_lea.hbm %s0, %s466
          %s468 = sshll.u32 %s460, 4
          %s469 = int_to_ptr.vmem [resolvable:$true] %s468
          %474 = dma.hbm_to_vmem [thread:$0]  %s467, 2048, %s469, %s457, 256, 256, 16
        $region68: #{tpu_custom_call.1} parent=63 // pred_fallthru
          _
        // Predicated region
        $region69: #{tpu_custom_call.1} parent=63 // pred_check
          %p475 = pneg %p74
        $region70: #{tpu_custom_call.1} parent=63 // pred_check_branch
          %477 = sbr.rel (%p475) target = $region72
        $region71: #{tpu_custom_call.1} parent=63 // pred_region
          %s478 = smul.u32 8, %s28
          %p479 = scmp.lt.s32.totalorder %s478, 15
          %s480 = scalar_select %p479, %s478, 15
          %s481 = smul.addr %s480, 8
          %s482 = scalar_lea.vmem %s1, %s481
          %s483 = smul.u32 8, %s28
        $region72: #{tpu_custom_call.1} parent=63 // pred_fallthru
          _
      $region64: #{tpu_custom_call.1} parent=5 // pred_fallthru
        _
      %p484 = scmp.le.s32.totalorder 1, %s28
      %p485 = scmp.lt.s32.totalorder %s28, 3
      %p486 = pnand %p484, %p485
      %p487 = pneg %p486
      // Predicated region
      $region73: #{tpu_custom_call.1} parent=5 // pred_check
        _
      $region74: #{tpu_custom_call.1} parent=5 // pred_check_branch
        %489 = sbr.rel (%p486) target = $region76
      $region75: #{tpu_custom_call.1} parent=5 // pred_region
        %s490 = ssub.s32 %s28, 1
        %s491 = sand.u32 %s41, 1
        %s492 = scalar_lea.sflag [#allocation3], %s491
        %s493 = sand.u32 %s41, 1
        %s494 = smul.addr %s493, 128
        %s495 = scalar_lea.vmem [#allocation2], %s494
        // Predicated region
        $region77: #{tpu_custom_call.1} parent=75 // pred_check
          %p496 = pneg %p54
        $region78: #{tpu_custom_call.1} parent=75 // pred_check_branch
          %498 = sbr.rel (%p496) target = $region80
        $region79: #{tpu_custom_call.1} parent=75 // pred_region
          %499 = dma.done %s492, 2048
        $region80: #{tpu_custom_call.1} parent=75 // pred_fallthru
          _
        // Predicated region
        $region81: #{tpu_custom_call.1} parent=75 // pred_check
          %p500 = pneg %p143
        $region82: #{tpu_custom_call.1} parent=75 // pred_check_branch
          %502 = sbr.rel (%p500) target = $region84
        $region83: #{tpu_custom_call.1} parent=75 // pred_region
          %503 = dma.done [#allocation6], 8192
        $region84: #{tpu_custom_call.1} parent=75 // pred_fallthru
          _
        // Predicated region
        $region85: #{tpu_custom_call.1} parent=75 // pred_check
          %p504 = pneg %p164
        $region86: #{tpu_custom_call.1} parent=75 // pred_check_branch
          %506 = sbr.rel (%p504) target = $region88
        $region87: #{tpu_custom_call.1} parent=75 // pred_region
          %507 = dma.done [#allocation6], 8192
        $region88: #{tpu_custom_call.1} parent=75 // pred_fallthru
          _
        // Predicated region
        $region89: #{tpu_custom_call.1} parent=75 // pred_check
          %p508 = pneg %p269
        $region90: #{tpu_custom_call.1} parent=75 // pred_check_branch
          %510 = sbr.rel (%p508) target = $region92
        $region91: #{tpu_custom_call.1} parent=75 // pred_region
          %511 = dma.done [#allocation9], 8192
        $region92: #{tpu_custom_call.1} parent=75 // pred_fallthru
          _
        // Predicated region
        $region93: #{tpu_custom_call.1} parent=75 // pred_check
          %p512 = pneg %p311
        $region94: #{tpu_custom_call.1} parent=75 // pred_check_branch
          %514 = sbr.rel (%p512) target = $region96
        $region95: #{tpu_custom_call.1} parent=75 // pred_region
          %515 = dma.done [#allocation9], 8192
        $region96: #{tpu_custom_call.1} parent=75 // pred_fallthru
          _
        %s516 = sand.u32 %s41, 1
        %s517 = scalar_lea.sflag [#allocation3], %s516
        %s518 = sand.u32 %s41, 1
        %s519 = smul.addr %s518, 128
        %s520 = scalar_lea.vmem [#allocation2], %s519
        %p521 = pneg %p54
        %p522 = pneg %p51
        %s523 = smul.u32 8, %s33
        %p524 = scmp.lt.s32.totalorder %s523, 15
        %s525 = scalar_select %p524, %s523, 15
        %s526 = smul.addr %s525, 8
        %s527 = scalar_lea.vmem %s1, %s526
        %p528 = pneg %p80
        %p529 = pneg %p77
        %p530 = pneg %p101
        %p531 = pneg %p98
        %p532 = pneg %p122
        %p533 = pneg %p119
        %p534 = pneg %p143
        %p535 = pneg %p140
        %p536 = pneg %p164
        %p537 = pneg %p161
        %p538 = pneg %p185
        %p539 = pneg %p182
        %p540 = pneg %p206
        %p541 = pneg %p203
        %p542 = pneg %p227
        %p543 = pneg %p224
        %p544 = pneg %p248
        %p545 = pneg %p245
        %p546 = pneg %p269
        %p547 = pneg %p266
        %p548 = pneg %p290
        %p549 = pneg %p287
        %p550 = pneg %p311
        %p551 = pneg %p308
        %p552 = pneg %p332
        %p553 = pneg %p329
        %p554 = pneg %p358
        %p555 = pneg %p355
        %s556 = sand.u32 %s345, 1
        %s557 = scalar_lea.sflag [#allocation4], %s556
        %s558 = sand.u32 %s345, 1
        %s559 = smul.addr %s558, 128
        %s560 = scalar_lea.vmem [#allocation11], %s559
        %s561 = smul.u32 8, %s33
        %s562 = smul.u32 8, %s33
        %p563 = scmp.lt.s32.totalorder %s562, 15
        %s564 = scalar_select %p563, %s562, 15
        %s565 = smul.addr %s564, 8
        %s566 = scalar_lea.vmem %s1, %s565
        %s567 = smul.u32 8, %s33
        %s568 = smul.u32 8, %s33
        %v570 = vld [vmem:[%s495] sm:$0xff]
        %v571 = vld [vmem:[%s495 + $0x8] sm:$0xff]
        %v572 = vld [vmem:[%s495 + $0x10] sm:$0xff]
        %v573 = vld [vmem:[%s495 + $0x18] sm:$0xff]
        %v574 = vld [vmem:[%s495 + $0x20] sm:$0xff]
        %v575 = vld [vmem:[%s495 + $0x28] sm:$0xff]
        %v576 = vld [vmem:[%s495 + $0x30] sm:$0xff]
        %v577 = vld [vmem:[%s495 + $0x38] sm:$0xff]
        %v578 = vld [vmem:[%s495 + $0x40] sm:$0xff]
        %v579 = vld [vmem:[%s495 + $0x48] sm:$0xff]
        %v580 = vld [vmem:[%s495 + $0x50] sm:$0xff]
        %v581 = vld [vmem:[%s495 + $0x58] sm:$0xff]
        %v582 = vld [vmem:[%s495 + $0x60] sm:$0xff]
        %v583 = vld [vmem:[%s495 + $0x68] sm:$0xff]
        %v584 = vld [vmem:[%s495 + $0x70] sm:$0xff]
        %v585 = vld [vmem:[%s495 + $0x78] sm:$0xff]
        %v586 = vld [vmem:[%s566] sm:$0xff]
        %v587 = vld [vmem:[%s566 + $0x8] sm:$0xff]
        %v588 = vld [vmem:[%s566 + $0x10] sm:$0xff]
        %v589 = vld [vmem:[%s566 + $0x18] sm:$0xff]
        %v590 = vld [vmem:[%s566 + $0x20] sm:$0xff]
        %v591 = vld [vmem:[%s566 + $0x28] sm:$0xff]
        %v592 = vld [vmem:[%s566 + $0x30] sm:$0xff]
        %v593 = vld [vmem:[%s566 + $0x38] sm:$0xff]
        %v594 = vadd.f32 %v570, %v571
        %595 = vadd.xlane.f32.xlu0 %v594
        %v596 = vpop.xlane.xlu0 %595
        %v597 = vadd.f32 %v572, %v573
        %598 = vadd.xlane.f32.xlu0 %v597
        %v599 = vpop.xlane.xlu0 %598
        %v600 = vadd.f32 %v574, %v575
        %601 = vadd.xlane.f32.xlu0 %v600
        %v602 = vpop.xlane.xlu0 %601
        %v603 = vadd.f32 %v576, %v577
        %604 = vadd.xlane.f32.xlu0 %v603
        %v605 = vpop.xlane.xlu0 %604
        %v606 = vadd.f32 %v578, %v579
        %607 = vadd.xlane.f32.xlu0 %v606
        %v608 = vpop.xlane.xlu0 %607
        %v609 = vadd.f32 %v580, %v581
        %610 = vadd.xlane.f32.xlu0 %v609
        %v611 = vpop.xlane.xlu0 %610
        %v612 = vadd.f32 %v582, %v583
        %613 = vadd.xlane.f32.xlu0 %v612
        %v614 = vpop.xlane.xlu0 %613
        %v615 = vadd.f32 %v584, %v585
        %616 = vadd.xlane.f32.xlu0 %v615
        %v617 = vpop.xlane.xlu0 %616
        %v618 = vrcp.pop 256.0
        %v619 = vmul.f32 %v596, %v618
        %v620 = vmul.f32 %v599, %v618
        %v621 = vmul.f32 %v602, %v618
        %v622 = vmul.f32 %v605, %v618
        %v623 = vmul.f32 %v608, %v618
        %v624 = vmul.f32 %v611, %v618
        %v625 = vmul.f32 %v614, %v618
        %v626 = vmul.f32 %v617, %v618
        %v627 = vsub.f32 %v570, %v619
        %v628 = vsub.f32 %v571, %v619
        %v629 = vsub.f32 %v572, %v620
        %v630 = vsub.f32 %v573, %v620
        %v631 = vsub.f32 %v574, %v621
        %v632 = vsub.f32 %v575, %v621
        %v633 = vsub.f32 %v576, %v622
        %v634 = vsub.f32 %v577, %v622
        %v635 = vsub.f32 %v578, %v623
        %v636 = vsub.f32 %v579, %v623
        %v637 = vsub.f32 %v580, %v624
        %v638 = vsub.f32 %v581, %v624
        %v639 = vsub.f32 %v582, %v625
        %v640 = vsub.f32 %v583, %v625
        %v641 = vsub.f32 %v584, %v626
        %v642 = vsub.f32 %v585, %v626
        %v643 = vmul.f32 %v627, %v627
        %v644 = vmul.f32 %v628, %v628
        %v645 = vmul.f32 %v629, %v629
        %v646 = vmul.f32 %v630, %v630
        %v647 = vmul.f32 %v631, %v631
        %v648 = vmul.f32 %v632, %v632
        %v649 = vmul.f32 %v633, %v633
        %v650 = vmul.f32 %v634, %v634
        %v651 = vmul.f32 %v635, %v635
        %v652 = vmul.f32 %v636, %v636
        %v653 = vmul.f32 %v637, %v637
        %v654 = vmul.f32 %v638, %v638
        %v655 = vmul.f32 %v639, %v639
        %v656 = vmul.f32 %v640, %v640
        %v657 = vmul.f32 %v641, %v641
        %v658 = vmul.f32 %v642, %v642
        %v659 = vadd.f32 %v643, %v644
        %660 = vadd.xlane.f32.xlu0 %v659
        %v661 = vpop.xlane.xlu0 %660
        %v662 = vadd.f32 %v645, %v646
        %663 = vadd.xlane.f32.xlu0 %v662
        %v664 = vpop.xlane.xlu0 %663
        %v665 = vadd.f32 %v647, %v648
        %666 = vadd.xlane.f32.xlu0 %v665
        %v667 = vpop.xlane.xlu0 %666
        %v668 = vadd.f32 %v649, %v650
        %669 = vadd.xlane.f32.xlu0 %v668
        %v670 = vpop.xlane.xlu0 %669
        %v671 = vadd.f32 %v651, %v652
        %672 = vadd.xlane.f32.xlu0 %v671
        %v673 = vpop.xlane.xlu0 %672
        %v674 = vadd.f32 %v653, %v654
        %675 = vadd.xlane.f32.xlu0 %v674
        %v676 = vpop.xlane.xlu0 %675
        %v677 = vadd.f32 %v655, %v656
        %678 = vadd.xlane.f32.xlu0 %v677
        %v679 = vpop.xlane.xlu0 %678
        %v680 = vadd.f32 %v657, %v658
        %681 = vadd.xlane.f32.xlu0 %v680
        %v682 = vpop.xlane.xlu0 %681
        %v683 = vmul.f32 %v661, %v618
        %v684 = vmul.f32 %v664, %v618
        %v685 = vmul.f32 %v667, %v618
        %v686 = vmul.f32 %v670, %v618
        %v687 = vmul.f32 %v673, %v618
        %v688 = vmul.f32 %v676, %v618
        %v689 = vmul.f32 %v679, %v618
        %v690 = vmul.f32 %v682, %v618
        %v691 = vadd.f32 %v683, 1e-05
        %v692 = vadd.f32 %v684, 1e-05
        %v693 = vadd.f32 %v685, 1e-05
        %v694 = vadd.f32 %v686, 1e-05
        %v695 = vadd.f32 %v687, 1e-05
        %v696 = vadd.f32 %v688, 1e-05
        %v697 = vadd.f32 %v689, 1e-05
        %v698 = vadd.f32 %v690, 1e-05
        %v699 = vrsqrt.pop %v691
        %v700 = vrsqrt.pop %v692
        %v701 = vrsqrt.pop %v693
        %v702 = vrsqrt.pop %v694
        %v703 = vrsqrt.pop %v695
        %v704 = vrsqrt.pop %v696
        %v705 = vrsqrt.pop %v697
        %v706 = vrsqrt.pop %v698
        %v707 = vmul.f32 %v627, %v699
        %v708 = vmul.f32 %v628, %v699
        %v709 = vmul.f32 %v629, %v700
        %v710 = vmul.f32 %v630, %v700
        %v711 = vmul.f32 %v631, %v701
        %v712 = vmul.f32 %v632, %v701
        %v713 = vmul.f32 %v633, %v702
        %v714 = vmul.f32 %v634, %v702
        %v715 = vmul.f32 %v635, %v703
        %v716 = vmul.f32 %v636, %v703
        %v717 = vmul.f32 %v637, %v704
        %v718 = vmul.f32 %v638, %v704
        %v719 = vmul.f32 %v639, %v705
        %v720 = vmul.f32 %v640, %v705
        %v721 = vmul.f32 %v641, %v706
        %v722 = vmul.f32 %v642, %v706
        %v723 = vld [vmem:[%s2] sm:$0x3]
        %v725 = vlaneseq
        %v726 = vshrl.u32 %v725, 7
        %v727 = vsub.s32 0, %v726
        %v728 = vrot.slane %v723, %v727
        %v729 = vlaneseq
        %v730 = vshrl.u32 %v729, 7
        %v731 = vsub.s32 1, %v730
        %v732 = vrot.slane %v723, %v731
        %v735 = vmul.f32 %v707, %v728
        %v736 = vmul.f32 %v708, %v732
        %v737 = vmul.f32 %v709, %v728
        %v738 = vmul.f32 %v710, %v732
        %v739 = vmul.f32 %v711, %v728
        %v740 = vmul.f32 %v712, %v732
        %v741 = vmul.f32 %v713, %v728
        %v742 = vmul.f32 %v714, %v732
        %v743 = vmul.f32 %v715, %v728
        %v744 = vmul.f32 %v716, %v732
        %v745 = vmul.f32 %v717, %v728
        %v746 = vmul.f32 %v718, %v732
        %v747 = vmul.f32 %v719, %v728
        %v748 = vmul.f32 %v720, %v732
        %v749 = vmul.f32 %v721, %v728
        %v750 = vmul.f32 %v722, %v732
        %v751 = vld [vmem:[%s3] sm:$0x3]
        %v753 = vlaneseq
        %v754 = vshrl.u32 %v753, 7
        %v755 = vsub.s32 0, %v754
        %v756 = vrot.slane %v751, %v755
        %v757 = vlaneseq
        %v758 = vshrl.u32 %v757, 7
        %v759 = vsub.s32 1, %v758
        %v760 = vrot.slane %v751, %v759
        %v763 = vadd.f32 %v735, %v756
        %v764 = vadd.f32 %v736, %v760
        %v765 = vadd.f32 %v737, %v756
        %v766 = vadd.f32 %v738, %v760
        %v767 = vadd.f32 %v739, %v756
        %v768 = vadd.f32 %v740, %v760
        %v769 = vadd.f32 %v741, %v756
        %v770 = vadd.f32 %v742, %v760
        %v771 = vadd.f32 %v743, %v756
        %v772 = vadd.f32 %v744, %v760
        %v773 = vadd.f32 %v745, %v756
        %v774 = vadd.f32 %v746, %v760
        %v775 = vadd.f32 %v747, %v756
        %v776 = vadd.f32 %v748, %v760
        %v777 = vadd.f32 %v749, %v756
        %v778 = vadd.f32 %v750, %v760
        %v779 = vld [vmem:[#allocation5] sm:$0xff]
        %v780 = vld [vmem:[#allocation5 + $0x8] sm:$0xff]
        %v781 = vld [vmem:[#allocation5 + $0x10] sm:$0xff]
        %v782 = vld [vmem:[#allocation5 + $0x18] sm:$0xff]
        %v783 = vld [vmem:[#allocation5 + $0x20] sm:$0xff]
        %v784 = vld [vmem:[#allocation5 + $0x28] sm:$0xff]
        %v785 = vld [vmem:[#allocation5 + $0x30] sm:$0xff]
        %v786 = vld [vmem:[#allocation5 + $0x38] sm:$0xff]
        %v787 = vld [vmem:[#allocation5 + $0x40] sm:$0xff]
        %v788 = vld [vmem:[#allocation5 + $0x48] sm:$0xff]
        %v789 = vld [vmem:[#allocation5 + $0x50] sm:$0xff]
        %v790 = vld [vmem:[#allocation5 + $0x58] sm:$0xff]
        %v791 = vld [vmem:[#allocation5 + $0x60] sm:$0xff]
        %v792 = vld [vmem:[#allocation5 + $0x68] sm:$0xff]
        %v793 = vld [vmem:[#allocation5 + $0x70] sm:$0xff]
        %v794 = vld [vmem:[#allocation5 + $0x78] sm:$0xff]
        %v795 = vld [vmem:[#allocation5 + $0x80] sm:$0xff]
        %v796 = vld [vmem:[#allocation5 + $0x88] sm:$0xff]
        %v797 = vld [vmem:[#allocation5 + $0x90] sm:$0xff]
        %v798 = vld [vmem:[#allocation5 + $0x98] sm:$0xff]
        %v799 = vld [vmem:[#allocation5 + $0xa0] sm:$0xff]
        %v800 = vld [vmem:[#allocation5 + $0xa8] sm:$0xff]
        %v801 = vld [vmem:[#allocation5 + $0xb0] sm:$0xff]
        %v802 = vld [vmem:[#allocation5 + $0xb8] sm:$0xff]
        %v803 = vld [vmem:[#allocation5 + $0xc0] sm:$0xff]
        %v804 = vld [vmem:[#allocation5 + $0xc8] sm:$0xff]
        %v805 = vld [vmem:[#allocation5 + $0xd0] sm:$0xff]
        %v806 = vld [vmem:[#allocation5 + $0xd8] sm:$0xff]
        %v807 = vld [vmem:[#allocation5 + $0xe0] sm:$0xff]
        %v808 = vld [vmem:[#allocation5 + $0xe8] sm:$0xff]
        %v809 = vld [vmem:[#allocation5 + $0xf0] sm:$0xff]
        %v810 = vld [vmem:[#allocation5 + $0xf8] sm:$0xff]
        %v811 = vld [vmem:[#allocation5 + $0x100] sm:$0xff]
        %v812 = vld [vmem:[#allocation5 + $0x108] sm:$0xff]
        %v813 = vld [vmem:[#allocation5 + $0x110] sm:$0xff]
        %v814 = vld [vmem:[#allocation5 + $0x118] sm:$0xff]
        %v815 = vld [vmem:[#allocation5 + $0x120] sm:$0xff]
        %v816 = vld [vmem:[#allocation5 + $0x128] sm:$0xff]
        %v817 = vld [vmem:[#allocation5 + $0x130] sm:$0xff]
        %v818 = vld [vmem:[#allocation5 + $0x138] sm:$0xff]
        %v819 = vld [vmem:[#allocation5 + $0x140] sm:$0xff]
        %v820 = vld [vmem:[#allocation5 + $0x148] sm:$0xff]
        %v821 = vld [vmem:[#allocation5 + $0x150] sm:$0xff]
        %v822 = vld [vmem:[#allocation5 + $0x158] sm:$0xff]
        %v823 = vld [vmem:[#allocation5 + $0x160] sm:$0xff]
        %v824 = vld [vmem:[#allocation5 + $0x168] sm:$0xff]
        %v825 = vld [vmem:[#allocation5 + $0x170] sm:$0xff]
        %v826 = vld [vmem:[#allocation5 + $0x178] sm:$0xff]
        %v827 = vld [vmem:[#allocation5 + $0x180] sm:$0xff]
        %v828 = vld [vmem:[#allocation5 + $0x188] sm:$0xff]
        %v829 = vld [vmem:[#allocation5 + $0x190] sm:$0xff]
        %v830 = vld [vmem:[#allocation5 + $0x198] sm:$0xff]
        %v831 = vld [vmem:[#allocation5 + $0x1a0] sm:$0xff]
        %v832 = vld [vmem:[#allocation5 + $0x1a8] sm:$0xff]
        %v833 = vld [vmem:[#allocation5 + $0x1b0] sm:$0xff]
        %v834 = vld [vmem:[#allocation5 + $0x1b8] sm:$0xff]
        %v835 = vld [vmem:[#allocation5 + $0x1c0] sm:$0xff]
        %v836 = vld [vmem:[#allocation5 + $0x1c8] sm:$0xff]
        %v837 = vld [vmem:[#allocation5 + $0x1d0] sm:$0xff]
        %v838 = vld [vmem:[#allocation5 + $0x1d8] sm:$0xff]
        %v839 = vld [vmem:[#allocation5 + $0x1e0] sm:$0xff]
        %v840 = vld [vmem:[#allocation5 + $0x1e8] sm:$0xff]
        %v841 = vld [vmem:[#allocation5 + $0x1f0] sm:$0xff]
        %v842 = vld [vmem:[#allocation5 + $0x1f8] sm:$0xff]
        %v843 = vld [vmem:[#allocation7] sm:$0xff]
        %v844 = vld [vmem:[#allocation7 + $0x8] sm:$0xff]
        %v845 = vld [vmem:[#allocation7 + $0x10] sm:$0xff]
        %v846 = vld [vmem:[#allocation7 + $0x18] sm:$0xff]
        %v847 = vld [vmem:[#allocation7 + $0x20] sm:$0xff]
        %v848 = vld [vmem:[#allocation7 + $0x28] sm:$0xff]
        %v849 = vld [vmem:[#allocation7 + $0x30] sm:$0xff]
        %v850 = vld [vmem:[#allocation7 + $0x38] sm:$0xff]
        %v851 = vld [vmem:[#allocation7 + $0x40] sm:$0xff]
        %v852 = vld [vmem:[#allocation7 + $0x48] sm:$0xff]
        %v853 = vld [vmem:[#allocation7 + $0x50] sm:$0xff]
        %v854 = vld [vmem:[#allocation7 + $0x58] sm:$0xff]
        %v855 = vld [vmem:[#allocation7 + $0x60] sm:$0xff]
        %v856 = vld [vmem:[#allocation7 + $0x68] sm:$0xff]
        %v857 = vld [vmem:[#allocation7 + $0x70] sm:$0xff]
        %v858 = vld [vmem:[#allocation7 + $0x78] sm:$0xff]
        %v859 = vld [vmem:[#allocation7 + $0x80] sm:$0xff]
        %v860 = vld [vmem:[#allocation7 + $0x88] sm:$0xff]
        %v861 = vld [vmem:[#allocation7 + $0x90] sm:$0xff]
        %v862 = vld [vmem:[#allocation7 + $0x98] sm:$0xff]
        %v863 = vld [vmem:[#allocation7 + $0xa0] sm:$0xff]
        %v864 = vld [vmem:[#allocation7 + $0xa8] sm:$0xff]
        %v865 = vld [vmem:[#allocation7 + $0xb0] sm:$0xff]
        %v866 = vld [vmem:[#allocation7 + $0xb8] sm:$0xff]
        %v867 = vld [vmem:[#allocation7 + $0xc0] sm:$0xff]
        %v868 = vld [vmem:[#allocation7 + $0xc8] sm:$0xff]
        %v869 = vld [vmem:[#allocation7 + $0xd0] sm:$0xff]
        %v870 = vld [vmem:[#allocation7 + $0xd8] sm:$0xff]
        %v871 = vld [vmem:[#allocation7 + $0xe0] sm:$0xff]
        %v872 = vld [vmem:[#allocation7 + $0xe8] sm:$0xff]
        %v873 = vld [vmem:[#allocation7 + $0xf0] sm:$0xff]
        %v874 = vld [vmem:[#allocation7 + $0xf8] sm:$0xff]
        %v875 = vld [vmem:[#allocation7 + $0x100] sm:$0xff]
        %v876 = vld [vmem:[#allocation7 + $0x108] sm:$0xff]
        %v877 = vld [vmem:[#allocation7 + $0x110] sm:$0xff]
        %v878 = vld [vmem:[#allocation7 + $0x118] sm:$0xff]
        %v879 = vld [vmem:[#allocation7 + $0x120] sm:$0xff]
        %v880 = vld [vmem:[#allocation7 + $0x128] sm:$0xff]
        %v881 = vld [vmem:[#allocation7 + $0x130] sm:$0xff]
        %v882 = vld [vmem:[#allocation7 + $0x138] sm:$0xff]
        %v883 = vld [vmem:[#allocation7 + $0x140] sm:$0xff]
        %v884 = vld [vmem:[#allocation7 + $0x148] sm:$0xff]
        %v885 = vld [vmem:[#allocation7 + $0x150] sm:$0xff]
        %v886 = vld [vmem:[#allocation7 + $0x158] sm:$0xff]
        %v887 = vld [vmem:[#allocation7 + $0x160] sm:$0xff]
        %v888 = vld [vmem:[#allocation7 + $0x168] sm:$0xff]
        %v889 = vld [vmem:[#allocation7 + $0x170] sm:$0xff]
        %v890 = vld [vmem:[#allocation7 + $0x178] sm:$0xff]
        %v891 = vld [vmem:[#allocation7 + $0x180] sm:$0xff]
        %v892 = vld [vmem:[#allocation7 + $0x188] sm:$0xff]
        %v893 = vld [vmem:[#allocation7 + $0x190] sm:$0xff]
        %v894 = vld [vmem:[#allocation7 + $0x198] sm:$0xff]
        %v895 = vld [vmem:[#allocation7 + $0x1a0] sm:$0xff]
        %v896 = vld [vmem:[#allocation7 + $0x1a8] sm:$0xff]
        %v897 = vld [vmem:[#allocation7 + $0x1b0] sm:$0xff]
        %v898 = vld [vmem:[#allocation7 + $0x1b8] sm:$0xff]
        %v899 = vld [vmem:[#allocation7 + $0x1c0] sm:$0xff]
        %v900 = vld [vmem:[#allocation7 + $0x1c8] sm:$0xff]
        %v901 = vld [vmem:[#allocation7 + $0x1d0] sm:$0xff]
        %v902 = vld [vmem:[#allocation7 + $0x1d8] sm:$0xff]
        %v903 = vld [vmem:[#allocation7 + $0x1e0] sm:$0xff]
        %v904 = vld [vmem:[#allocation7 + $0x1e8] sm:$0xff]
        %v905 = vld [vmem:[#allocation7 + $0x1f0] sm:$0xff]
        %v906 = vld [vmem:[#allocation7 + $0x1f8] sm:$0xff]
        %v907 = vpack.c.bf16 %v765, %v763
        %v908 = vpack.c.bf16 %v766, %v764
        %v909 = vpack.c.bf16 %v769, %v767
        %v910 = vpack.c.bf16 %v770, %v768
        %v911 = vpack.c.bf16 %v773, %v771
        %v912 = vpack.c.bf16 %v774, %v772
        %v913 = vpack.c.bf16 %v777, %v775
        %v914 = vpack.c.bf16 %v778, %v776
        %v915 = vld [vmem:[%s6] sm:$0xf]
        %v917 = vlaneseq
        %v918 = vshrl.u32 %v917, 7
        %v919 = vsub.s32 0, %v918
        %v920 = vrot.slane %v915, %v919
        %v921 = vlaneseq
        %v922 = vshrl.u32 %v921, 7
        %v923 = vsub.s32 1, %v922
        %v924 = vrot.slane %v915, %v923
        %v925 = vlaneseq
        %v926 = vshrl.u32 %v925, 7
        %v927 = vsub.s32 2, %v926
        %v928 = vrot.slane %v915, %v927
        %v929 = vlaneseq
        %v930 = vshrl.u32 %v929, 7
        %v931 = vsub.s32 3, %v930
        %v932 = vrot.slane %v915, %v931
        %v1001 = vunpack.c.l.b16 %v779
        %v1002 = vunpack.c.h.b16 %v779
        %v1003 = vunpack.c.l.b16 %v780
        %v1004 = vunpack.c.h.b16 %v780
        %v1005 = vunpack.c.l.b16 %v781
        %v1006 = vunpack.c.h.b16 %v781
        %v1007 = vunpack.c.l.b16 %v782
        %v1008 = vunpack.c.h.b16 %v782
        %v1009 = vunpack.c.l.b16 %v783
        %v1010 = vunpack.c.h.b16 %v783
        %v1011 = vunpack.c.l.b16 %v784
        %v1012 = vunpack.c.h.b16 %v784
        %v1013 = vunpack.c.l.b16 %v785
        %v1014 = vunpack.c.h.b16 %v785
        %v1015 = vunpack.c.l.b16 %v786
        %v1016 = vunpack.c.h.b16 %v786
        %v1017 = vunpack.c.l.b16 %v787
        %v1018 = vunpack.c.h.b16 %v787
        %v1019 = vunpack.c.l.b16 %v788
        %v1020 = vunpack.c.h.b16 %v788
        %v1021 = vunpack.c.l.b16 %v789
        %v1022 = vunpack.c.h.b16 %v789
        %v1023 = vunpack.c.l.b16 %v790
        %v1024 = vunpack.c.h.b16 %v790
        %v1025 = vunpack.c.l.b16 %v791
        %v1026 = vunpack.c.h.b16 %v791
        %v1027 = vunpack.c.l.b16 %v792
        %v1028 = vunpack.c.h.b16 %v792
        %v1029 = vunpack.c.l.b16 %v793
        %v1030 = vunpack.c.h.b16 %v793
        %v1031 = vunpack.c.l.b16 %v794
        %v1032 = vunpack.c.h.b16 %v794
        %v1033 = vunpack.c.l.b16 %v795
        %v1034 = vunpack.c.h.b16 %v795
        %v1035 = vunpack.c.l.b16 %v796
        %v1036 = vunpack.c.h.b16 %v796
        %v1037 = vunpack.c.l.b16 %v797
        %v1038 = vunpack.c.h.b16 %v797
        %v1039 = vunpack.c.l.b16 %v798
        %v1040 = vunpack.c.h.b16 %v798
        %v1041 = vunpack.c.l.b16 %v799
        %v1042 = vunpack.c.h.b16 %v799
        %v1043 = vunpack.c.l.b16 %v800
        %v1044 = vunpack.c.h.b16 %v800
        %v1045 = vunpack.c.l.b16 %v801
        %v1046 = vunpack.c.h.b16 %v801
        %v1047 = vunpack.c.l.b16 %v802
        %v1048 = vunpack.c.h.b16 %v802
        %v1049 = vunpack.c.l.b16 %v803
        %v1050 = vunpack.c.h.b16 %v803
        %v1051 = vunpack.c.l.b16 %v804
        %v1052 = vunpack.c.h.b16 %v804
        %v1053 = vunpack.c.l.b16 %v805
        %v1054 = vunpack.c.h.b16 %v805
        %v1055 = vunpack.c.l.b16 %v806
        %v1056 = vunpack.c.h.b16 %v806
        %v1057 = vunpack.c.l.b16 %v807
        %v1058 = vunpack.c.h.b16 %v807
        %v1059 = vunpack.c.l.b16 %v808
        %v1060 = vunpack.c.h.b16 %v808
        %v1061 = vunpack.c.l.b16 %v809
        %v1062 = vunpack.c.h.b16 %v809
        %v1063 = vunpack.c.l.b16 %v810
        %v1064 = vunpack.c.h.b16 %v810
        %v1065 = vunpack.c.l.b16 %v811
        %v1066 = vunpack.c.h.b16 %v811
        %v1067 = vunpack.c.l.b16 %v812
        %v1068 = vunpack.c.h.b16 %v812
        %v1069 = vunpack.c.l.b16 %v813
        %v1070 = vunpack.c.h.b16 %v813
        %v1071 = vunpack.c.l.b16 %v814
        %v1072 = vunpack.c.h.b16 %v814
        %v1073 = vunpack.c.l.b16 %v815
        %v1074 = vunpack.c.h.b16 %v815
        %v1075 = vunpack.c.l.b16 %v816
        %v1076 = vunpack.c.h.b16 %v816
        %v1077 = vunpack.c.l.b16 %v817
        %v1078 = vunpack.c.h.b16 %v817
        %v1079 = vunpack.c.l.b16 %v818
        %v1080 = vunpack.c.h.b16 %v818
        %v1081 = vunpack.c.l.b16 %v819
        %v1082 = vunpack.c.h.b16 %v819
        %v1083 = vunpack.c.l.b16 %v820
        %v1084 = vunpack.c.h.b16 %v820
        %v1085 = vunpack.c.l.b16 %v821
        %v1086 = vunpack.c.h.b16 %v821
        %v1087 = vunpack.c.l.b16 %v822
        %v1088 = vunpack.c.h.b16 %v822
        %v1089 = vunpack.c.l.b16 %v823
        %v1090 = vunpack.c.h.b16 %v823
        %v1091 = vunpack.c.l.b16 %v824
        %v1092 = vunpack.c.h.b16 %v824
        %v1093 = vunpack.c.l.b16 %v825
        %v1094 = vunpack.c.h.b16 %v825
        %v1095 = vunpack.c.l.b16 %v826
        %v1096 = vunpack.c.h.b16 %v826
        %v1097 = vunpack.c.l.b16 %v827
        %v1098 = vunpack.c.h.b16 %v827
        %v1099 = vunpack.c.l.b16 %v828
        %v1100 = vunpack.c.h.b16 %v828
        %v1101 = vunpack.c.l.b16 %v829
        %v1102 = vunpack.c.h.b16 %v829
        %v1103 = vunpack.c.l.b16 %v830
        %v1104 = vunpack.c.h.b16 %v830
        %v1105 = vunpack.c.l.b16 %v831
        %v1106 = vunpack.c.h.b16 %v831
        %v1107 = vunpack.c.l.b16 %v832
        %v1108 = vunpack.c.h.b16 %v832
        %v1109 = vunpack.c.l.b16 %v833
        %v1110 = vunpack.c.h.b16 %v833
        %v1111 = vunpack.c.l.b16 %v834
        %v1112 = vunpack.c.h.b16 %v834
        %v1113 = vunpack.c.l.b16 %v835
        %v1114 = vunpack.c.h.b16 %v835
        %v1115 = vunpack.c.l.b16 %v836
        %v1116 = vunpack.c.h.b16 %v836
        %v1117 = vunpack.c.l.b16 %v837
        %v1118 = vunpack.c.h.b16 %v837
        %v1119 = vunpack.c.l.b16 %v838
        %v1120 = vunpack.c.h.b16 %v838
        %v1121 = vunpack.c.l.b16 %v839
        %v1122 = vunpack.c.h.b16 %v839
        %v1123 = vunpack.c.l.b16 %v840
        %v1124 = vunpack.c.h.b16 %v840
        %v1125 = vunpack.c.l.b16 %v841
        %v1126 = vunpack.c.h.b16 %v841
        %v1127 = vunpack.c.l.b16 %v842
        %v1128 = vunpack.c.h.b16 %v842
        %v1129 = vpack.c.b16 %v1005, %v1001
        %v1130 = vpack.c.b16 %v1006, %v1002
        %v1131 = vpack.c.b16 %v1007, %v1003
        %v1132 = vpack.c.b16 %v1008, %v1004
        %v1133 = vpack.c.b16 %v1013, %v1009
        %v1134 = vpack.c.b16 %v1014, %v1010
        %v1135 = vpack.c.b16 %v1015, %v1011
        %v1136 = vpack.c.b16 %v1016, %v1012
        %v1137 = vpack.c.b16 %v1021, %v1017
        %v1138 = vpack.c.b16 %v1022, %v1018
        %v1139 = vpack.c.b16 %v1023, %v1019
        %v1140 = vpack.c.b16 %v1024, %v1020
        %v1141 = vpack.c.b16 %v1029, %v1025
        %v1142 = vpack.c.b16 %v1030, %v1026
        %v1143 = vpack.c.b16 %v1031, %v1027
        %v1144 = vpack.c.b16 %v1032, %v1028
        %v1145 = vpack.c.b16 %v1037, %v1033
        %v1146 = vpack.c.b16 %v1038, %v1034
        %v1147 = vpack.c.b16 %v1039, %v1035
        %v1148 = vpack.c.b16 %v1040, %v1036
        %v1149 = vpack.c.b16 %v1045, %v1041
        %v1150 = vpack.c.b16 %v1046, %v1042
        %v1151 = vpack.c.b16 %v1047, %v1043
        %v1152 = vpack.c.b16 %v1048, %v1044
        %v1153 = vpack.c.b16 %v1053, %v1049
        %v1154 = vpack.c.b16 %v1054, %v1050
        %v1155 = vpack.c.b16 %v1055, %v1051
        %v1156 = vpack.c.b16 %v1056, %v1052
        %v1157 = vpack.c.b16 %v1061, %v1057
        %v1158 = vpack.c.b16 %v1062, %v1058
        %v1159 = vpack.c.b16 %v1063, %v1059
        %v1160 = vpack.c.b16 %v1064, %v1060
        %v1161 = vpack.c.b16 %v1069, %v1065
        %v1162 = vpack.c.b16 %v1070, %v1066
        %v1163 = vpack.c.b16 %v1071, %v1067
        %v1164 = vpack.c.b16 %v1072, %v1068
        %v1165 = vpack.c.b16 %v1077, %v1073
        %v1166 = vpack.c.b16 %v1078, %v1074
        %v1167 = vpack.c.b16 %v1079, %v1075
        %v1168 = vpack.c.b16 %v1080, %v1076
        %v1169 = vpack.c.b16 %v1085, %v1081
        %v1170 = vpack.c.b16 %v1086, %v1082
        %v1171 = vpack.c.b16 %v1087, %v1083
        %v1172 = vpack.c.b16 %v1088, %v1084
        %v1173 = vpack.c.b16 %v1093, %v1089
        %v1174 = vpack.c.b16 %v1094, %v1090
        %v1175 = vpack.c.b16 %v1095, %v1091
        %v1176 = vpack.c.b16 %v1096, %v1092
        %v1177 = vpack.c.b16 %v1101, %v1097
        %v1178 = vpack.c.b16 %v1102, %v1098
        %v1179 = vpack.c.b16 %v1103, %v1099
        %v1180 = vpack.c.b16 %v1104, %v1100
        %v1181 = vpack.c.b16 %v1109, %v1105
        %v1182 = vpack.c.b16 %v1110, %v1106
        %v1183 = vpack.c.b16 %v1111, %v1107
        %v1184 = vpack.c.b16 %v1112, %v1108
        %v1185 = vpack.c.b16 %v1117, %v1113
        %v1186 = vpack.c.b16 %v1118, %v1114
        %v1187 = vpack.c.b16 %v1119, %v1115
        %v1188 = vpack.c.b16 %v1120, %v1116
        %v1189 = vpack.c.b16 %v1125, %v1121
        %v1190 = vpack.c.b16 %v1126, %v1122
        %v1191 = vpack.c.b16 %v1127, %v1123
        %v1192 = vpack.c.b16 %v1128, %v1124
        %1257 = vmatprep.subr.bf16.mxu0 %v1130
        %1258 = vmatpush1.bf16.msra.mxu0 %v1129
        %1259 = vmatprep.subr.bf16.mxu0 %v1134
        %1260 = vmatpush1.bf16.msra.mxu0 %v1133
        %1261 = vmatprep.subr.bf16.mxu0 %v1138
        %1262 = vmatpush1.bf16.msra.mxu0 %v1137
        %1263 = vmatprep.subr.bf16.mxu0 %v1142
        %1264 = vmatpush1.bf16.msra.mxu0 %v1141
        %1265 = vmatprep.subr.bf16.mxu0 %v1146
        %1266 = vmatpush1.bf16.msra.mxu0 %v1145
        %1267 = vmatprep.subr.bf16.mxu0 %v1150
        %1268 = vmatpush1.bf16.msra.mxu0 %v1149
        %1269 = vmatprep.subr.bf16.mxu0 %v1154
        %1270 = vmatpush1.bf16.msra.mxu0 %v1153
        %1271 = vmatprep.subr.bf16.mxu0 %v1158
        %1272 = vmatpush1.bf16.msra.mxu0 %v1157
        %1273 = vmatprep.subr.bf16.mxu0 %v1162
        %1274 = vmatpush1.bf16.msra.mxu0 %v1161
        %1275 = vmatprep.subr.bf16.mxu0 %v1166
        %1276 = vmatpush1.bf16.msra.mxu0 %v1165
        %1277 = vmatprep.subr.bf16.mxu0 %v1170
        %1278 = vmatpush1.bf16.msra.mxu0 %v1169
        %1279 = vmatprep.subr.bf16.mxu0 %v1174
        %1280 = vmatpush1.bf16.msra.mxu0 %v1173
        %1281 = vmatprep.subr.bf16.mxu0 %v1178
        %1282 = vmatpush1.bf16.msra.mxu0 %v1177
        %1283 = vmatprep.subr.bf16.mxu0 %v1182
        %1284 = vmatpush1.bf16.msra.mxu0 %v1181
        %1285 = vmatprep.subr.bf16.mxu0 %v1186
        %1286 = vmatpush1.bf16.msra.mxu0 %v1185
        %1287 = vmatprep.subr.bf16.mxu0 %v1190
        %1288 = vmatpush1.bf16.msra.mxu0 %v1189
        %1289 = vmatprep.mubr.bf16.mxu0 %v908
        %1290 = vmatmul.mubr.bf16.gmra.mrb[0].mxu0 %v907
        %v1291 = vpop.f32.mrb[0].mxu0
        %v1292 = vadd.f32 %v920, %v1291
        %v1293 = vpop.f32.mrb[0].mxu0
        %v1294 = vadd.f32 %v924, %v1293
        %v1295 = vpop.f32.mrb[0].mxu0
        %v1296 = vadd.f32 %v920, %v1295
        %v1297 = vpop.f32.mrb[0].mxu0
        %v1298 = vadd.f32 %v924, %v1297
        %1299 = vmatprep.mubr.bf16.mxu0 %v910
        %1300 = vmatmul.mubr.bf16.gmra.mrb[0].mxu0 %v909
        %v1301 = vpop.f32.mrb[0].mxu0
        %v1302 = vadd.f32 %v920, %v1301
        %v1303 = vpop.f32.mrb[0].mxu0
        %v1304 = vadd.f32 %v924, %v1303
        %v1305 = vpop.f32.mrb[0].mxu0
        %v1306 = vadd.f32 %v920, %v1305
        %v1307 = vpop.f32.mrb[0].mxu0
        %v1308 = vadd.f32 %v924, %v1307
        %1309 = vmatprep.mubr.bf16.mxu0 %v912
        %1310 = vmatmul.mubr.bf16.gmra.mrb[0].mxu0 %v911
        %v1311 = vpop.f32.mrb[0].mxu0
        %v1312 = vadd.f32 %v920, %v1311
        %v1313 = vpop.f32.mrb[0].mxu0
        %v1314 = vadd.f32 %v924, %v1313
        %v1315 = vpop.f32.mrb[0].mxu0
        %v1316 = vadd.f32 %v920, %v1315
        %v1317 = vpop.f32.mrb[0].mxu0
        %v1318 = vadd.f32 %v924, %v1317
        %1319 = vmatprep.mubr.bf16.mxu0 %v914
        %1320 = vmatmul.mubr.bf16.gmra.mrb[0].mxu0 %v913
        %v1321 = vpop.f32.mrb[0].mxu0
        %v1322 = vadd.f32 %v920, %v1321
        %v1323 = vpop.f32.mrb[0].mxu0
        %v1324 = vadd.f32 %v924, %v1323
        %v1325 = vpop.f32.mrb[0].mxu0
        %v1326 = vadd.f32 %v920, %v1325
        %v1327 = vpop.f32.mrb[0].mxu0
        %v1328 = vadd.f32 %v924, %v1327
        %1329 = vdwg.mxu0
        %1330 = vmatprep.subr.bf16.mxu0 %v1132
        %1331 = vmatpush1.bf16.msra.mxu0 %v1131
        %1332 = vmatprep.subr.bf16.mxu0 %v1136
        %1333 = vmatpush1.bf16.msra.mxu0 %v1135
        %1334 = vmatprep.subr.bf16.mxu0 %v1140
        %1335 = vmatpush1.bf16.msra.mxu0 %v1139
        %1336 = vmatprep.subr.bf16.mxu0 %v1144
        %1337 = vmatpush1.bf16.msra.mxu0 %v1143
        %1338 = vmatprep.subr.bf16.mxu0 %v1148
        %1339 = vmatpush1.bf16.msra.mxu0 %v1147
        %1340 = vmatprep.subr.bf16.mxu0 %v1152
        %1341 = vmatpush1.bf16.msra.mxu0 %v1151
        %1342 = vmatprep.subr.bf16.mxu0 %v1156
        %1343 = vmatpush1.bf16.msra.mxu0 %v1155
        %1344 = vmatprep.subr.bf16.mxu0 %v1160
        %1345 = vmatpush1.bf16.msra.mxu0 %v1159
        %1346 = vmatprep.subr.bf16.mxu0 %v1164
        %1347 = vmatpush1.bf16.msra.mxu0 %v1163
        %1348 = vmatprep.subr.bf16.mxu0 %v1168
        %1349 = vmatpush1.bf16.msra.mxu0 %v1167
        %1350 = vmatprep.subr.bf16.mxu0 %v1172
        %1351 = vmatpush1.bf16.msra.mxu0 %v1171
        %1352 = vmatprep.subr.bf16.mxu0 %v1176
        %1353 = vmatpush1.bf16.msra.mxu0 %v1175
        %1354 = vmatprep.subr.bf16.mxu0 %v1180
        %1355 = vmatpush1.bf16.msra.mxu0 %v1179
        %1356 = vmatprep.subr.bf16.mxu0 %v1184
        %1357 = vmatpush1.bf16.msra.mxu0 %v1183
        %1358 = vmatprep.subr.bf16.mxu0 %v1188
        %1359 = vmatpush1.bf16.msra.mxu0 %v1187
        %1360 = vmatprep.subr.bf16.mxu0 %v1192
        %1361 = vmatpush1.bf16.msra.mxu0 %v1191
        %1362 = vmatprep.mubr.bf16.mxu0 %v908
        %1363 = vmatmul.mubr.bf16.gmra.mrb[0].mxu0 %v907
        %v1364 = vpop.f32.mrb[0].mxu0
        %v1365 = vadd.f32 %v928, %v1364
        %v1366 = vpop.f32.mrb[0].mxu0
        %v1367 = vadd.f32 %v932, %v1366
        %v1368 = vpop.f32.mrb[0].mxu0
        %v1369 = vadd.f32 %v928, %v1368
        %v1370 = vpop.f32.mrb[0].mxu0
        %v1371 = vadd.f32 %v932, %v1370
        %1372 = vmatprep.mubr.bf16.mxu0 %v910
        %1373 = vmatmul.mubr.bf16.gmra.mrb[0].mxu0 %v909
        %v1374 = vpop.f32.mrb[0].mxu0
        %v1375 = vadd.f32 %v928, %v1374
        %v1376 = vpop.f32.mrb[0].mxu0
        %v1377 = vadd.f32 %v932, %v1376
        %v1378 = vpop.f32.mrb[0].mxu0
        %v1379 = vadd.f32 %v928, %v1378
        %v1380 = vpop.f32.mrb[0].mxu0
        %v1381 = vadd.f32 %v932, %v1380
        %1382 = vmatprep.mubr.bf16.mxu0 %v912
        %1383 = vmatmul.mubr.bf16.gmra.mrb[0].mxu0 %v911
        %v1384 = vpop.f32.mrb[0].mxu0
        %v1385 = vadd.f32 %v928, %v1384
        %v1386 = vpop.f32.mrb[0].mxu0
        %v1387 = vadd.f32 %v932, %v1386
        %v1388 = vpop.f32.mrb[0].mxu0
        %v1389 = vadd.f32 %v928, %v1388
        %v1390 = vpop.f32.mrb[0].mxu0
        %v1391 = vadd.f32 %v932, %v1390
        %1392 = vmatprep.mubr.bf16.mxu0 %v914
        %1393 = vmatmul.mubr.bf16.gmra.mrb[0].mxu0 %v913
        %v1394 = vpop.f32.mrb[0].mxu0
        %v1395 = vadd.f32 %v928, %v1394
        %v1396 = vpop.f32.mrb[0].mxu0
        %v1397 = vadd.f32 %v932, %v1396
        %v1398 = vpop.f32.mrb[0].mxu0
        %v1399 = vadd.f32 %v928, %v1398
        %v1400 = vpop.f32.mrb[0].mxu0
        %v1401 = vadd.f32 %v932, %v1400
        %1402 = vdwg.mxu0
        %v1403 = vld [vmem:[%s7] sm:$0xf]
        %v1405 = vlaneseq
        %v1406 = vshrl.u32 %v1405, 7
        %v1407 = vsub.s32 0, %v1406
        %v1408 = vrot.slane %v1403, %v1407
        %v1409 = vlaneseq
        %v1410 = vshrl.u32 %v1409, 7
        %v1411 = vsub.s32 1, %v1410
        %v1412 = vrot.slane %v1403, %v1411
        %v1413 = vlaneseq
        %v1414 = vshrl.u32 %v1413, 7
        %v1415 = vsub.s32 2, %v1414
        %v1416 = vrot.slane %v1403, %v1415
        %v1417 = vlaneseq
        %v1418 = vshrl.u32 %v1417, 7
        %v1419 = vsub.s32 3, %v1418
        %v1420 = vrot.slane %v1403, %v1419
        %v1489 = vunpack.c.l.b16 %v843
        %v1490 = vunpack.c.h.b16 %v843
        %v1491 = vunpack.c.l.b16 %v844
        %v1492 = vunpack.c.h.b16 %v844
        %v1493 = vunpack.c.l.b16 %v845
        %v1494 = vunpack.c.h.b16 %v845
        %v1495 = vunpack.c.l.b16 %v846
        %v1496 = vunpack.c.h.b16 %v846
        %v1497 = vunpack.c.l.b16 %v847
        %v1498 = vunpack.c.h.b16 %v847
        %v1499 = vunpack.c.l.b16 %v848
        %v1500 = vunpack.c.h.b16 %v848
        %v1501 = vunpack.c.l.b16 %v849
        %v1502 = vunpack.c.h.b16 %v849
        %v1503 = vunpack.c.l.b16 %v850
        %v1504 = vunpack.c.h.b16 %v850
        %v1505 = vunpack.c.l.b16 %v851
        %v1506 = vunpack.c.h.b16 %v851
        %v1507 = vunpack.c.l.b16 %v852
        %v1508 = vunpack.c.h.b16 %v852
        %v1509 = vunpack.c.l.b16 %v853
        %v1510 = vunpack.c.h.b16 %v853
        %v1511 = vunpack.c.l.b16 %v854
        %v1512 = vunpack.c.h.b16 %v854
        %v1513 = vunpack.c.l.b16 %v855
        %v1514 = vunpack.c.h.b16 %v855
        %v1515 = vunpack.c.l.b16 %v856
        %v1516 = vunpack.c.h.b16 %v856
        %v1517 = vunpack.c.l.b16 %v857
        %v1518 = vunpack.c.h.b16 %v857
        %v1519 = vunpack.c.l.b16 %v858
        %v1520 = vunpack.c.h.b16 %v858
        %v1521 = vunpack.c.l.b16 %v859
        %v1522 = vunpack.c.h.b16 %v859
        %v1523 = vunpack.c.l.b16 %v860
        %v1524 = vunpack.c.h.b16 %v860
        %v1525 = vunpack.c.l.b16 %v861
        %v1526 = vunpack.c.h.b16 %v861
        %v1527 = vunpack.c.l.b16 %v862
        %v1528 = vunpack.c.h.b16 %v862
        %v1529 = vunpack.c.l.b16 %v863
        %v1530 = vunpack.c.h.b16 %v863
        %v1531 = vunpack.c.l.b16 %v864
        %v1532 = vunpack.c.h.b16 %v864
        %v1533 = vunpack.c.l.b16 %v865
        %v1534 = vunpack.c.h.b16 %v865
        %v1535 = vunpack.c.l.b16 %v866
        %v1536 = vunpack.c.h.b16 %v866
        %v1537 = vunpack.c.l.b16 %v867
        %v1538 = vunpack.c.h.b16 %v867
        %v1539 = vunpack.c.l.b16 %v868
        %v1540 = vunpack.c.h.b16 %v868
        %v1541 = vunpack.c.l.b16 %v869
        %v1542 = vunpack.c.h.b16 %v869
        %v1543 = vunpack.c.l.b16 %v870
        %v1544 = vunpack.c.h.b16 %v870
        %v1545 = vunpack.c.l.b16 %v871
        %v1546 = vunpack.c.h.b16 %v871
        %v1547 = vunpack.c.l.b16 %v872
        %v1548 = vunpack.c.h.b16 %v872
        %v1549 = vunpack.c.l.b16 %v873
        %v1550 = vunpack.c.h.b16 %v873
        %v1551 = vunpack.c.l.b16 %v874
        %v1552 = vunpack.c.h.b16 %v874
        %v1553 = vunpack.c.l.b16 %v875
        %v1554 = vunpack.c.h.b16 %v875
        %v1555 = vunpack.c.l.b16 %v876
        %v1556 = vunpack.c.h.b16 %v876
        %v1557 = vunpack.c.l.b16 %v877
        %v1558 = vunpack.c.h.b16 %v877
        %v1559 = vunpack.c.l.b16 %v878
        %v1560 = vunpack.c.h.b16 %v878
        %v1561 = vunpack.c.l.b16 %v879
        %v1562 = vunpack.c.h.b16 %v879
        %v1563 = vunpack.c.l.b16 %v880
        %v1564 = vunpack.c.h.b16 %v880
        %v1565 = vunpack.c.l.b16 %v881
        %v1566 = vunpack.c.h.b16 %v881
        %v1567 = vunpack.c.l.b16 %v882
        %v1568 = vunpack.c.h.b16 %v882
        %v1569 = vunpack.c.l.b16 %v883
        %v1570 = vunpack.c.h.b16 %v883
        %v1571 = vunpack.c.l.b16 %v884
        %v1572 = vunpack.c.h.b16 %v884
        %v1573 = vunpack.c.l.b16 %v885
        %v1574 = vunpack.c.h.b16 %v885
        %v1575 = vunpack.c.l.b16 %v886
        %v1576 = vunpack.c.h.b16 %v886
        %v1577 = vunpack.c.l.b16 %v887
        %v1578 = vunpack.c.h.b16 %v887
        %v1579 = vunpack.c.l.b16 %v888
        %v1580 = vunpack.c.h.b16 %v888
        %v1581 = vunpack.c.l.b16 %v889
        %v1582 = vunpack.c.h.b16 %v889
        %v1583 = vunpack.c.l.b16 %v890
        %v1584 = vunpack.c.h.b16 %v890
        %v1585 = vunpack.c.l.b16 %v891
        %v1586 = vunpack.c.h.b16 %v891
        %v1587 = vunpack.c.l.b16 %v892
        %v1588 = vunpack.c.h.b16 %v892
        %v1589 = vunpack.c.l.b16 %v893
        %v1590 = vunpack.c.h.b16 %v893
        %v1591 = vunpack.c.l.b16 %v894
        %v1592 = vunpack.c.h.b16 %v894
        %v1593 = vunpack.c.l.b16 %v895
        %v1594 = vunpack.c.h.b16 %v895
        %v1595 = vunpack.c.l.b16 %v896
        %v1596 = vunpack.c.h.b16 %v896
        %v1597 = vunpack.c.l.b16 %v897
        %v1598 = vunpack.c.h.b16 %v897
        %v1599 = vunpack.c.l.b16 %v898
        %v1600 = vunpack.c.h.b16 %v898
        %v1601 = vunpack.c.l.b16 %v899
        %v1602 = vunpack.c.h.b16 %v899
        %v1603 = vunpack.c.l.b16 %v900
        %v1604 = vunpack.c.h.b16 %v900
        %v1605 = vunpack.c.l.b16 %v901
        %v1606 = vunpack.c.h.b16 %v901
        %v1607 = vunpack.c.l.b16 %v902
        %v1608 = vunpack.c.h.b16 %v902
        %v1609 = vunpack.c.l.b16 %v903
        %v1610 = vunpack.c.h.b16 %v903
        %v1611 = vunpack.c.l.b16 %v904
        %v1612 = vunpack.c.h.b16 %v904
        %v1613 = vunpack.c.l.b16 %v905
        %v1614 = vunpack.c.h.b16 %v905
        %v1615 = vunpack.c.l.b16 %v906
        %v1616 = vunpack.c.h.b16 %v906
        %v1617 = vpack.c.b16 %v1493, %v1489
        %v1618 = vpack.c.b16 %v1494, %v1490
        %v1619 = vpack.c.b16 %v1495, %v1491
        %v1620 = vpack.c.b16 %v1496, %v1492
        %v1621 = vpack.c.b16 %v1501, %v1497
        %v1622 = vpack.c.b16 %v1502, %v1498
        %v1623 = vpack.c.b16 %v1503, %v1499
        %v1624 = vpack.c.b16 %v1504, %v1500
        %v1625 = vpack.c.b16 %v1509, %v1505
        %v1626 = vpack.c.b16 %v1510, %v1506
        %v1627 = vpack.c.b16 %v1511, %v1507
        %v1628 = vpack.c.b16 %v1512, %v1508
        %v1629 = vpack.c.b16 %v1517, %v1513
        %v1630 = vpack.c.b16 %v1518, %v1514
        %v1631 = vpack.c.b16 %v1519, %v1515
        %v1632 = vpack.c.b16 %v1520, %v1516
        %v1633 = vpack.c.b16 %v1525, %v1521
        %v1634 = vpack.c.b16 %v1526, %v1522
        %v1635 = vpack.c.b16 %v1527, %v1523
        %v1636 = vpack.c.b16 %v1528, %v1524
        %v1637 = vpack.c.b16 %v1533, %v1529
        %v1638 = vpack.c.b16 %v1534, %v1530
        %v1639 = vpack.c.b16 %v1535, %v1531
        %v1640 = vpack.c.b16 %v1536, %v1532
        %v1641 = vpack.c.b16 %v1541, %v1537
        %v1642 = vpack.c.b16 %v1542, %v1538
        %v1643 = vpack.c.b16 %v1543, %v1539
        %v1644 = vpack.c.b16 %v1544, %v1540
        %v1645 = vpack.c.b16 %v1549, %v1545
        %v1646 = vpack.c.b16 %v1550, %v1546
        %v1647 = vpack.c.b16 %v1551, %v1547
        %v1648 = vpack.c.b16 %v1552, %v1548
        %v1649 = vpack.c.b16 %v1557, %v1553
        %v1650 = vpack.c.b16 %v1558, %v1554
        %v1651 = vpack.c.b16 %v1559, %v1555
        %v1652 = vpack.c.b16 %v1560, %v1556
        %v1653 = vpack.c.b16 %v1565, %v1561
        %v1654 = vpack.c.b16 %v1566, %v1562
        %v1655 = vpack.c.b16 %v1567, %v1563
        %v1656 = vpack.c.b16 %v1568, %v1564
        %v1657 = vpack.c.b16 %v1573, %v1569
        %v1658 = vpack.c.b16 %v1574, %v1570
        %v1659 = vpack.c.b16 %v1575, %v1571
        %v1660 = vpack.c.b16 %v1576, %v1572
        %v1661 = vpack.c.b16 %v1581, %v1577
        %v1662 = vpack.c.b16 %v1582, %v1578
        %v1663 = vpack.c.b16 %v1583, %v1579
        %v1664 = vpack.c.b16 %v1584, %v1580
        %v1665 = vpack.c.b16 %v1589, %v1585
        %v1666 = vpack.c.b16 %v1590, %v1586
        %v1667 = vpack.c.b16 %v1591, %v1587
        %v1668 = vpack.c.b16 %v1592, %v1588
        %v1669 = vpack.c.b16 %v1597, %v1593
        %v1670 = vpack.c.b16 %v1598, %v1594
        %v1671 = vpack.c.b16 %v1599, %v1595
        %v1672 = vpack.c.b16 %v1600, %v1596
        %v1673 = vpack.c.b16 %v1605, %v1601
        %v1674 = vpack.c.b16 %v1606, %v1602
        %v1675 = vpack.c.b16 %v1607, %v1603
        %v1676 = vpack.c.b16 %v1608, %v1604
        %v1677 = vpack.c.b16 %v1613, %v1609
        %v1678 = vpack.c.b16 %v1614, %v1610
        %v1679 = vpack.c.b16 %v1615, %v1611
        %v1680 = vpack.c.b16 %v1616, %v1612
        %1745 = vmatprep.subr.bf16.mxu0 %v1618
        %1746 = vmatpush1.bf16.msra.mxu0 %v1617
        %1747 = vmatprep.subr.bf16.mxu0 %v1622
        %1748 = vmatpush1.bf16.msra.mxu0 %v1621
        %1749 = vmatprep.subr.bf16.mxu0 %v1626
        %1750 = vmatpush1.bf16.msra.mxu0 %v1625
        %1751 = vmatprep.subr.bf16.mxu0 %v1630
        %1752 = vmatpush1.bf16.msra.mxu0 %v1629
        %1753 = vmatprep.subr.bf16.mxu0 %v1634
        %1754 = vmatpush1.bf16.msra.mxu0 %v1633
        %1755 = vmatprep.subr.bf16.mxu0 %v1638
        %1756 = vmatpush1.bf16.msra.mxu0 %v1637
        %1757 = vmatprep.subr.bf16.mxu0 %v1642
        %1758 = vmatpush1.bf16.msra.mxu0 %v1641
        %1759 = vmatprep.subr.bf16.mxu0 %v1646
        %1760 = vmatpush1.bf16.msra.mxu0 %v1645
        %1761 = vmatprep.subr.bf16.mxu0 %v1650
        %1762 = vmatpush1.bf16.msra.mxu0 %v1649
        %1763 = vmatprep.subr.bf16.mxu0 %v1654
        %1764 = vmatpush1.bf16.msra.mxu0 %v1653
        %1765 = vmatprep.subr.bf16.mxu0 %v1658
        %1766 = vmatpush1.bf16.msra.mxu0 %v1657
        %1767 = vmatprep.subr.bf16.mxu0 %v1662
        %1768 = vmatpush1.bf16.msra.mxu0 %v1661
        %1769 = vmatprep.subr.bf16.mxu0 %v1666
        %1770 = vmatpush1.bf16.msra.mxu0 %v1665
        %1771 = vmatprep.subr.bf16.mxu0 %v1670
        %1772 = vmatpush1.bf16.msra.mxu0 %v1669
        %1773 = vmatprep.subr.bf16.mxu0 %v1674
        %1774 = vmatpush1.bf16.msra.mxu0 %v1673
        %1775 = vmatprep.subr.bf16.mxu0 %v1678
        %1776 = vmatpush1.bf16.msra.mxu0 %v1677
        %1777 = vmatprep.mubr.bf16.mxu0 %v908
        %1778 = vmatmul.mubr.bf16.gmra.mrb[0].mxu0 %v907
        %v1779 = vpop.f32.mrb[0].mxu0
        %v1780 = vadd.f32 %v1408, %v1779
        %v1781 = vpop.f32.mrb[0].mxu0
        %v1782 = vadd.f32 %v1412, %v1781
        %v1783 = vpop.f32.mrb[0].mxu0
        %v1784 = vadd.f32 %v1408, %v1783
        %v1785 = vpop.f32.mrb[0].mxu0
        %v1786 = vadd.f32 %v1412, %v1785
        %1787 = vmatprep.mubr.bf16.mxu0 %v910
        %1788 = vmatmul.mubr.bf16.gmra.mrb[0].mxu0 %v909
        %v1789 = vpop.f32.mrb[0].mxu0
        %v1790 = vadd.f32 %v1408, %v1789
        %v1791 = vpop.f32.mrb[0].mxu0
        %v1792 = vadd.f32 %v1412, %v1791
        %v1793 = vpop.f32.mrb[0].mxu0
        %v1794 = vadd.f32 %v1408, %v1793
        %v1795 = vpop.f32.mrb[0].mxu0
        %v1796 = vadd.f32 %v1412, %v1795
        %1797 = vmatprep.mubr.bf16.mxu0 %v912
        %1798 = vmatmul.mubr.bf16.gmra.mrb[0].mxu0 %v911
        %v1799 = vpop.f32.mrb[0].mxu0
        %v1800 = vadd.f32 %v1408, %v1799
        %v1801 = vpop.f32.mrb[0].mxu0
        %v1802 = vadd.f32 %v1412, %v1801
        %v1803 = vpop.f32.mrb[0].mxu0
        %v1804 = vadd.f32 %v1408, %v1803
        %v1805 = vpop.f32.mrb[0].mxu0
        %v1806 = vadd.f32 %v1412, %v1805
        %1807 = vmatprep.mubr.bf16.mxu0 %v914
        %1808 = vmatmul.mubr.bf16.gmra.mrb[0].mxu0 %v913
        %v1809 = vpop.f32.mrb[0].mxu0
        %v1810 = vadd.f32 %v1408, %v1809
        %v1811 = vpop.f32.mrb[0].mxu0
        %v1812 = vadd.f32 %v1412, %v1811
        %v1813 = vpop.f32.mrb[0].mxu0
        %v1814 = vadd.f32 %v1408, %v1813
        %v1815 = vpop.f32.mrb[0].mxu0
        %v1816 = vadd.f32 %v1412, %v1815
        %1817 = vdwg.mxu0
        %1818 = vmatprep.subr.bf16.mxu0 %v1620
        %1819 = vmatpush1.bf16.msra.mxu0 %v1619
        %1820 = vmatprep.subr.bf16.mxu0 %v1624
        %1821 = vmatpush1.bf16.msra.mxu0 %v1623
        %1822 = vmatprep.subr.bf16.mxu0 %v1628
        %1823 = vmatpush1.bf16.msra.mxu0 %v1627
        %1824 = vmatprep.subr.bf16.mxu0 %v1632
        %1825 = vmatpush1.bf16.msra.mxu0 %v1631
        %1826 = vmatprep.subr.bf16.mxu0 %v1636
        %1827 = vmatpush1.bf16.msra.mxu0 %v1635
        %1828 = vmatprep.subr.bf16.mxu0 %v1640
        %1829 = vmatpush1.bf16.msra.mxu0 %v1639
        %1830 = vmatprep.subr.bf16.mxu0 %v1644
        %1831 = vmatpush1.bf16.msra.mxu0 %v1643
        %1832 = vmatprep.subr.bf16.mxu0 %v1648
        %1833 = vmatpush1.bf16.msra.mxu0 %v1647
        %1834 = vmatprep.subr.bf16.mxu0 %v1652
        %1835 = vmatpush1.bf16.msra.mxu0 %v1651
        %1836 = vmatprep.subr.bf16.mxu0 %v1656
        %1837 = vmatpush1.bf16.msra.mxu0 %v1655
        %1838 = vmatprep.subr.bf16.mxu0 %v1660
        %1839 = vmatpush1.bf16.msra.mxu0 %v1659
        %1840 = vmatprep.subr.bf16.mxu0 %v1664
        %1841 = vmatpush1.bf16.msra.mxu0 %v1663
        %1842 = vmatprep.subr.bf16.mxu0 %v1668
        %1843 = vmatpush1.bf16.msra.mxu0 %v1667
        %1844 = vmatprep.subr.bf16.mxu0 %v1672
        %1845 = vmatpush1.bf16.msra.mxu0 %v1671
        %1846 = vmatprep.subr.bf16.mxu0 %v1676
        %1847 = vmatpush1.bf16.msra.mxu0 %v1675
        %1848 = vmatprep.subr.bf16.mxu0 %v1680
        %1849 = vmatpush1.bf16.msra.mxu0 %v1679
        %1850 = vmatprep.mubr.bf16.mxu0 %v908
        %1851 = vmatmul.mubr.bf16.gmra.mrb[0].mxu0 %v907
        %v1852 = vpop.f32.mrb[0].mxu0
        %v1853 = vadd.f32 %v1416, %v1852
        %v1854 = vpop.f32.mrb[0].mxu0
        %v1855 = vadd.f32 %v1420, %v1854
        %v1856 = vpop.f32.mrb[0].mxu0
        %v1857 = vadd.f32 %v1416, %v1856
        %v1858 = vpop.f32.mrb[0].mxu0
        %v1859 = vadd.f32 %v1420, %v1858
        %1860 = vmatprep.mubr.bf16.mxu0 %v910
        %1861 = vmatmul.mubr.bf16.gmra.mrb[0].mxu0 %v909
        %v1862 = vpop.f32.mrb[0].mxu0
        %v1863 = vadd.f32 %v1416, %v1862
        %v1864 = vpop.f32.mrb[0].mxu0
        %v1865 = vadd.f32 %v1420, %v1864
        %v1866 = vpop.f32.mrb[0].mxu0
        %v1867 = vadd.f32 %v1416, %v1866
        %v1868 = vpop.f32.mrb[0].mxu0
        %v1869 = vadd.f32 %v1420, %v1868
        %1870 = vmatprep.mubr.bf16.mxu0 %v912
        %1871 = vmatmul.mubr.bf16.gmra.mrb[0].mxu0 %v911
        %v1872 = vpop.f32.mrb[0].mxu0
        %v1873 = vadd.f32 %v1416, %v1872
        %v1874 = vpop.f32.mrb[0].mxu0
        %v1875 = vadd.f32 %v1420, %v1874
        %v1876 = vpop.f32.mrb[0].mxu0
        %v1877 = vadd.f32 %v1416, %v1876
        %v1878 = vpop.f32.mrb[0].mxu0
        %v1879 = vadd.f32 %v1420, %v1878
        %1880 = vmatprep.mubr.bf16.mxu0 %v914
        %1881 = vmatmul.mubr.bf16.gmra.mrb[0].mxu0 %v913
        %v1882 = vpop.f32.mrb[0].mxu0
        %v1883 = vadd.f32 %v1416, %v1882
        %v1884 = vpop.f32.mrb[0].mxu0
        %v1885 = vadd.f32 %v1420, %v1884
        %v1886 = vpop.f32.mrb[0].mxu0
        %v1887 = vadd.f32 %v1416, %v1886
        %v1888 = vpop.f32.mrb[0].mxu0
        %v1889 = vadd.f32 %v1420, %v1888
        %1890 = vdwg.mxu0
        %v1891 = vadd.f32 %v1292, 3.0
        %v1892 = vadd.f32 %v1294, 3.0
        %v1893 = vadd.f32 %v1365, 3.0
        %v1894 = vadd.f32 %v1367, 3.0
        %v1895 = vadd.f32 %v1296, 3.0
        %v1896 = vadd.f32 %v1298, 3.0
        %v1897 = vadd.f32 %v1369, 3.0
        %v1898 = vadd.f32 %v1371, 3.0
        %v1899 = vadd.f32 %v1302, 3.0
        %v1900 = vadd.f32 %v1304, 3.0
        %v1901 = vadd.f32 %v1375, 3.0
        %v1902 = vadd.f32 %v1377, 3.0
        %v1903 = vadd.f32 %v1306, 3.0
        %v1904 = vadd.f32 %v1308, 3.0
        %v1905 = vadd.f32 %v1379, 3.0
        %v1906 = vadd.f32 %v1381, 3.0
        %v1907 = vadd.f32 %v1312, 3.0
        %v1908 = vadd.f32 %v1314, 3.0
        %v1909 = vadd.f32 %v1385, 3.0
        %v1910 = vadd.f32 %v1387, 3.0
        %v1911 = vadd.f32 %v1316, 3.0
        %v1912 = vadd.f32 %v1318, 3.0
        %v1913 = vadd.f32 %v1389, 3.0
        %v1914 = vadd.f32 %v1391, 3.0
        %v1915 = vadd.f32 %v1322, 3.0
        %v1916 = vadd.f32 %v1324, 3.0
        %v1917 = vadd.f32 %v1395, 3.0
        %v1918 = vadd.f32 %v1397, 3.0
        %v1919 = vadd.f32 %v1326, 3.0
        %v1920 = vadd.f32 %v1328, 3.0
        %v1921 = vadd.f32 %v1399, 3.0
        %v1922 = vadd.f32 %v1401, 3.0
        %v1923 = vmax.f32 %v1891, 0.0
        %v1924 = vmax.f32 %v1892, 0.0
        %v1925 = vmax.f32 %v1893, 0.0
        %v1926 = vmax.f32 %v1894, 0.0
        %v1927 = vmax.f32 %v1895, 0.0
        %v1928 = vmax.f32 %v1896, 0.0
        %v1929 = vmax.f32 %v1897, 0.0
        %v1930 = vmax.f32 %v1898, 0.0
        %v1931 = vmax.f32 %v1899, 0.0
        %v1932 = vmax.f32 %v1900, 0.0
        %v1933 = vmax.f32 %v1901, 0.0
        %v1934 = vmax.f32 %v1902, 0.0
        %v1935 = vmax.f32 %v1903, 0.0
        %v1936 = vmax.f32 %v1904, 0.0
        %v1937 = vmax.f32 %v1905, 0.0
        %v1938 = vmax.f32 %v1906, 0.0
        %v1939 = vmax.f32 %v1907, 0.0
        %v1940 = vmax.f32 %v1908, 0.0
        %v1941 = vmax.f32 %v1909, 0.0
        %v1942 = vmax.f32 %v1910, 0.0
        %v1943 = vmax.f32 %v1911, 0.0
        %v1944 = vmax.f32 %v1912, 0.0
        %v1945 = vmax.f32 %v1913, 0.0
        %v1946 = vmax.f32 %v1914, 0.0
        %v1947 = vmax.f32 %v1915, 0.0
        %v1948 = vmax.f32 %v1916, 0.0
        %v1949 = vmax.f32 %v1917, 0.0
        %v1950 = vmax.f32 %v1918, 0.0
        %v1951 = vmax.f32 %v1919, 0.0
        %v1952 = vmax.f32 %v1920, 0.0
        %v1953 = vmax.f32 %v1921, 0.0
        %v1954 = vmax.f32 %v1922, 0.0
        %v1955 = vmin.f32 %v1923, 6.0
        %v1956 = vmin.f32 %v1924, 6.0
        %v1957 = vmin.f32 %v1925, 6.0
        %v1958 = vmin.f32 %v1926, 6.0
        %v1959 = vmin.f32 %v1927, 6.0
        %v1960 = vmin.f32 %v1928, 6.0
        %v1961 = vmin.f32 %v1929, 6.0
        %v1962 = vmin.f32 %v1930, 6.0
        %v1963 = vmin.f32 %v1931, 6.0
        %v1964 = vmin.f32 %v1932, 6.0
        %v1965 = vmin.f32 %v1933, 6.0
        %v1966 = vmin.f32 %v1934, 6.0
        %v1967 = vmin.f32 %v1935, 6.0
        %v1968 = vmin.f32 %v1936, 6.0
        %v1969 = vmin.f32 %v1937, 6.0
        %v1970 = vmin.f32 %v1938, 6.0
        %v1971 = vmin.f32 %v1939, 6.0
        %v1972 = vmin.f32 %v1940, 6.0
        %v1973 = vmin.f32 %v1941, 6.0
        %v1974 = vmin.f32 %v1942, 6.0
        %v1975 = vmin.f32 %v1943, 6.0
        %v1976 = vmin.f32 %v1944, 6.0
        %v1977 = vmin.f32 %v1945, 6.0
        %v1978 = vmin.f32 %v1946, 6.0
        %v1979 = vmin.f32 %v1947, 6.0
        %v1980 = vmin.f32 %v1948, 6.0
        %v1981 = vmin.f32 %v1949, 6.0
        %v1982 = vmin.f32 %v1950, 6.0
        %v1983 = vmin.f32 %v1951, 6.0
        %v1984 = vmin.f32 %v1952, 6.0
        %v1985 = vmin.f32 %v1953, 6.0
        %v1986 = vmin.f32 %v1954, 6.0
        %v1987 = vmul.f32 %v1292, %v1955
        %v1988 = vmul.f32 %v1294, %v1956
        %v1989 = vmul.f32 %v1365, %v1957
        %v1990 = vmul.f32 %v1367, %v1958
        %v1991 = vmul.f32 %v1296, %v1959
        %v1992 = vmul.f32 %v1298, %v1960
        %v1993 = vmul.f32 %v1369, %v1961
        %v1994 = vmul.f32 %v1371, %v1962
        %v1995 = vmul.f32 %v1302, %v1963
        %v1996 = vmul.f32 %v1304, %v1964
        %v1997 = vmul.f32 %v1375, %v1965
        %v1998 = vmul.f32 %v1377, %v1966
        %v1999 = vmul.f32 %v1306, %v1967
        %v2000 = vmul.f32 %v1308, %v1968
        %v2001 = vmul.f32 %v1379, %v1969
        %v2002 = vmul.f32 %v1381, %v1970
        %v2003 = vmul.f32 %v1312, %v1971
        %v2004 = vmul.f32 %v1314, %v1972
        %v2005 = vmul.f32 %v1385, %v1973
        %v2006 = vmul.f32 %v1387, %v1974
        %v2007 = vmul.f32 %v1316, %v1975
        %v2008 = vmul.f32 %v1318, %v1976
        %v2009 = vmul.f32 %v1389, %v1977
        %v2010 = vmul.f32 %v1391, %v1978
        %v2011 = vmul.f32 %v1322, %v1979
        %v2012 = vmul.f32 %v1324, %v1980
        %v2013 = vmul.f32 %v1395, %v1981
        %v2014 = vmul.f32 %v1397, %v1982
        %v2015 = vmul.f32 %v1326, %v1983
        %v2016 = vmul.f32 %v1328, %v1984
        %v2017 = vmul.f32 %v1399, %v1985
        %v2018 = vmul.f32 %v1401, %v1986
        %v2019 = vmul.f32 %v1987, 0.16666667
        %v2020 = vmul.f32 %v1988, 0.16666667
        %v2021 = vmul.f32 %v1989, 0.16666667
        %v2022 = vmul.f32 %v1990, 0.16666667
        %v2023 = vmul.f32 %v1991, 0.16666667
        %v2024 = vmul.f32 %v1992, 0.16666667
        %v2025 = vmul.f32 %v1993, 0.16666667
        %v2026 = vmul.f32 %v1994, 0.16666667
        %v2027 = vmul.f32 %v1995, 0.16666667
        %v2028 = vmul.f32 %v1996, 0.16666667
        %v2029 = vmul.f32 %v1997, 0.16666667
        %v2030 = vmul.f32 %v1998, 0.16666667
        %v2031 = vmul.f32 %v1999, 0.16666667
        %v2032 = vmul.f32 %v2000, 0.16666667
        %v2033 = vmul.f32 %v2001, 0.16666667
        %v2034 = vmul.f32 %v2002, 0.16666667
        %v2035 = vmul.f32 %v2003, 0.16666667
        %v2036 = vmul.f32 %v2004, 0.16666667
        %v2037 = vmul.f32 %v2005, 0.16666667
        %v2038 = vmul.f32 %v2006, 0.16666667
        %v2039 = vmul.f32 %v2007, 0.16666667
        %v2040 = vmul.f32 %v2008, 0.16666667
        %v2041 = vmul.f32 %v2009, 0.16666667
        %v2042 = vmul.f32 %v2010, 0.16666667
        %v2043 = vmul.f32 %v2011, 0.16666667
        %v2044 = vmul.f32 %v2012, 0.16666667
        %v2045 = vmul.f32 %v2013, 0.16666667
        %v2046 = vmul.f32 %v2014, 0.16666667
        %v2047 = vmul.f32 %v2015, 0.16666667
        %v2048 = vmul.f32 %v2016, 0.16666667
        %v2049 = vmul.f32 %v2017, 0.16666667
        %v2050 = vmul.f32 %v2018, 0.16666667
        %v2051 = vld [vmem:[%s8] sm:$0xff]
        %v2052 = vpack.c.bf16 %v587, %v586
        %v2053 = vpack.c.bf16 %v589, %v588
        %v2054 = vpack.c.bf16 %v591, %v590
        %v2055 = vpack.c.bf16 %v593, %v592
        %v2056 = vld [vmem:[%s9] sm:$0x3]
        %v2058 = vlaneseq
        %v2059 = vshrl.u32 %v2058, 7
        %v2060 = vsub.s32 0, %v2059
        %v2061 = vrot.slane %v2056, %v2060
        %v2062 = vlaneseq
        %v2063 = vshrl.u32 %v2062, 7
        %v2064 = vsub.s32 1, %v2063
        %v2065 = vrot.slane %v2056, %v2064
        %v2069 = vunpack.c.l.b16 %v2051
        %v2070 = vunpack.c.h.b16 %v2051
        %v2071 = vpack.c.b16 %v2069, %v2069
        %v2072 = vpack.c.b16 %v2070, %v2070
        %vm2073 = vcmask 64512
        %v2075 = vsel %vm2073, %v2052, 0
        %v2078 = vsel %vm2073, %v2053, 0
        %v2081 = vsel %vm2073, %v2054, 0
        %v2084 = vsel %vm2073, %v2055, 0
        %vm2086 = vcmask 1043456
        %v2088 = vsel %vm2086, %v2071, 0
        %v2091 = vsel %vm2086, %v2072, 0
        %2093 = vmatprep.subr.bf16.mxu0 %v2091
        %2094 = vmatpush1.bf16.msra.mxu0 %v2088
        %2095 = vmatprep.subr.bf16.mxu0 0
        %2096 = vmatpush1.bf16.msra.mxu0 0
        %2097 = vmatprep.subr.bf16.mxu0 0
        %2098 = vmatpush1.bf16.msra.mxu0 0
        %2099 = vmatprep.subr.bf16.mxu0 0
        %2100 = vmatpush1.bf16.msra.mxu0 0
        %2101 = vmatprep.subr.bf16.mxu0 0
        %2102 = vmatpush1.bf16.msra.mxu0 0
        %2103 = vmatprep.subr.bf16.mxu0 0
        %2104 = vmatpush1.bf16.msra.mxu0 0
        %2105 = vmatprep.subr.bf16.mxu0 0
        %2106 = vmatpush1.bf16.msra.mxu0 0
        %2107 = vmatprep.subr.bf16.mxu0 0
        %2108 = vmatpush1.bf16.msra.mxu0 0
        %2109 = vmatprep.subr.bf16.mxu0 0
        %2110 = vmatpush1.bf16.msra.mxu0 0
        %2111 = vmatprep.subr.bf16.mxu0 0
        %2112 = vmatpush1.bf16.msra.mxu0 0
        %2113 = vmatprep.subr.bf16.mxu0 0
        %2114 = vmatpush1.bf16.msra.mxu0 0
        %2115 = vmatprep.subr.bf16.mxu0 0
        %2116 = vmatpush1.bf16.msra.mxu0 0
        %2117 = vmatprep.subr.bf16.mxu0 0
        %2118 = vmatpush1.bf16.msra.mxu0 0
        %2119 = vmatprep.subr.bf16.mxu0 0
        %2120 = vmatpush1.bf16.msra.mxu0 0
        %2121 = vmatprep.subr.bf16.mxu0 0
        %2122 = vmatpush1.bf16.msra.mxu0 0
        %2123 = vmatprep.subr.bf16.mxu0 0
        %2124 = vmatpush1.bf16.msra.mxu0 0
        %2125 = vmatprep.mubr.bf16.mxu0 0
        %2126 = vmatmul.mubr.bf16.gmra.mrb[0].mxu0 %v2075
        %v2127 = vpop.f32.mrb[0].mxu0
        %v2128 = vadd.f32 %v2061, %v2127
        %v2129 = vpop.f32.mrb[0].mxu0
        %v2130 = vadd.f32 %v2065, %v2129
        %v2131 = vpop.f32.mrb[0].mxu0
        %v2132 = vadd.f32 %v2061, %v2131
        %v2133 = vpop.f32.mrb[0].mxu0
        %v2134 = vadd.f32 %v2065, %v2133
        %2135 = vmatprep.mubr.bf16.mxu0 0
        %2136 = vmatmul.mubr.bf16.gmra.mrb[0].mxu0 %v2078
        %v2137 = vpop.f32.mrb[0].mxu0
        %v2138 = vadd.f32 %v2061, %v2137
        %v2139 = vpop.f32.mrb[0].mxu0
        %v2140 = vadd.f32 %v2065, %v2139
        %v2141 = vpop.f32.mrb[0].mxu0
        %v2142 = vadd.f32 %v2061, %v2141
        %v2143 = vpop.f32.mrb[0].mxu0
        %v2144 = vadd.f32 %v2065, %v2143
        %2145 = vmatprep.mubr.bf16.mxu0 0
        %2146 = vmatmul.mubr.bf16.gmra.mrb[0].mxu0 %v2081
        %v2147 = vpop.f32.mrb[0].mxu0
        %v2148 = vadd.f32 %v2061, %v2147
        %v2149 = vpop.f32.mrb[0].mxu0
        %v2150 = vadd.f32 %v2065, %v2149
        %v2151 = vpop.f32.mrb[0].mxu0
        %v2152 = vadd.f32 %v2061, %v2151
        %v2153 = vpop.f32.mrb[0].mxu0
        %v2154 = vadd.f32 %v2065, %v2153
        %2155 = vmatprep.mubr.bf16.mxu0 0
        %2156 = vmatmul.mubr.bf16.gmra.mrb[0].mxu0 %v2084
        %v2157 = vpop.f32.mrb[0].mxu0
        %v2158 = vadd.f32 %v2061, %v2157
        %v2159 = vpop.f32.mrb[0].mxu0
        %v2160 = vadd.f32 %v2065, %v2159
        %v2161 = vpop.f32.mrb[0].mxu0
        %v2162 = vadd.f32 %v2061, %v2161
        %v2163 = vpop.f32.mrb[0].mxu0
        %v2164 = vadd.f32 %v2065, %v2163
        %2165 = vdwg.mxu0
        %v2166 = vmul.f32 %v2128, 0.5
        %v2167 = vmul.f32 %v2130, 0.5
        %v2168 = vmul.f32 %v2132, 0.5
        %v2169 = vmul.f32 %v2134, 0.5
        %v2170 = vmul.f32 %v2138, 0.5
        %v2171 = vmul.f32 %v2140, 0.5
        %v2172 = vmul.f32 %v2142, 0.5
        %v2173 = vmul.f32 %v2144, 0.5
        %v2174 = vmul.f32 %v2148, 0.5
        %v2175 = vmul.f32 %v2150, 0.5
        %v2176 = vmul.f32 %v2152, 0.5
        %v2177 = vmul.f32 %v2154, 0.5
        %v2178 = vmul.f32 %v2158, 0.5
        %v2179 = vmul.f32 %v2160, 0.5
        %v2180 = vmul.f32 %v2162, 0.5
        %v2181 = vmul.f32 %v2164, 0.5
        %v2182 = vmul.f32 %v2128, 0.70710677
        %v2183 = vmul.f32 %v2130, 0.70710677
        %v2184 = vmul.f32 %v2132, 0.70710677
        %v2185 = vmul.f32 %v2134, 0.70710677
        %v2186 = vmul.f32 %v2138, 0.70710677
        %v2187 = vmul.f32 %v2140, 0.70710677
        %v2188 = vmul.f32 %v2142, 0.70710677
        %v2189 = vmul.f32 %v2144, 0.70710677
        %v2190 = vmul.f32 %v2148, 0.70710677
        %v2191 = vmul.f32 %v2150, 0.70710677
        %v2192 = vmul.f32 %v2152, 0.70710677
        %v2193 = vmul.f32 %v2154, 0.70710677
        %v2194 = vmul.f32 %v2158, 0.70710677
        %v2195 = vmul.f32 %v2160, 0.70710677
        %v2196 = vmul.f32 %v2162, 0.70710677
        %v2197 = vmul.f32 %v2164, 0.70710677
        %v2198 = verf.f32.pop %v2182
        %v2199 = verf.f32.pop %v2183
        %v2200 = verf.f32.pop %v2184
        %v2201 = verf.f32.pop %v2185
        %v2202 = verf.f32.pop %v2186
        %v2203 = verf.f32.pop %v2187
        %v2204 = verf.f32.pop %v2188
        %v2205 = verf.f32.pop %v2189
        %v2206 = verf.f32.pop %v2190
        %v2207 = verf.f32.pop %v2191
        %v2208 = verf.f32.pop %v2192
        %v2209 = verf.f32.pop %v2193
        %v2210 = verf.f32.pop %v2194
        %v2211 = verf.f32.pop %v2195
        %v2212 = verf.f32.pop %v2196
        %v2213 = verf.f32.pop %v2197
        %v2214 = vadd.f32 %v2198, 1.0
        %v2215 = vadd.f32 %v2199, 1.0
        %v2216 = vadd.f32 %v2200, 1.0
        %v2217 = vadd.f32 %v2201, 1.0
        %v2218 = vadd.f32 %v2202, 1.0
        %v2219 = vadd.f32 %v2203, 1.0
        %v2220 = vadd.f32 %v2204, 1.0
        %v2221 = vadd.f32 %v2205, 1.0
        %v2222 = vadd.f32 %v2206, 1.0
        %v2223 = vadd.f32 %v2207, 1.0
        %v2224 = vadd.f32 %v2208, 1.0
        %v2225 = vadd.f32 %v2209, 1.0
        %v2226 = vadd.f32 %v2210, 1.0
        %v2227 = vadd.f32 %v2211, 1.0
        %v2228 = vadd.f32 %v2212, 1.0
        %v2229 = vadd.f32 %v2213, 1.0
        %v2230 = vmul.f32 %v2166, %v2214
        %v2231 = vmul.f32 %v2167, %v2215
        %v2232 = vmul.f32 %v2168, %v2216
        %v2233 = vmul.f32 %v2169, %v2217
        %v2234 = vmul.f32 %v2170, %v2218
        %v2235 = vmul.f32 %v2171, %v2219
        %v2236 = vmul.f32 %v2172, %v2220
        %v2237 = vmul.f32 %v2173, %v2221
        %v2238 = vmul.f32 %v2174, %v2222
        %v2239 = vmul.f32 %v2175, %v2223
        %v2240 = vmul.f32 %v2176, %v2224
        %v2241 = vmul.f32 %v2177, %v2225
        %v2242 = vmul.f32 %v2178, %v2226
        %v2243 = vmul.f32 %v2179, %v2227
        %v2244 = vmul.f32 %v2180, %v2228
        %v2245 = vmul.f32 %v2181, %v2229
        %v2246 = vld [vmem:[#allocation8] sm:$0xff]
        %v2247 = vld [vmem:[#allocation8 + $0x8] sm:$0xff]
        %v2248 = vld [vmem:[#allocation8 + $0x10] sm:$0xff]
        %v2249 = vld [vmem:[#allocation8 + $0x18] sm:$0xff]
        %v2250 = vld [vmem:[#allocation8 + $0x20] sm:$0xff]
        %v2251 = vld [vmem:[#allocation8 + $0x28] sm:$0xff]
        %v2252 = vld [vmem:[#allocation8 + $0x30] sm:$0xff]
        %v2253 = vld [vmem:[#allocation8 + $0x38] sm:$0xff]
        %v2254 = vld [vmem:[#allocation8 + $0x40] sm:$0xff]
        %v2255 = vld [vmem:[#allocation8 + $0x48] sm:$0xff]
        %v2256 = vld [vmem:[#allocation8 + $0x50] sm:$0xff]
        %v2257 = vld [vmem:[#allocation8 + $0x58] sm:$0xff]
        %v2258 = vld [vmem:[#allocation8 + $0x60] sm:$0xff]
        %v2259 = vld [vmem:[#allocation8 + $0x68] sm:$0xff]
        %v2260 = vld [vmem:[#allocation8 + $0x70] sm:$0xff]
        %v2261 = vld [vmem:[#allocation8 + $0x78] sm:$0xff]
        %v2262 = vld [vmem:[#allocation8 + $0x80] sm:$0xff]
        %v2263 = vld [vmem:[#allocation8 + $0x88] sm:$0xff]
        %v2264 = vld [vmem:[#allocation8 + $0x90] sm:$0xff]
        %v2265 = vld [vmem:[#allocation8 + $0x98] sm:$0xff]
        %v2266 = vld [vmem:[#allocation8 + $0xa0] sm:$0xff]
        %v2267 = vld [vmem:[#allocation8 + $0xa8] sm:$0xff]
        %v2268 = vld [vmem:[#allocation8 + $0xb0] sm:$0xff]
        %v2269 = vld [vmem:[#allocation8 + $0xb8] sm:$0xff]
        %v2270 = vld [vmem:[#allocation8 + $0xc0] sm:$0xff]
        %v2271 = vld [vmem:[#allocation8 + $0xc8] sm:$0xff]
        %v2272 = vld [vmem:[#allocation8 + $0xd0] sm:$0xff]
        %v2273 = vld [vmem:[#allocation8 + $0xd8] sm:$0xff]
        %v2274 = vld [vmem:[#allocation8 + $0xe0] sm:$0xff]
        %v2275 = vld [vmem:[#allocation8 + $0xe8] sm:$0xff]
        %v2276 = vld [vmem:[#allocation8 + $0xf0] sm:$0xff]
        %v2277 = vld [vmem:[#allocation8 + $0xf8] sm:$0xff]
        %v2278 = vld [vmem:[#allocation8 + $0x100] sm:$0xff]
        %v2279 = vld [vmem:[#allocation8 + $0x108] sm:$0xff]
        %v2280 = vld [vmem:[#allocation8 + $0x110] sm:$0xff]
        %v2281 = vld [vmem:[#allocation8 + $0x118] sm:$0xff]
        %v2282 = vld [vmem:[#allocation8 + $0x120] sm:$0xff]
        %v2283 = vld [vmem:[#allocation8 + $0x128] sm:$0xff]
        %v2284 = vld [vmem:[#allocation8 + $0x130] sm:$0xff]
        %v2285 = vld [vmem:[#allocation8 + $0x138] sm:$0xff]
        %v2286 = vld [vmem:[#allocation8 + $0x140] sm:$0xff]
        %v2287 = vld [vmem:[#allocation8 + $0x148] sm:$0xff]
        %v2288 = vld [vmem:[#allocation8 + $0x150] sm:$0xff]
        %v2289 = vld [vmem:[#allocation8 + $0x158] sm:$0xff]
        %v2290 = vld [vmem:[#allocation8 + $0x160] sm:$0xff]
        %v2291 = vld [vmem:[#allocation8 + $0x168] sm:$0xff]
        %v2292 = vld [vmem:[#allocation8 + $0x170] sm:$0xff]
        %v2293 = vld [vmem:[#allocation8 + $0x178] sm:$0xff]
        %v2294 = vld [vmem:[#allocation8 + $0x180] sm:$0xff]
        %v2295 = vld [vmem:[#allocation8 + $0x188] sm:$0xff]
        %v2296 = vld [vmem:[#allocation8 + $0x190] sm:$0xff]
        %v2297 = vld [vmem:[#allocation8 + $0x198] sm:$0xff]
        %v2298 = vld [vmem:[#allocation8 + $0x1a0] sm:$0xff]
        %v2299 = vld [vmem:[#allocation8 + $0x1a8] sm:$0xff]
        %v2300 = vld [vmem:[#allocation8 + $0x1b0] sm:$0xff]
        %v2301 = vld [vmem:[#allocation8 + $0x1b8] sm:$0xff]
        %v2302 = vld [vmem:[#allocation8 + $0x1c0] sm:$0xff]
        %v2303 = vld [vmem:[#allocation8 + $0x1c8] sm:$0xff]
        %v2304 = vld [vmem:[#allocation8 + $0x1d0] sm:$0xff]
        %v2305 = vld [vmem:[#allocation8 + $0x1d8] sm:$0xff]
        %v2306 = vld [vmem:[#allocation8 + $0x1e0] sm:$0xff]
        %v2307 = vld [vmem:[#allocation8 + $0x1e8] sm:$0xff]
        %v2308 = vld [vmem:[#allocation8 + $0x1f0] sm:$0xff]
        %v2309 = vld [vmem:[#allocation8 + $0x1f8] sm:$0xff]
        %v2310 = vpack.c.bf16 %v2232, %v2230
        %v2311 = vpack.c.bf16 %v2233, %v2231
        %v2312 = vpack.c.bf16 %v2236, %v2234
        %v2313 = vpack.c.bf16 %v2237, %v2235
        %v2314 = vpack.c.bf16 %v2240, %v2238
        %v2315 = vpack.c.bf16 %v2241, %v2239
        %v2316 = vpack.c.bf16 %v2244, %v2242
        %v2317 = vpack.c.bf16 %v2245, %v2243
        %v2318 = vld [vmem:[%s11] sm:$0xf]
        %v2320 = vlaneseq
        %v2321 = vshrl.u32 %v2320, 7
        %v2322 = vsub.s32 0, %v2321
        %v2323 = vrot.slane %v2318, %v2322
        %v2324 = vlaneseq
        %v2325 = vshrl.u32 %v2324, 7
        %v2326 = vsub.s32 1, %v2325
        %v2327 = vrot.slane %v2318, %v2326
        %v2328 = vlaneseq
        %v2329 = vshrl.u32 %v2328, 7
        %v2330 = vsub.s32 2, %v2329
        %v2331 = vrot.slane %v2318, %v2330
        %v2332 = vlaneseq
        %v2333 = vshrl.u32 %v2332, 7
        %v2334 = vsub.s32 3, %v2333
        %v2335 = vrot.slane %v2318, %v2334
        %v2404 = vunpack.c.l.b16 %v2246
        %v2405 = vunpack.c.h.b16 %v2246
        %v2406 = vunpack.c.l.b16 %v2247
        %v2407 = vunpack.c.h.b16 %v2247
        %v2408 = vunpack.c.l.b16 %v2248
        %v2409 = vunpack.c.h.b16 %v2248
        %v2410 = vunpack.c.l.b16 %v2249
        %v2411 = vunpack.c.h.b16 %v2249
        %v2412 = vunpack.c.l.b16 %v2250
        %v2413 = vunpack.c.h.b16 %v2250
        %v2414 = vunpack.c.l.b16 %v2251
        %v2415 = vunpack.c.h.b16 %v2251
        %v2416 = vunpack.c.l.b16 %v2252
        %v2417 = vunpack.c.h.b16 %v2252
        %v2418 = vunpack.c.l.b16 %v2253
        %v2419 = vunpack.c.h.b16 %v2253
        %v2420 = vunpack.c.l.b16 %v2254
        %v2421 = vunpack.c.h.b16 %v2254
        %v2422 = vunpack.c.l.b16 %v2255
        %v2423 = vunpack.c.h.b16 %v2255
        %v2424 = vunpack.c.l.b16 %v2256
        %v2425 = vunpack.c.h.b16 %v2256
        %v2426 = vunpack.c.l.b16 %v2257
        %v2427 = vunpack.c.h.b16 %v2257
        %v2428 = vunpack.c.l.b16 %v2258
        %v2429 = vunpack.c.h.b16 %v2258
        %v2430 = vunpack.c.l.b16 %v2259
        %v2431 = vunpack.c.h.b16 %v2259
        %v2432 = vunpack.c.l.b16 %v2260
        %v2433 = vunpack.c.h.b16 %v2260
        %v2434 = vunpack.c.l.b16 %v2261
        %v2435 = vunpack.c.h.b16 %v2261
        %v2436 = vunpack.c.l.b16 %v2262
        %v2437 = vunpack.c.h.b16 %v2262
        %v2438 = vunpack.c.l.b16 %v2263
        %v2439 = vunpack.c.h.b16 %v2263
        %v2440 = vunpack.c.l.b16 %v2264
        %v2441 = vunpack.c.h.b16 %v2264
        %v2442 = vunpack.c.l.b16 %v2265
        %v2443 = vunpack.c.h.b16 %v2265
        %v2444 = vunpack.c.l.b16 %v2266
        %v2445 = vunpack.c.h.b16 %v2266
        %v2446 = vunpack.c.l.b16 %v2267
        %v2447 = vunpack.c.h.b16 %v2267
        %v2448 = vunpack.c.l.b16 %v2268
        %v2449 = vunpack.c.h.b16 %v2268
        %v2450 = vunpack.c.l.b16 %v2269
        %v2451 = vunpack.c.h.b16 %v2269
        %v2452 = vunpack.c.l.b16 %v2270
        %v2453 = vunpack.c.h.b16 %v2270
        %v2454 = vunpack.c.l.b16 %v2271
        %v2455 = vunpack.c.h.b16 %v2271
        %v2456 = vunpack.c.l.b16 %v2272
        %v2457 = vunpack.c.h.b16 %v2272
        %v2458 = vunpack.c.l.b16 %v2273
        %v2459 = vunpack.c.h.b16 %v2273
        %v2460 = vunpack.c.l.b16 %v2274
        %v2461 = vunpack.c.h.b16 %v2274
        %v2462 = vunpack.c.l.b16 %v2275
        %v2463 = vunpack.c.h.b16 %v2275
        %v2464 = vunpack.c.l.b16 %v2276
        %v2465 = vunpack.c.h.b16 %v2276
        %v2466 = vunpack.c.l.b16 %v2277
        %v2467 = vunpack.c.h.b16 %v2277
        %v2468 = vunpack.c.l.b16 %v2278
        %v2469 = vunpack.c.h.b16 %v2278
        %v2470 = vunpack.c.l.b16 %v2279
        %v2471 = vunpack.c.h.b16 %v2279
        %v2472 = vunpack.c.l.b16 %v2280
        %v2473 = vunpack.c.h.b16 %v2280
        %v2474 = vunpack.c.l.b16 %v2281
        %v2475 = vunpack.c.h.b16 %v2281
        %v2476 = vunpack.c.l.b16 %v2282
        %v2477 = vunpack.c.h.b16 %v2282
        %v2478 = vunpack.c.l.b16 %v2283
        %v2479 = vunpack.c.h.b16 %v2283
        %v2480 = vunpack.c.l.b16 %v2284
        %v2481 = vunpack.c.h.b16 %v2284
        %v2482 = vunpack.c.l.b16 %v2285
        %v2483 = vunpack.c.h.b16 %v2285
        %v2484 = vunpack.c.l.b16 %v2286
        %v2485 = vunpack.c.h.b16 %v2286
        %v2486 = vunpack.c.l.b16 %v2287
        %v2487 = vunpack.c.h.b16 %v2287
        %v2488 = vunpack.c.l.b16 %v2288
        %v2489 = vunpack.c.h.b16 %v2288
        %v2490 = vunpack.c.l.b16 %v2289
        %v2491 = vunpack.c.h.b16 %v2289
        %v2492 = vunpack.c.l.b16 %v2290
        %v2493 = vunpack.c.h.b16 %v2290
        %v2494 = vunpack.c.l.b16 %v2291
        %v2495 = vunpack.c.h.b16 %v2291
        %v2496 = vunpack.c.l.b16 %v2292
        %v2497 = vunpack.c.h.b16 %v2292
        %v2498 = vunpack.c.l.b16 %v2293
        %v2499 = vunpack.c.h.b16 %v2293
        %v2500 = vunpack.c.l.b16 %v2294
        %v2501 = vunpack.c.h.b16 %v2294
        %v2502 = vunpack.c.l.b16 %v2295
        %v2503 = vunpack.c.h.b16 %v2295
        %v2504 = vunpack.c.l.b16 %v2296
        %v2505 = vunpack.c.h.b16 %v2296
        %v2506 = vunpack.c.l.b16 %v2297
        %v2507 = vunpack.c.h.b16 %v2297
        %v2508 = vunpack.c.l.b16 %v2298
        %v2509 = vunpack.c.h.b16 %v2298
        %v2510 = vunpack.c.l.b16 %v2299
        %v2511 = vunpack.c.h.b16 %v2299
        %v2512 = vunpack.c.l.b16 %v2300
        %v2513 = vunpack.c.h.b16 %v2300
        %v2514 = vunpack.c.l.b16 %v2301
        %v2515 = vunpack.c.h.b16 %v2301
        %v2516 = vunpack.c.l.b16 %v2302
        %v2517 = vunpack.c.h.b16 %v2302
        %v2518 = vunpack.c.l.b16 %v2303
        %v2519 = vunpack.c.h.b16 %v2303
        %v2520 = vunpack.c.l.b16 %v2304
        %v2521 = vunpack.c.h.b16 %v2304
        %v2522 = vunpack.c.l.b16 %v2305
        %v2523 = vunpack.c.h.b16 %v2305
        %v2524 = vunpack.c.l.b16 %v2306
        %v2525 = vunpack.c.h.b16 %v2306
        %v2526 = vunpack.c.l.b16 %v2307
        %v2527 = vunpack.c.h.b16 %v2307
        %v2528 = vunpack.c.l.b16 %v2308
        %v2529 = vunpack.c.h.b16 %v2308
        %v2530 = vunpack.c.l.b16 %v2309
        %v2531 = vunpack.c.h.b16 %v2309
        %v2532 = vpack.c.b16 %v2408, %v2404
        %v2533 = vpack.c.b16 %v2409, %v2405
        %v2534 = vpack.c.b16 %v2410, %v2406
        %v2535 = vpack.c.b16 %v2411, %v2407
        %v2536 = vpack.c.b16 %v2416, %v2412
        %v2537 = vpack.c.b16 %v2417, %v2413
        %v2538 = vpack.c.b16 %v2418, %v2414
        %v2539 = vpack.c.b16 %v2419, %v2415
        %v2540 = vpack.c.b16 %v2424, %v2420
        %v2541 = vpack.c.b16 %v2425, %v2421
        %v2542 = vpack.c.b16 %v2426, %v2422
        %v2543 = vpack.c.b16 %v2427, %v2423
        %v2544 = vpack.c.b16 %v2432, %v2428
        %v2545 = vpack.c.b16 %v2433, %v2429
        %v2546 = vpack.c.b16 %v2434, %v2430
        %v2547 = vpack.c.b16 %v2435, %v2431
        %v2548 = vpack.c.b16 %v2440, %v2436
        %v2549 = vpack.c.b16 %v2441, %v2437
        %v2550 = vpack.c.b16 %v2442, %v2438
        %v2551 = vpack.c.b16 %v2443, %v2439
        %v2552 = vpack.c.b16 %v2448, %v2444
        %v2553 = vpack.c.b16 %v2449, %v2445
        %v2554 = vpack.c.b16 %v2450, %v2446
        %v2555 = vpack.c.b16 %v2451, %v2447
        %v2556 = vpack.c.b16 %v2456, %v2452
        %v2557 = vpack.c.b16 %v2457, %v2453
        %v2558 = vpack.c.b16 %v2458, %v2454
        %v2559 = vpack.c.b16 %v2459, %v2455
        %v2560 = vpack.c.b16 %v2464, %v2460
        %v2561 = vpack.c.b16 %v2465, %v2461
        %v2562 = vpack.c.b16 %v2466, %v2462
        %v2563 = vpack.c.b16 %v2467, %v2463
        %v2564 = vpack.c.b16 %v2472, %v2468
        %v2565 = vpack.c.b16 %v2473, %v2469
        %v2566 = vpack.c.b16 %v2474, %v2470
        %v2567 = vpack.c.b16 %v2475, %v2471
        %v2568 = vpack.c.b16 %v2480, %v2476
        %v2569 = vpack.c.b16 %v2481, %v2477
        %v2570 = vpack.c.b16 %v2482, %v2478
        %v2571 = vpack.c.b16 %v2483, %v2479
        %v2572 = vpack.c.b16 %v2488, %v2484
        %v2573 = vpack.c.b16 %v2489, %v2485
        %v2574 = vpack.c.b16 %v2490, %v2486
        %v2575 = vpack.c.b16 %v2491, %v2487
        %v2576 = vpack.c.b16 %v2496, %v2492
        %v2577 = vpack.c.b16 %v2497, %v2493
        %v2578 = vpack.c.b16 %v2498, %v2494
        %v2579 = vpack.c.b16 %v2499, %v2495
        %v2580 = vpack.c.b16 %v2504, %v2500
        %v2581 = vpack.c.b16 %v2505, %v2501
        %v2582 = vpack.c.b16 %v2506, %v2502
        %v2583 = vpack.c.b16 %v2507, %v2503
        %v2584 = vpack.c.b16 %v2512, %v2508
        %v2585 = vpack.c.b16 %v2513, %v2509
        %v2586 = vpack.c.b16 %v2514, %v2510
        %v2587 = vpack.c.b16 %v2515, %v2511
        %v2588 = vpack.c.b16 %v2520, %v2516
        %v2589 = vpack.c.b16 %v2521, %v2517
        %v2590 = vpack.c.b16 %v2522, %v2518
        %v2591 = vpack.c.b16 %v2523, %v2519
        %v2592 = vpack.c.b16 %v2528, %v2524
        %v2593 = vpack.c.b16 %v2529, %v2525
        %v2594 = vpack.c.b16 %v2530, %v2526
        %v2595 = vpack.c.b16 %v2531, %v2527
        %2660 = vmatprep.subr.bf16.mxu0 %v2533
        %2661 = vmatpush1.bf16.msra.mxu0 %v2532
        %2662 = vmatprep.subr.bf16.mxu0 %v2537
        %2663 = vmatpush1.bf16.msra.mxu0 %v2536
        %2664 = vmatprep.subr.bf16.mxu0 %v2541
        %2665 = vmatpush1.bf16.msra.mxu0 %v2540
        %2666 = vmatprep.subr.bf16.mxu0 %v2545
        %2667 = vmatpush1.bf16.msra.mxu0 %v2544
        %2668 = vmatprep.subr.bf16.mxu0 %v2549
        %2669 = vmatpush1.bf16.msra.mxu0 %v2548
        %2670 = vmatprep.subr.bf16.mxu0 %v2553
        %2671 = vmatpush1.bf16.msra.mxu0 %v2552
        %2672 = vmatprep.subr.bf16.mxu0 %v2557
        %2673 = vmatpush1.bf16.msra.mxu0 %v2556
        %2674 = vmatprep.subr.bf16.mxu0 %v2561
        %2675 = vmatpush1.bf16.msra.mxu0 %v2560
        %2676 = vmatprep.subr.bf16.mxu0 %v2565
        %2677 = vmatpush1.bf16.msra.mxu0 %v2564
        %2678 = vmatprep.subr.bf16.mxu0 %v2569
        %2679 = vmatpush1.bf16.msra.mxu0 %v2568
        %2680 = vmatprep.subr.bf16.mxu0 %v2573
        %2681 = vmatpush1.bf16.msra.mxu0 %v2572
        %2682 = vmatprep.subr.bf16.mxu0 %v2577
        %2683 = vmatpush1.bf16.msra.mxu0 %v2576
        %2684 = vmatprep.subr.bf16.mxu0 %v2581
        %2685 = vmatpush1.bf16.msra.mxu0 %v2580
        %2686 = vmatprep.subr.bf16.mxu0 %v2585
        %2687 = vmatpush1.bf16.msra.mxu0 %v2584
        %2688 = vmatprep.subr.bf16.mxu0 %v2589
        %2689 = vmatpush1.bf16.msra.mxu0 %v2588
        %2690 = vmatprep.subr.bf16.mxu0 %v2593
        %2691 = vmatpush1.bf16.msra.mxu0 %v2592
        %2692 = vmatprep.mubr.bf16.mxu0 %v2311
        %2693 = vmatmul.mubr.bf16.gmra.mrb[0].mxu0 %v2310
        %v2694 = vpop.f32.mrb[0].mxu0
        %v2695 = vadd.f32 %v2323, %v2694
        %v2696 = vpop.f32.mrb[0].mxu0
        %v2697 = vadd.f32 %v2327, %v2696
        %v2698 = vpop.f32.mrb[0].mxu0
        %v2699 = vadd.f32 %v2323, %v2698
        %v2700 = vpop.f32.mrb[0].mxu0
        %v2701 = vadd.f32 %v2327, %v2700
        %2702 = vmatprep.mubr.bf16.mxu0 %v2313
        %2703 = vmatmul.mubr.bf16.gmra.mrb[0].mxu0 %v2312
        %v2704 = vpop.f32.mrb[0].mxu0
        %v2705 = vadd.f32 %v2323, %v2704
        %v2706 = vpop.f32.mrb[0].mxu0
        %v2707 = vadd.f32 %v2327, %v2706
        %v2708 = vpop.f32.mrb[0].mxu0
        %v2709 = vadd.f32 %v2323, %v2708
        %v2710 = vpop.f32.mrb[0].mxu0
        %v2711 = vadd.f32 %v2327, %v2710
        %2712 = vmatprep.mubr.bf16.mxu0 %v2315
        %2713 = vmatmul.mubr.bf16.gmra.mrb[0].mxu0 %v2314
        %v2714 = vpop.f32.mrb[0].mxu0
        %v2715 = vadd.f32 %v2323, %v2714
        %v2716 = vpop.f32.mrb[0].mxu0
        %v2717 = vadd.f32 %v2327, %v2716
        %v2718 = vpop.f32.mrb[0].mxu0
        %v2719 = vadd.f32 %v2323, %v2718
        %v2720 = vpop.f32.mrb[0].mxu0
        %v2721 = vadd.f32 %v2327, %v2720
        %2722 = vmatprep.mubr.bf16.mxu0 %v2317
        %2723 = vmatmul.mubr.bf16.gmra.mrb[0].mxu0 %v2316
        %v2724 = vpop.f32.mrb[0].mxu0
        %v2725 = vadd.f32 %v2323, %v2724
        %v2726 = vpop.f32.mrb[0].mxu0
        %v2727 = vadd.f32 %v2327, %v2726
        %v2728 = vpop.f32.mrb[0].mxu0
        %v2729 = vadd.f32 %v2323, %v2728
        %v2730 = vpop.f32.mrb[0].mxu0
        %v2731 = vadd.f32 %v2327, %v2730
        %2732 = vdwg.mxu0
        %2733 = vmatprep.subr.bf16.mxu0 %v2535
        %2734 = vmatpush1.bf16.msra.mxu0 %v2534
        %2735 = vmatprep.subr.bf16.mxu0 %v2539
        %2736 = vmatpush1.bf16.msra.mxu0 %v2538
        %2737 = vmatprep.subr.bf16.mxu0 %v2543
        %2738 = vmatpush1.bf16.msra.mxu0 %v2542
        %2739 = vmatprep.subr.bf16.mxu0 %v2547
        %2740 = vmatpush1.bf16.msra.mxu0 %v2546
        %2741 = vmatprep.subr.bf16.mxu0 %v2551
        %2742 = vmatpush1.bf16.msra.mxu0 %v2550
        %2743 = vmatprep.subr.bf16.mxu0 %v2555
        %2744 = vmatpush1.bf16.msra.mxu0 %v2554
        %2745 = vmatprep.subr.bf16.mxu0 %v2559
        %2746 = vmatpush1.bf16.msra.mxu0 %v2558
        %2747 = vmatprep.subr.bf16.mxu0 %v2563
        %2748 = vmatpush1.bf16.msra.mxu0 %v2562
        %2749 = vmatprep.subr.bf16.mxu0 %v2567
        %2750 = vmatpush1.bf16.msra.mxu0 %v2566
        %2751 = vmatprep.subr.bf16.mxu0 %v2571
        %2752 = vmatpush1.bf16.msra.mxu0 %v2570
        %2753 = vmatprep.subr.bf16.mxu0 %v2575
        %2754 = vmatpush1.bf16.msra.mxu0 %v2574
        %2755 = vmatprep.subr.bf16.mxu0 %v2579
        %2756 = vmatpush1.bf16.msra.mxu0 %v2578
        %2757 = vmatprep.subr.bf16.mxu0 %v2583
        %2758 = vmatpush1.bf16.msra.mxu0 %v2582
        %2759 = vmatprep.subr.bf16.mxu0 %v2587
        %2760 = vmatpush1.bf16.msra.mxu0 %v2586
        %2761 = vmatprep.subr.bf16.mxu0 %v2591
        %2762 = vmatpush1.bf16.msra.mxu0 %v2590
        %2763 = vmatprep.subr.bf16.mxu0 %v2595
        %2764 = vmatpush1.bf16.msra.mxu0 %v2594
        %2765 = vmatprep.mubr.bf16.mxu0 %v2311
        %2766 = vmatmul.mubr.bf16.gmra.mrb[0].mxu0 %v2310
        %v2767 = vpop.f32.mrb[0].mxu0
        %v2768 = vadd.f32 %v2331, %v2767
        %v2769 = vpop.f32.mrb[0].mxu0
        %v2770 = vadd.f32 %v2335, %v2769
        %v2771 = vpop.f32.mrb[0].mxu0
        %v2772 = vadd.f32 %v2331, %v2771
        %v2773 = vpop.f32.mrb[0].mxu0
        %v2774 = vadd.f32 %v2335, %v2773
        %2775 = vmatprep.mubr.bf16.mxu0 %v2313
        %2776 = vmatmul.mubr.bf16.gmra.mrb[0].mxu0 %v2312
        %v2777 = vpop.f32.mrb[0].mxu0
        %v2778 = vadd.f32 %v2331, %v2777
        %v2779 = vpop.f32.mrb[0].mxu0
        %v2780 = vadd.f32 %v2335, %v2779
        %v2781 = vpop.f32.mrb[0].mxu0
        %v2782 = vadd.f32 %v2331, %v2781
        %v2783 = vpop.f32.mrb[0].mxu0
        %v2784 = vadd.f32 %v2335, %v2783
        %2785 = vmatprep.mubr.bf16.mxu0 %v2315
        %2786 = vmatmul.mubr.bf16.gmra.mrb[0].mxu0 %v2314
        %v2787 = vpop.f32.mrb[0].mxu0
        %v2788 = vadd.f32 %v2331, %v2787
        %v2789 = vpop.f32.mrb[0].mxu0
        %v2790 = vadd.f32 %v2335, %v2789
        %v2791 = vpop.f32.mrb[0].mxu0
        %v2792 = vadd.f32 %v2331, %v2791
        %v2793 = vpop.f32.mrb[0].mxu0
        %v2794 = vadd.f32 %v2335, %v2793
        %2795 = vmatprep.mubr.bf16.mxu0 %v2317
        %2796 = vmatmul.mubr.bf16.gmra.mrb[0].mxu0 %v2316
        %v2797 = vpop.f32.mrb[0].mxu0
        %v2798 = vadd.f32 %v2331, %v2797
        %v2799 = vpop.f32.mrb[0].mxu0
        %v2800 = vadd.f32 %v2335, %v2799
        %v2801 = vpop.f32.mrb[0].mxu0
        %v2802 = vadd.f32 %v2331, %v2801
        %v2803 = vpop.f32.mrb[0].mxu0
        %v2804 = vadd.f32 %v2335, %v2803
        %2805 = vdwg.mxu0
        %v2806 = vadd.f32 %v1780, %v2695
        %v2807 = vadd.f32 %v1782, %v2697
        %v2808 = vadd.f32 %v1853, %v2768
        %v2809 = vadd.f32 %v1855, %v2770
        %v2810 = vadd.f32 %v1784, %v2699
        %v2811 = vadd.f32 %v1786, %v2701
        %v2812 = vadd.f32 %v1857, %v2772
        %v2813 = vadd.f32 %v1859, %v2774
        %v2814 = vadd.f32 %v1790, %v2705
        %v2815 = vadd.f32 %v1792, %v2707
        %v2816 = vadd.f32 %v1863, %v2778
        %v2817 = vadd.f32 %v1865, %v2780
        %v2818 = vadd.f32 %v1794, %v2709
        %v2819 = vadd.f32 %v1796, %v2711
        %v2820 = vadd.f32 %v1867, %v2782
        %v2821 = vadd.f32 %v1869, %v2784
        %v2822 = vadd.f32 %v1800, %v2715
        %v2823 = vadd.f32 %v1802, %v2717
        %v2824 = vadd.f32 %v1873, %v2788
        %v2825 = vadd.f32 %v1875, %v2790
        %v2826 = vadd.f32 %v1804, %v2719
        %v2827 = vadd.f32 %v1806, %v2721
        %v2828 = vadd.f32 %v1877, %v2792
        %v2829 = vadd.f32 %v1879, %v2794
        %v2830 = vadd.f32 %v1810, %v2725
        %v2831 = vadd.f32 %v1812, %v2727
        %v2832 = vadd.f32 %v1883, %v2798
        %v2833 = vadd.f32 %v1885, %v2800
        %v2834 = vadd.f32 %v1814, %v2729
        %v2835 = vadd.f32 %v1816, %v2731
        %v2836 = vadd.f32 %v1887, %v2802
        %v2837 = vadd.f32 %v1889, %v2804
        %v2838 = vxor.u32 %v2806, 2147483648
        %v2839 = vxor.u32 %v2807, 2147483648
        %v2840 = vxor.u32 %v2808, 2147483648
        %v2841 = vxor.u32 %v2809, 2147483648
        %v2842 = vxor.u32 %v2810, 2147483648
        %v2843 = vxor.u32 %v2811, 2147483648
        %v2844 = vxor.u32 %v2812, 2147483648
        %v2845 = vxor.u32 %v2813, 2147483648
        %v2846 = vxor.u32 %v2814, 2147483648
        %v2847 = vxor.u32 %v2815, 2147483648
        %v2848 = vxor.u32 %v2816, 2147483648
        %v2849 = vxor.u32 %v2817, 2147483648
        %v2850 = vxor.u32 %v2818, 2147483648
        %v2851 = vxor.u32 %v2819, 2147483648
        %v2852 = vxor.u32 %v2820, 2147483648
        %v2853 = vxor.u32 %v2821, 2147483648
        %v2854 = vxor.u32 %v2822, 2147483648
        %v2855 = vxor.u32 %v2823, 2147483648
        %v2856 = vxor.u32 %v2824, 2147483648
        %v2857 = vxor.u32 %v2825, 2147483648
        %v2858 = vxor.u32 %v2826, 2147483648
        %v2859 = vxor.u32 %v2827, 2147483648
        %v2860 = vxor.u32 %v2828, 2147483648
        %v2861 = vxor.u32 %v2829, 2147483648
        %v2862 = vxor.u32 %v2830, 2147483648
        %v2863 = vxor.u32 %v2831, 2147483648
        %v2864 = vxor.u32 %v2832, 2147483648
        %v2865 = vxor.u32 %v2833, 2147483648
        %v2866 = vxor.u32 %v2834, 2147483648
        %v2867 = vxor.u32 %v2835, 2147483648
        %v2868 = vxor.u32 %v2836, 2147483648
        %v2869 = vxor.u32 %v2837, 2147483648
        %v2870 = vmul.f32 %v2838, 1.442695
        %v2871 = vpow.pop %v2870
        %v2872 = vmul.f32 %v2839, 1.442695
        %v2873 = vpow.pop %v2872
        %v2874 = vmul.f32 %v2840, 1.442695
        %v2875 = vpow.pop %v2874
        %v2876 = vmul.f32 %v2841, 1.442695
        %v2877 = vpow.pop %v2876
        %v2878 = vmul.f32 %v2842, 1.442695
        %v2879 = vpow.pop %v2878
        %v2880 = vmul.f32 %v2843, 1.442695
        %v2881 = vpow.pop %v2880
        %v2882 = vmul.f32 %v2844, 1.442695
        %v2883 = vpow.pop %v2882
        %v2884 = vmul.f32 %v2845, 1.442695
        %v2885 = vpow.pop %v2884
        %v2886 = vmul.f32 %v2846, 1.442695
        %v2887 = vpow.pop %v2886
        %v2888 = vmul.f32 %v2847, 1.442695
        %v2889 = vpow.pop %v2888
        %v2890 = vmul.f32 %v2848, 1.442695
        %v2891 = vpow.pop %v2890
        %v2892 = vmul.f32 %v2849, 1.442695
        %v2893 = vpow.pop %v2892
        %v2894 = vmul.f32 %v2850, 1.442695
        %v2895 = vpow.pop %v2894
        %v2896 = vmul.f32 %v2851, 1.442695
        %v2897 = vpow.pop %v2896
        %v2898 = vmul.f32 %v2852, 1.442695
        %v2899 = vpow.pop %v2898
        %v2900 = vmul.f32 %v2853, 1.442695
        %v2901 = vpow.pop %v2900
        %v2902 = vmul.f32 %v2854, 1.442695
        %v2903 = vpow.pop %v2902
        %v2904 = vmul.f32 %v2855, 1.442695
        %v2905 = vpow.pop %v2904
        %v2906 = vmul.f32 %v2856, 1.442695
        %v2907 = vpow.pop %v2906
        %v2908 = vmul.f32 %v2857, 1.442695
        %v2909 = vpow.pop %v2908
        %v2910 = vmul.f32 %v2858, 1.442695
        %v2911 = vpow.pop %v2910
        %v2912 = vmul.f32 %v2859, 1.442695
        %v2913 = vpow.pop %v2912
        %v2914 = vmul.f32 %v2860, 1.442695
        %v2915 = vpow.pop %v2914
        %v2916 = vmul.f32 %v2861, 1.442695
        %v2917 = vpow.pop %v2916
        %v2918 = vmul.f32 %v2862, 1.442695
        %v2919 = vpow.pop %v2918
        %v2920 = vmul.f32 %v2863, 1.442695
        %v2921 = vpow.pop %v2920
        %v2922 = vmul.f32 %v2864, 1.442695
        %v2923 = vpow.pop %v2922
        %v2924 = vmul.f32 %v2865, 1.442695
        %v2925 = vpow.pop %v2924
        %v2926 = vmul.f32 %v2866, 1.442695
        %v2927 = vpow.pop %v2926
        %v2928 = vmul.f32 %v2867, 1.442695
        %v2929 = vpow.pop %v2928
        %v2930 = vmul.f32 %v2868, 1.442695
        %v2931 = vpow.pop %v2930
        %v2932 = vmul.f32 %v2869, 1.442695
        %v2933 = vpow.pop %v2932
        %v2934 = vadd.f32 %v2871, 1.0
        %v2935 = vadd.f32 %v2873, 1.0
        %v2936 = vadd.f32 %v2875, 1.0
        %v2937 = vadd.f32 %v2877, 1.0
        %v2938 = vadd.f32 %v2879, 1.0
        %v2939 = vadd.f32 %v2881, 1.0
        %v2940 = vadd.f32 %v2883, 1.0
        %v2941 = vadd.f32 %v2885, 1.0
        %v2942 = vadd.f32 %v2887, 1.0
        %v2943 = vadd.f32 %v2889, 1.0
        %v2944 = vadd.f32 %v2891, 1.0
        %v2945 = vadd.f32 %v2893, 1.0
        %v2946 = vadd.f32 %v2895, 1.0
        %v2947 = vadd.f32 %v2897, 1.0
        %v2948 = vadd.f32 %v2899, 1.0
        %v2949 = vadd.f32 %v2901, 1.0
        %v2950 = vadd.f32 %v2903, 1.0
        %v2951 = vadd.f32 %v2905, 1.0
        %v2952 = vadd.f32 %v2907, 1.0
        %v2953 = vadd.f32 %v2909, 1.0
        %v2954 = vadd.f32 %v2911, 1.0
        %v2955 = vadd.f32 %v2913, 1.0
        %v2956 = vadd.f32 %v2915, 1.0
        %v2957 = vadd.f32 %v2917, 1.0
        %v2958 = vadd.f32 %v2919, 1.0
        %v2959 = vadd.f32 %v2921, 1.0
        %v2960 = vadd.f32 %v2923, 1.0
        %v2961 = vadd.f32 %v2925, 1.0
        %v2962 = vadd.f32 %v2927, 1.0
        %v2963 = vadd.f32 %v2929, 1.0
        %v2964 = vadd.f32 %v2931, 1.0
        %v2965 = vadd.f32 %v2933, 1.0
        %v2966 = vrcp.pop %v2934
        %v2967 = vmul.f32 1.0, %v2966
        %v2968 = vrcp.pop %v2935
        %v2969 = vmul.f32 1.0, %v2968
        %v2970 = vrcp.pop %v2936
        %v2971 = vmul.f32 1.0, %v2970
        %v2972 = vrcp.pop %v2937
        %v2973 = vmul.f32 1.0, %v2972
        %v2974 = vrcp.pop %v2938
        %v2975 = vmul.f32 1.0, %v2974
        %v2976 = vrcp.pop %v2939
        %v2977 = vmul.f32 1.0, %v2976
        %v2978 = vrcp.pop %v2940
        %v2979 = vmul.f32 1.0, %v2978
        %v2980 = vrcp.pop %v2941
        %v2981 = vmul.f32 1.0, %v2980
        %v2982 = vrcp.pop %v2942
        %v2983 = vmul.f32 1.0, %v2982
        %v2984 = vrcp.pop %v2943
        %v2985 = vmul.f32 1.0, %v2984
        %v2986 = vrcp.pop %v2944
        %v2987 = vmul.f32 1.0, %v2986
        %v2988 = vrcp.pop %v2945
        %v2989 = vmul.f32 1.0, %v2988
        %v2990 = vrcp.pop %v2946
        %v2991 = vmul.f32 1.0, %v2990
        %v2992 = vrcp.pop %v2947
        %v2993 = vmul.f32 1.0, %v2992
        %v2994 = vrcp.pop %v2948
        %v2995 = vmul.f32 1.0, %v2994
        %v2996 = vrcp.pop %v2949
        %v2997 = vmul.f32 1.0, %v2996
        %v2998 = vrcp.pop %v2950
        %v2999 = vmul.f32 1.0, %v2998
        %v3000 = vrcp.pop %v2951
        %v3001 = vmul.f32 1.0, %v3000
        %v3002 = vrcp.pop %v2952
        %v3003 = vmul.f32 1.0, %v3002
        %v3004 = vrcp.pop %v2953
        %v3005 = vmul.f32 1.0, %v3004
        %v3006 = vrcp.pop %v2954
        %v3007 = vmul.f32 1.0, %v3006
        %v3008 = vrcp.pop %v2955
        %v3009 = vmul.f32 1.0, %v3008
        %v3010 = vrcp.pop %v2956
        %v3011 = vmul.f32 1.0, %v3010
        %v3012 = vrcp.pop %v2957
        %v3013 = vmul.f32 1.0, %v3012
        %v3014 = vrcp.pop %v2958
        %v3015 = vmul.f32 1.0, %v3014
        %v3016 = vrcp.pop %v2959
        %v3017 = vmul.f32 1.0, %v3016
        %v3018 = vrcp.pop %v2960
        %v3019 = vmul.f32 1.0, %v3018
        %v3020 = vrcp.pop %v2961
        %v3021 = vmul.f32 1.0, %v3020
        %v3022 = vrcp.pop %v2962
        %v3023 = vmul.f32 1.0, %v3022
        %v3024 = vrcp.pop %v2963
        %v3025 = vmul.f32 1.0, %v3024
        %v3026 = vrcp.pop %v2964
        %v3027 = vmul.f32 1.0, %v3026
        %v3028 = vrcp.pop %v2965
        %v3029 = vmul.f32 1.0, %v3028
        %v3030 = vmul.f32 %v2019, %v2967
        %v3031 = vmul.f32 %v2020, %v2969
        %v3032 = vmul.f32 %v2021, %v2971
        %v3033 = vmul.f32 %v2022, %v2973
        %v3034 = vmul.f32 %v2023, %v2975
        %v3035 = vmul.f32 %v2024, %v2977
        %v3036 = vmul.f32 %v2025, %v2979
        %v3037 = vmul.f32 %v2026, %v2981
        %v3038 = vmul.f32 %v2027, %v2983
        %v3039 = vmul.f32 %v2028, %v2985
        %v3040 = vmul.f32 %v2029, %v2987
        %v3041 = vmul.f32 %v2030, %v2989
        %v3042 = vmul.f32 %v2031, %v2991
        %v3043 = vmul.f32 %v2032, %v2993
        %v3044 = vmul.f32 %v2033, %v2995
        %v3045 = vmul.f32 %v2034, %v2997
        %v3046 = vmul.f32 %v2035, %v2999
        %v3047 = vmul.f32 %v2036, %v3001
        %v3048 = vmul.f32 %v2037, %v3003
        %v3049 = vmul.f32 %v2038, %v3005
        %v3050 = vmul.f32 %v2039, %v3007
        %v3051 = vmul.f32 %v2040, %v3009
        %v3052 = vmul.f32 %v2041, %v3011
        %v3053 = vmul.f32 %v2042, %v3013
        %v3054 = vmul.f32 %v2043, %v3015
        %v3055 = vmul.f32 %v2044, %v3017
        %v3056 = vmul.f32 %v2045, %v3019
        %v3057 = vmul.f32 %v2046, %v3021
        %v3058 = vmul.f32 %v2047, %v3023
        %v3059 = vmul.f32 %v2048, %v3025
        %v3060 = vmul.f32 %v2049, %v3027
        %v3061 = vmul.f32 %v2050, %v3029
        %v3062 = vld [vmem:[#allocation10] sm:$0xff]
        %v3063 = vld [vmem:[#allocation10 + $0x8] sm:$0xff]
        %v3064 = vld [vmem:[#allocation10 + $0x10] sm:$0xff]
        %v3065 = vld [vmem:[#allocation10 + $0x18] sm:$0xff]
        %v3066 = vld [vmem:[#allocation10 + $0x20] sm:$0xff]
        %v3067 = vld [vmem:[#allocation10 + $0x28] sm:$0xff]
        %v3068 = vld [vmem:[#allocation10 + $0x30] sm:$0xff]
        %v3069 = vld [vmem:[#allocation10 + $0x38] sm:$0xff]
        %v3070 = vld [vmem:[#allocation10 + $0x40] sm:$0xff]
        %v3071 = vld [vmem:[#allocation10 + $0x48] sm:$0xff]
        %v3072 = vld [vmem:[#allocation10 + $0x50] sm:$0xff]
        %v3073 = vld [vmem:[#allocation10 + $0x58] sm:$0xff]
        %v3074 = vld [vmem:[#allocation10 + $0x60] sm:$0xff]
        %v3075 = vld [vmem:[#allocation10 + $0x68] sm:$0xff]
        %v3076 = vld [vmem:[#allocation10 + $0x70] sm:$0xff]
        %v3077 = vld [vmem:[#allocation10 + $0x78] sm:$0xff]
        %v3078 = vld [vmem:[#allocation10 + $0x80] sm:$0xff]
        %v3079 = vld [vmem:[#allocation10 + $0x88] sm:$0xff]
        %v3080 = vld [vmem:[#allocation10 + $0x90] sm:$0xff]
        %v3081 = vld [vmem:[#allocation10 + $0x98] sm:$0xff]
        %v3082 = vld [vmem:[#allocation10 + $0xa0] sm:$0xff]
        %v3083 = vld [vmem:[#allocation10 + $0xa8] sm:$0xff]
        %v3084 = vld [vmem:[#allocation10 + $0xb0] sm:$0xff]
        %v3085 = vld [vmem:[#allocation10 + $0xb8] sm:$0xff]
        %v3086 = vld [vmem:[#allocation10 + $0xc0] sm:$0xff]
        %v3087 = vld [vmem:[#allocation10 + $0xc8] sm:$0xff]
        %v3088 = vld [vmem:[#allocation10 + $0xd0] sm:$0xff]
        %v3089 = vld [vmem:[#allocation10 + $0xd8] sm:$0xff]
        %v3090 = vld [vmem:[#allocation10 + $0xe0] sm:$0xff]
        %v3091 = vld [vmem:[#allocation10 + $0xe8] sm:$0xff]
        %v3092 = vld [vmem:[#allocation10 + $0xf0] sm:$0xff]
        %v3093 = vld [vmem:[#allocation10 + $0xf8] sm:$0xff]
        %v3094 = vld [vmem:[#allocation10 + $0x100] sm:$0xff]
        %v3095 = vld [vmem:[#allocation10 + $0x108] sm:$0xff]
        %v3096 = vld [vmem:[#allocation10 + $0x110] sm:$0xff]
        %v3097 = vld [vmem:[#allocation10 + $0x118] sm:$0xff]
        %v3098 = vld [vmem:[#allocation10 + $0x120] sm:$0xff]
        %v3099 = vld [vmem:[#allocation10 + $0x128] sm:$0xff]
        %v3100 = vld [vmem:[#allocation10 + $0x130] sm:$0xff]
        %v3101 = vld [vmem:[#allocation10 + $0x138] sm:$0xff]
        %v3102 = vld [vmem:[#allocation10 + $0x140] sm:$0xff]
        %v3103 = vld [vmem:[#allocation10 + $0x148] sm:$0xff]
        %v3104 = vld [vmem:[#allocation10 + $0x150] sm:$0xff]
        %v3105 = vld [vmem:[#allocation10 + $0x158] sm:$0xff]
        %v3106 = vld [vmem:[#allocation10 + $0x160] sm:$0xff]
        %v3107 = vld [vmem:[#allocation10 + $0x168] sm:$0xff]
        %v3108 = vld [vmem:[#allocation10 + $0x170] sm:$0xff]
        %v3109 = vld [vmem:[#allocation10 + $0x178] sm:$0xff]
        %v3110 = vld [vmem:[#allocation10 + $0x180] sm:$0xff]
        %v3111 = vld [vmem:[#allocation10 + $0x188] sm:$0xff]
        %v3112 = vld [vmem:[#allocation10 + $0x190] sm:$0xff]
        %v3113 = vld [vmem:[#allocation10 + $0x198] sm:$0xff]
        %v3114 = vld [vmem:[#allocation10 + $0x1a0] sm:$0xff]
        %v3115 = vld [vmem:[#allocation10 + $0x1a8] sm:$0xff]
        %v3116 = vld [vmem:[#allocation10 + $0x1b0] sm:$0xff]
        %v3117 = vld [vmem:[#allocation10 + $0x1b8] sm:$0xff]
        %v3118 = vld [vmem:[#allocation10 + $0x1c0] sm:$0xff]
        %v3119 = vld [vmem:[#allocation10 + $0x1c8] sm:$0xff]
        %v3120 = vld [vmem:[#allocation10 + $0x1d0] sm:$0xff]
        %v3121 = vld [vmem:[#allocation10 + $0x1d8] sm:$0xff]
        %v3122 = vld [vmem:[#allocation10 + $0x1e0] sm:$0xff]
        %v3123 = vld [vmem:[#allocation10 + $0x1e8] sm:$0xff]
        %v3124 = vld [vmem:[#allocation10 + $0x1f0] sm:$0xff]
        %v3125 = vld [vmem:[#allocation10 + $0x1f8] sm:$0xff]
        %v3126 = vpack.c.bf16 %v3034, %v3030
        %v3127 = vpack.c.bf16 %v3035, %v3031
        %v3128 = vpack.c.bf16 %v3036, %v3032
        %v3129 = vpack.c.bf16 %v3037, %v3033
        %v3130 = vpack.c.bf16 %v3042, %v3038
        %v3131 = vpack.c.bf16 %v3043, %v3039
        %v3132 = vpack.c.bf16 %v3044, %v3040
        %v3133 = vpack.c.bf16 %v3045, %v3041
        %v3134 = vpack.c.bf16 %v3050, %v3046
        %v3135 = vpack.c.bf16 %v3051, %v3047
        %v3136 = vpack.c.bf16 %v3052, %v3048
        %v3137 = vpack.c.bf16 %v3053, %v3049
        %v3138 = vpack.c.bf16 %v3058, %v3054
        %v3139 = vpack.c.bf16 %v3059, %v3055
        %v3140 = vpack.c.bf16 %v3060, %v3056
        %v3141 = vpack.c.bf16 %v3061, %v3057
        %v3142 = vld [vmem:[%s13] sm:$0x3]
        %v3144 = vlaneseq
        %v3145 = vshrl.u32 %v3144, 7
        %v3146 = vsub.s32 0, %v3145
        %v3147 = vrot.slane %v3142, %v3146
        %v3148 = vlaneseq
        %v3149 = vshrl.u32 %v3148, 7
        %v3150 = vsub.s32 1, %v3149
        %v3151 = vrot.slane %v3142, %v3150
        %v3218 = vunpack.c.l.b16 %v3062
        %v3219 = vunpack.c.h.b16 %v3062
        %v3220 = vunpack.c.l.b16 %v3063
        %v3221 = vunpack.c.h.b16 %v3063
        %v3222 = vunpack.c.l.b16 %v3064
        %v3223 = vunpack.c.h.b16 %v3064
        %v3224 = vunpack.c.l.b16 %v3065
        %v3225 = vunpack.c.h.b16 %v3065
        %v3226 = vunpack.c.l.b16 %v3066
        %v3227 = vunpack.c.h.b16 %v3066
        %v3228 = vunpack.c.l.b16 %v3067
        %v3229 = vunpack.c.h.b16 %v3067
        %v3230 = vunpack.c.l.b16 %v3068
        %v3231 = vunpack.c.h.b16 %v3068
        %v3232 = vunpack.c.l.b16 %v3069
        %v3233 = vunpack.c.h.b16 %v3069
        %v3234 = vunpack.c.l.b16 %v3070
        %v3235 = vunpack.c.h.b16 %v3070
        %v3236 = vunpack.c.l.b16 %v3071
        %v3237 = vunpack.c.h.b16 %v3071
        %v3238 = vunpack.c.l.b16 %v3072
        %v3239 = vunpack.c.h.b16 %v3072
        %v3240 = vunpack.c.l.b16 %v3073
        %v3241 = vunpack.c.h.b16 %v3073
        %v3242 = vunpack.c.l.b16 %v3074
        %v3243 = vunpack.c.h.b16 %v3074
        %v3244 = vunpack.c.l.b16 %v3075
        %v3245 = vunpack.c.h.b16 %v3075
        %v3246 = vunpack.c.l.b16 %v3076
        %v3247 = vunpack.c.h.b16 %v3076
        %v3248 = vunpack.c.l.b16 %v3077
        %v3249 = vunpack.c.h.b16 %v3077
        %v3250 = vunpack.c.l.b16 %v3078
        %v3251 = vunpack.c.h.b16 %v3078
        %v3252 = vunpack.c.l.b16 %v3079
        %v3253 = vunpack.c.h.b16 %v3079
        %v3254 = vunpack.c.l.b16 %v3080
        %v3255 = vunpack.c.h.b16 %v3080
        %v3256 = vunpack.c.l.b16 %v3081
        %v3257 = vunpack.c.h.b16 %v3081
        %v3258 = vunpack.c.l.b16 %v3082
        %v3259 = vunpack.c.h.b16 %v3082
        %v3260 = vunpack.c.l.b16 %v3083
        %v3261 = vunpack.c.h.b16 %v3083
        %v3262 = vunpack.c.l.b16 %v3084
        %v3263 = vunpack.c.h.b16 %v3084
        %v3264 = vunpack.c.l.b16 %v3085
        %v3265 = vunpack.c.h.b16 %v3085
        %v3266 = vunpack.c.l.b16 %v3086
        %v3267 = vunpack.c.h.b16 %v3086
        %v3268 = vunpack.c.l.b16 %v3087
        %v3269 = vunpack.c.h.b16 %v3087
        %v3270 = vunpack.c.l.b16 %v3088
        %v3271 = vunpack.c.h.b16 %v3088
        %v3272 = vunpack.c.l.b16 %v3089
        %v3273 = vunpack.c.h.b16 %v3089
        %v3274 = vunpack.c.l.b16 %v3090
        %v3275 = vunpack.c.h.b16 %v3090
        %v3276 = vunpack.c.l.b16 %v3091
        %v3277 = vunpack.c.h.b16 %v3091
        %v3278 = vunpack.c.l.b16 %v3092
        %v3279 = vunpack.c.h.b16 %v3092
        %v3280 = vunpack.c.l.b16 %v3093
        %v3281 = vunpack.c.h.b16 %v3093
        %v3282 = vunpack.c.l.b16 %v3094
        %v3283 = vunpack.c.h.b16 %v3094
        %v3284 = vunpack.c.l.b16 %v3095
        %v3285 = vunpack.c.h.b16 %v3095
        %v3286 = vunpack.c.l.b16 %v3096
        %v3287 = vunpack.c.h.b16 %v3096
        %v3288 = vunpack.c.l.b16 %v3097
        %v3289 = vunpack.c.h.b16 %v3097
        %v3290 = vunpack.c.l.b16 %v3098
        %v3291 = vunpack.c.h.b16 %v3098
        %v3292 = vunpack.c.l.b16 %v3099
        %v3293 = vunpack.c.h.b16 %v3099
        %v3294 = vunpack.c.l.b16 %v3100
        %v3295 = vunpack.c.h.b16 %v3100
        %v3296 = vunpack.c.l.b16 %v3101
        %v3297 = vunpack.c.h.b16 %v3101
        %v3298 = vunpack.c.l.b16 %v3102
        %v3299 = vunpack.c.h.b16 %v3102
        %v3300 = vunpack.c.l.b16 %v3103
        %v3301 = vunpack.c.h.b16 %v3103
        %v3302 = vunpack.c.l.b16 %v3104
        %v3303 = vunpack.c.h.b16 %v3104
        %v3304 = vunpack.c.l.b16 %v3105
        %v3305 = vunpack.c.h.b16 %v3105
        %v3306 = vunpack.c.l.b16 %v3106
        %v3307 = vunpack.c.h.b16 %v3106
        %v3308 = vunpack.c.l.b16 %v3107
        %v3309 = vunpack.c.h.b16 %v3107
        %v3310 = vunpack.c.l.b16 %v3108
        %v3311 = vunpack.c.h.b16 %v3108
        %v3312 = vunpack.c.l.b16 %v3109
        %v3313 = vunpack.c.h.b16 %v3109
        %v3314 = vunpack.c.l.b16 %v3110
        %v3315 = vunpack.c.h.b16 %v3110
        %v3316 = vunpack.c.l.b16 %v3111
        %v3317 = vunpack.c.h.b16 %v3111
        %v3318 = vunpack.c.l.b16 %v3112
        %v3319 = vunpack.c.h.b16 %v3112
        %v3320 = vunpack.c.l.b16 %v3113
        %v3321 = vunpack.c.h.b16 %v3113
        %v3322 = vunpack.c.l.b16 %v3114
        %v3323 = vunpack.c.h.b16 %v3114
        %v3324 = vunpack.c.l.b16 %v3115
        %v3325 = vunpack.c.h.b16 %v3115
        %v3326 = vunpack.c.l.b16 %v3116
        %v3327 = vunpack.c.h.b16 %v3116
        %v3328 = vunpack.c.l.b16 %v3117
        %v3329 = vunpack.c.h.b16 %v3117
        %v3330 = vunpack.c.l.b16 %v3118
        %v3331 = vunpack.c.h.b16 %v3118
        %v3332 = vunpack.c.l.b16 %v3119
        %v3333 = vunpack.c.h.b16 %v3119
        %v3334 = vunpack.c.l.b16 %v3120
        %v3335 = vunpack.c.h.b16 %v3120
        %v3336 = vunpack.c.l.b16 %v3121
        %v3337 = vunpack.c.h.b16 %v3121
        %v3338 = vunpack.c.l.b16 %v3122
        %v3339 = vunpack.c.h.b16 %v3122
        %v3340 = vunpack.c.l.b16 %v3123
        %v3341 = vunpack.c.h.b16 %v3123
        %v3342 = vunpack.c.l.b16 %v3124
        %v3343 = vunpack.c.h.b16 %v3124
        %v3344 = vunpack.c.l.b16 %v3125
        %v3345 = vunpack.c.h.b16 %v3125
        %v3346 = vpack.c.b16 %v3220, %v3218
        %v3347 = vpack.c.b16 %v3221, %v3219
        %v3348 = vpack.c.b16 %v3224, %v3222
        %v3349 = vpack.c.b16 %v3225, %v3223
        %v3350 = vpack.c.b16 %v3228, %v3226
        %v3351 = vpack.c.b16 %v3229, %v3227
        %v3352 = vpack.c.b16 %v3232, %v3230
        %v3353 = vpack.c.b16 %v3233, %v3231
        %v3354 = vpack.c.b16 %v3236, %v3234
        %v3355 = vpack.c.b16 %v3237, %v3235
        %v3356 = vpack.c.b16 %v3240, %v3238
        %v3357 = vpack.c.b16 %v3241, %v3239
        %v3358 = vpack.c.b16 %v3244, %v3242
        %v3359 = vpack.c.b16 %v3245, %v3243
        %v3360 = vpack.c.b16 %v3248, %v3246
        %v3361 = vpack.c.b16 %v3249, %v3247
        %v3362 = vpack.c.b16 %v3252, %v3250
        %v3363 = vpack.c.b16 %v3253, %v3251
        %v3364 = vpack.c.b16 %v3256, %v3254
        %v3365 = vpack.c.b16 %v3257, %v3255
        %v3366 = vpack.c.b16 %v3260, %v3258
        %v3367 = vpack.c.b16 %v3261, %v3259
        %v3368 = vpack.c.b16 %v3264, %v3262
        %v3369 = vpack.c.b16 %v3265, %v3263
        %v3370 = vpack.c.b16 %v3268, %v3266
        %v3371 = vpack.c.b16 %v3269, %v3267
        %v3372 = vpack.c.b16 %v3272, %v3270
        %v3373 = vpack.c.b16 %v3273, %v3271
        %v3374 = vpack.c.b16 %v3276, %v3274
        %v3375 = vpack.c.b16 %v3277, %v3275
        %v3376 = vpack.c.b16 %v3280, %v3278
        %v3377 = vpack.c.b16 %v3281, %v3279
        %v3378 = vpack.c.b16 %v3284, %v3282
        %v3379 = vpack.c.b16 %v3285, %v3283
        %v3380 = vpack.c.b16 %v3288, %v3286
        %v3381 = vpack.c.b16 %v3289, %v3287
        %v3382 = vpack.c.b16 %v3292, %v3290
        %v3383 = vpack.c.b16 %v3293, %v3291
        %v3384 = vpack.c.b16 %v3296, %v3294
        %v3385 = vpack.c.b16 %v3297, %v3295
        %v3386 = vpack.c.b16 %v3300, %v3298
        %v3387 = vpack.c.b16 %v3301, %v3299
        %v3388 = vpack.c.b16 %v3304, %v3302
        %v3389 = vpack.c.b16 %v3305, %v3303
        %v3390 = vpack.c.b16 %v3308, %v3306
        %v3391 = vpack.c.b16 %v3309, %v3307
        %v3392 = vpack.c.b16 %v3312, %v3310
        %v3393 = vpack.c.b16 %v3313, %v3311
        %v3394 = vpack.c.b16 %v3316, %v3314
        %v3395 = vpack.c.b16 %v3317, %v3315
        %v3396 = vpack.c.b16 %v3320, %v3318
        %v3397 = vpack.c.b16 %v3321, %v3319
        %v3398 = vpack.c.b16 %v3324, %v3322
        %v3399 = vpack.c.b16 %v3325, %v3323
        %v3400 = vpack.c.b16 %v3328, %v3326
        %v3401 = vpack.c.b16 %v3329, %v3327
        %v3402 = vpack.c.b16 %v3332, %v3330
        %v3403 = vpack.c.b16 %v3333, %v3331
        %v3404 = vpack.c.b16 %v3336, %v3334
        %v3405 = vpack.c.b16 %v3337, %v3335
        %v3406 = vpack.c.b16 %v3340, %v3338
        %v3407 = vpack.c.b16 %v3341, %v3339
        %v3408 = vpack.c.b16 %v3344, %v3342
        %v3409 = vpack.c.b16 %v3345, %v3343
        %3474 = vmatprep.subr.bf16.mxu0 %v3347
        %3475 = vmatpush1.bf16.msra.mxu0 %v3346
        %3476 = vmatprep.subr.bf16.mxu0 %v3349
        %3477 = vmatpush1.bf16.msra.mxu0 %v3348
        %3478 = vmatprep.subr.bf16.mxu0 %v3351
        %3479 = vmatpush1.bf16.msra.mxu0 %v3350
        %3480 = vmatprep.subr.bf16.mxu0 %v3353
        %3481 = vmatpush1.bf16.msra.mxu0 %v3352
        %3482 = vmatprep.subr.bf16.mxu0 %v3355
        %3483 = vmatpush1.bf16.msra.mxu0 %v3354
        %3484 = vmatprep.subr.bf16.mxu0 %v3357
        %3485 = vmatpush1.bf16.msra.mxu0 %v3356
        %3486 = vmatprep.subr.bf16.mxu0 %v3359
        %3487 = vmatpush1.bf16.msra.mxu0 %v3358
        %3488 = vmatprep.subr.bf16.mxu0 %v3361
        %3489 = vmatpush1.bf16.msra.mxu0 %v3360
        %3490 = vmatprep.subr.bf16.mxu0 %v3363
        %3491 = vmatpush1.bf16.msra.mxu0 %v3362
        %3492 = vmatprep.subr.bf16.mxu0 %v3365
        %3493 = vmatpush1.bf16.msra.mxu0 %v3364
        %3494 = vmatprep.subr.bf16.mxu0 %v3367
        %3495 = vmatpush1.bf16.msra.mxu0 %v3366
        %3496 = vmatprep.subr.bf16.mxu0 %v3369
        %3497 = vmatpush1.bf16.msra.mxu0 %v3368
        %3498 = vmatprep.subr.bf16.mxu0 %v3371
        %3499 = vmatpush1.bf16.msra.mxu0 %v3370
        %3500 = vmatprep.subr.bf16.mxu0 %v3373
        %3501 = vmatpush1.bf16.msra.mxu0 %v3372
        %3502 = vmatprep.subr.bf16.mxu0 %v3375
        %3503 = vmatpush1.bf16.msra.mxu0 %v3374
        %3504 = vmatprep.subr.bf16.mxu0 %v3377
        %3505 = vmatpush1.bf16.msra.mxu0 %v3376
        %3506 = vmatprep.mubr.bf16.mxu0 %v3127
        %3507 = vmatmul.mubr.bf16.gmra.mrb[0].mxu0 %v3126
        %v3508 = vpop.f32.mrb[0].mxu0
        %v3509 = vadd.f32 %v3147, %v3508
        %v3510 = vpop.f32.mrb[0].mxu0
        %v3511 = vadd.f32 %v3151, %v3510
        %v3512 = vpop.f32.mrb[0].mxu0
        %v3513 = vadd.f32 %v3147, %v3512
        %v3514 = vpop.f32.mrb[0].mxu0
        %v3515 = vadd.f32 %v3151, %v3514
        %3516 = vmatprep.mubr.bf16.mxu0 %v3131
        %3517 = vmatmul.mubr.bf16.gmra.mrb[0].mxu0 %v3130
        %v3518 = vpop.f32.mrb[0].mxu0
        %v3519 = vadd.f32 %v3147, %v3518
        %v3520 = vpop.f32.mrb[0].mxu0
        %v3521 = vadd.f32 %v3151, %v3520
        %v3522 = vpop.f32.mrb[0].mxu0
        %v3523 = vadd.f32 %v3147, %v3522
        %v3524 = vpop.f32.mrb[0].mxu0
        %v3525 = vadd.f32 %v3151, %v3524
        %3526 = vmatprep.mubr.bf16.mxu0 %v3135
        %3527 = vmatmul.mubr.bf16.gmra.mrb[0].mxu0 %v3134
        %v3528 = vpop.f32.mrb[0].mxu0
        %v3529 = vadd.f32 %v3147, %v3528
        %v3530 = vpop.f32.mrb[0].mxu0
        %v3531 = vadd.f32 %v3151, %v3530
        %v3532 = vpop.f32.mrb[0].mxu0
        %v3533 = vadd.f32 %v3147, %v3532
        %v3534 = vpop.f32.mrb[0].mxu0
        %v3535 = vadd.f32 %v3151, %v3534
        %3536 = vmatprep.mubr.bf16.mxu0 %v3139
        %3537 = vmatmul.mubr.bf16.gmra.mrb[0].mxu0 %v3138
        %v3538 = vpop.f32.mrb[0].mxu0
        %v3539 = vadd.f32 %v3147, %v3538
        %v3540 = vpop.f32.mrb[0].mxu0
        %v3541 = vadd.f32 %v3151, %v3540
        %v3542 = vpop.f32.mrb[0].mxu0
        %v3543 = vadd.f32 %v3147, %v3542
        %v3544 = vpop.f32.mrb[0].mxu0
        %v3545 = vadd.f32 %v3151, %v3544
        %3546 = vdwg.mxu0
        %3547 = vmatprep.subr.bf16.mxu0 %v3379
        %3548 = vmatpush1.bf16.msra.mxu0 %v3378
        %3549 = vmatprep.subr.bf16.mxu0 %v3381
        %3550 = vmatpush1.bf16.msra.mxu0 %v3380
        %3551 = vmatprep.subr.bf16.mxu0 %v3383
        %3552 = vmatpush1.bf16.msra.mxu0 %v3382
        %3553 = vmatprep.subr.bf16.mxu0 %v3385
        %3554 = vmatpush1.bf16.msra.mxu0 %v3384
        %3555 = vmatprep.subr.bf16.mxu0 %v3387
        %3556 = vmatpush1.bf16.msra.mxu0 %v3386
        %3557 = vmatprep.subr.bf16.mxu0 %v3389
        %3558 = vmatpush1.bf16.msra.mxu0 %v3388
        %3559 = vmatprep.subr.bf16.mxu0 %v3391
        %3560 = vmatpush1.bf16.msra.mxu0 %v3390
        %3561 = vmatprep.subr.bf16.mxu0 %v3393
        %3562 = vmatpush1.bf16.msra.mxu0 %v3392
        %3563 = vmatprep.subr.bf16.mxu0 %v3395
        %3564 = vmatpush1.bf16.msra.mxu0 %v3394
        %3565 = vmatprep.subr.bf16.mxu0 %v3397
        %3566 = vmatpush1.bf16.msra.mxu0 %v3396
        %3567 = vmatprep.subr.bf16.mxu0 %v3399
        %3568 = vmatpush1.bf16.msra.mxu0 %v3398
        %3569 = vmatprep.subr.bf16.mxu0 %v3401
        %3570 = vmatpush1.bf16.msra.mxu0 %v3400
        %3571 = vmatprep.subr.bf16.mxu0 %v3403
        %3572 = vmatpush1.bf16.msra.mxu0 %v3402
        %3573 = vmatprep.subr.bf16.mxu0 %v3405
        %3574 = vmatpush1.bf16.msra.mxu0 %v3404
        %3575 = vmatprep.subr.bf16.mxu0 %v3407
        %3576 = vmatpush1.bf16.msra.mxu0 %v3406
        %3577 = vmatprep.subr.bf16.mxu0 %v3409
        %3578 = vmatpush1.bf16.msra.mxu0 %v3408
        %3579 = vmatprep.mubr.bf16.mxu0 %v3129
        %3580 = vmatmul.mubr.bf16.gmra.mrb[0].mxu0 %v3128
        %v3581 = vpop.f32.mrb[0].mxu0
        %v3582 = vadd.f32 %v3509, %v3581
        %v3583 = vpop.f32.mrb[0].mxu0
        %v3584 = vadd.f32 %v3511, %v3583
        %v3585 = vpop.f32.mrb[0].mxu0
        %v3586 = vadd.f32 %v3513, %v3585
        %v3587 = vpop.f32.mrb[0].mxu0
        %v3588 = vadd.f32 %v3515, %v3587
        %3589 = vmatprep.mubr.bf16.mxu0 %v3133
        %3590 = vmatmul.mubr.bf16.gmra.mrb[0].mxu0 %v3132
        %v3591 = vpop.f32.mrb[0].mxu0
        %v3592 = vadd.f32 %v3519, %v3591
        %v3593 = vpop.f32.mrb[0].mxu0
        %v3594 = vadd.f32 %v3521, %v3593
        %v3595 = vpop.f32.mrb[0].mxu0
        %v3596 = vadd.f32 %v3523, %v3595
        %v3597 = vpop.f32.mrb[0].mxu0
        %v3598 = vadd.f32 %v3525, %v3597
        %3599 = vmatprep.mubr.bf16.mxu0 %v3137
        %3600 = vmatmul.mubr.bf16.gmra.mrb[0].mxu0 %v3136
        %v3601 = vpop.f32.mrb[0].mxu0
        %v3602 = vadd.f32 %v3529, %v3601
        %v3603 = vpop.f32.mrb[0].mxu0
        %v3604 = vadd.f32 %v3531, %v3603
        %v3605 = vpop.f32.mrb[0].mxu0
        %v3606 = vadd.f32 %v3533, %v3605
        %v3607 = vpop.f32.mrb[0].mxu0
        %v3608 = vadd.f32 %v3535, %v3607
        %3609 = vmatprep.mubr.bf16.mxu0 %v3141
        %3610 = vmatmul.mubr.bf16.gmra.mrb[0].mxu0 %v3140
        %v3611 = vpop.f32.mrb[0].mxu0
        %v3612 = vadd.f32 %v3539, %v3611
        %v3613 = vpop.f32.mrb[0].mxu0
        %v3614 = vadd.f32 %v3541, %v3613
        %v3615 = vpop.f32.mrb[0].mxu0
        %v3616 = vadd.f32 %v3543, %v3615
        %v3617 = vpop.f32.mrb[0].mxu0
        %v3618 = vadd.f32 %v3545, %v3617
        %3619 = vdwg.mxu0
        %v3620 = vadd.f32 %v3582, %v570
        %v3621 = vadd.f32 %v3584, %v571
        %v3622 = vadd.f32 %v3586, %v572
        %v3623 = vadd.f32 %v3588, %v573
        %v3624 = vadd.f32 %v3592, %v574
        %v3625 = vadd.f32 %v3594, %v575
        %v3626 = vadd.f32 %v3596, %v576
        %v3627 = vadd.f32 %v3598, %v577
        %v3628 = vadd.f32 %v3602, %v578
        %v3629 = vadd.f32 %v3604, %v579
        %v3630 = vadd.f32 %v3606, %v580
        %v3631 = vadd.f32 %v3608, %v581
        %v3632 = vadd.f32 %v3612, %v582
        %v3633 = vadd.f32 %v3614, %v583
        %v3634 = vadd.f32 %v3616, %v584
        %v3635 = vadd.f32 %v3618, %v585
        %3636 = vst [vmem:[%s560] sm:$0xff] %v3620
        %3637 = vst [vmem:[%s560 + $0x8] sm:$0xff] %v3621
        %3638 = vst [vmem:[%s560 + $0x10] sm:$0xff] %v3622
        %3639 = vst [vmem:[%s560 + $0x18] sm:$0xff] %v3623
        %3640 = vst [vmem:[%s560 + $0x20] sm:$0xff] %v3624
        %3641 = vst [vmem:[%s560 + $0x28] sm:$0xff] %v3625
        %3642 = vst [vmem:[%s560 + $0x30] sm:$0xff] %v3626
        %3643 = vst [vmem:[%s560 + $0x38] sm:$0xff] %v3627
        %3644 = vst [vmem:[%s560 + $0x40] sm:$0xff] %v3628
        %3645 = vst [vmem:[%s560 + $0x48] sm:$0xff] %v3629
        %3646 = vst [vmem:[%s560 + $0x50] sm:$0xff] %v3630
        %3647 = vst [vmem:[%s560 + $0x58] sm:$0xff] %v3631
        %3648 = vst [vmem:[%s560 + $0x60] sm:$0xff] %v3632
        %3649 = vst [vmem:[%s560 + $0x68] sm:$0xff] %v3633
        %3650 = vst [vmem:[%s560 + $0x70] sm:$0xff] %v3634
        %3651 = vst [vmem:[%s560 + $0x78] sm:$0xff] %v3635
        %s3652 = sand.u32 %s345, 1
        %s3653 = scalar_lea.sflag [#allocation4], %s3652
        %s3654 = sand.u32 %s345, 1
        %s3655 = smul.addr %s3654, 128
        %s3656 = scalar_lea.vmem [#allocation11], %s3655
        // Predicated region
        $region97: #{tpu_custom_call.1} parent=75 // pred_check
          %p3657 = pneg %p355
        $region98: #{tpu_custom_call.1} parent=75 // pred_check_branch
          %3659 = sbr.rel (%p3657) target = $region100
        $region99: #{tpu_custom_call.1} parent=75 // pred_region
          %s3660 = smul.u32 8, %s33
          %s3662 = ssub.s32 2048, 2048
          %3663 = vsyncadd %s3653, %s3662
          %s3664 = smul.addr %s3660, 2
          %s3665 = smul.addr %s3664, 128
          %s3666 = scalar_lea.hbm %s14, %s3665
          %s3667 = sshll.u32 %s3656, 4
          %s3668 = int_to_ptr.vmem [resolvable:$true] %s3667
          %3673 = dma.vmem_to_hbm [thread:$0]  %s3668, 2048, %s3666, %s3653, 256, 256, 16
        $region100: #{tpu_custom_call.1} parent=75 // pred_fallthru
          _
      $region76: #{tpu_custom_call.1} parent=5 // pred_fallthru
        _
      %p3674 = scmp.le.s32.totalorder 2, %s28
      // Predicated region
      $region101: #{tpu_custom_call.1} parent=5 // pred_check
        %p3675 = pneg %p3674
      $region102: #{tpu_custom_call.1} parent=5 // pred_check_branch
        %3677 = sbr.rel (%p3675) target = $region104
      $region103: #{tpu_custom_call.1} parent=5 // pred_region
        %s3678 = ssub.s32 %s28, 2
        // Predicated region
        $region105: #{tpu_custom_call.1} parent=103 // pred_check
          %p3679 = pneg %p361
        $region106: #{tpu_custom_call.1} parent=103 // pred_check_branch
          %3681 = sbr.rel (%p3679) target = $region108
        $region107: #{tpu_custom_call.1} parent=103 // pred_region
          %s3682 = sand.u32 %s346, 1
          %s3683 = scalar_lea.sflag [#allocation4], %s3682
          %s3684 = sand.u32 %s346, 1
          %s3685 = smul.addr %s3684, 128
          %s3686 = scalar_lea.vmem [#allocation11], %s3685
          %3687 = dma.done %s3683, 2048
        $region108: #{tpu_custom_call.1} parent=103 // pred_fallthru
          _
      $region104: #{tpu_custom_call.1} parent=5 // pred_fallthru
        _
    $region6: #{tpu_custom_call.1} parent=1 // loop_footer
      %s32 = sadd.s32 1, %s28
    $region7: #{tpu_custom_call.1} parent=1 // loop_footer_branch
      %27 = sbr.rel target = $region3
    $region8: #{tpu_custom_call.1} parent=1 // loop_exit
      _
    %3688 = vsyncpa [#allocation3], 1
    %s3689 = scalar_lea.sflag [#allocation3], 1
    %3690 = vsyncpa %s3689, 1
    %3691 = vsyncpa [#allocation6], 1
    %3692 = vsyncpa [#allocation9], 1
    %3693 = vsyncpa [#allocation4], 1
    %s3694 = scalar_lea.sflag [#allocation4], 1
    %3695 = vsyncpa %s3694, 1

</llo_original>
